<compile_context>
chip_gen: v6e
topology: v6e:2x2x1
jax: 0.10.0
libtpu: 0.0.40
codegen_flags: <defaults>
</compile_context>

<pallas_src>
import math

import jax
import jax.numpy as jnp
from jax import lax
from jax.experimental import pallas as pl
from jax.experimental.pallas import tpu as pltpu

_INV_SQRT2 = 1.0 / math.sqrt(2.0)
_LN_EPS = 1e-5  # PyTorch LayerNorm default


def _gelu(h, approx):
    if approx:
        # tanh form runs on the EUP (its own bundle slot); <1e-3 deviation.
        c = math.sqrt(2.0 / math.pi)
        return 0.5 * h * (1.0 + jnp.tanh(c * (h + 0.044715 * h * h * h)))
    return 0.5 * h * (1.0 + lax.erf(h * _INV_SQRT2))


def _sigmoid(z):
    # sigmoid(z) == 0.5*(tanh(z/2)+1): tanh goes to the EUP instead of a VALU
    # divide, and there is no exp(-z) -> inf intermediate for very negative z.
    return 0.5 * (jnp.tanh(0.5 * z) + 1.0)


def _make_kernel(*, use_attention, identity_residual, compute_dtype, approx_gelu):
    def mm(a, w_ref):
        # Weights already live in VMEM in the compute dtype (host-side cast);
        # only the LHS may need a cast.  f32 accumulation on the MXU.
        if compute_dtype is not None and a.dtype != compute_dtype:
            a = a.astype(compute_dtype)
        return jnp.dot(a, w_ref[...], preferred_element_type=jnp.float32)

    def layer_norm(h, g_ref, b_ref):
        # Two-pass form (mean, then centered variance) for nn.LayerNorm parity;
        # the extra lane reduction goes to the XLU, which has slack here.
        mean = jnp.mean(h, axis=-1, keepdims=True)
        c = h - mean
        var = jnp.mean(c * c, axis=-1, keepdims=True)
        return c * lax.rsqrt(var + _LN_EPS) * g_ref[...] + b_ref[...]

    def kernel(*refs):
        it = iter(refs)
        x_ref = next(it)
        if use_attention:
            wa1_ref, ba1_ref, wa2_ref, ba2_ref = next(it), next(it), next(it), next(it)
        w1_ref, b1_ref, g1_ref, be1_ref = next(it), next(it), next(it), next(it)
        w2_ref, b2_ref, g2_ref, be2_ref = next(it), next(it), next(it), next(it)
        if not identity_residual:
            wr_ref, br_ref = next(it), next(it)
        o_ref = next(it)

        x_f32 = x_ref[...].astype(jnp.float32)
        # Hoisted LHS cast: one (tb, d_in) compute-dtype copy reused by the
        # attention and residual matmuls (no per-mm recast of the full tile).
        x_c = x_f32 if compute_dtype is None else x_f32.astype(compute_dtype)

        # Semantic attention gate.
        if use_attention:
            a = _gelu(mm(x_c, wa1_ref) + ba1_ref[...], approx_gelu)
            gate = _sigmoid(mm(a, wa2_ref) + ba2_ref[...])
            xg = x_f32 * gate
        else:
            xg = x_f32

        # Tower MLP: Linear -> LN -> GELU -> Dropout(identity) -> Linear -> LN.
        h = mm(xg, w1_ref) + b1_ref[...]
        h = _gelu(layer_norm(h, g1_ref, be1_ref), approx_gelu)
        h = mm(h, w2_ref) + b2_ref[...]
        h = layer_norm(h, g2_ref, be2_ref)

        # Residual branch computed late: only x_c (tb, d_in) stays live across
        # the body instead of a (tb, d_out) f32 temporary.
        residual = x_f32 if identity_residual else mm(x_c, wr_ref) + br_ref[...]

        # Residual add -> final GELU -> final Dropout (identity, inference).
        o_ref[...] = _gelu(h + residual, approx_gelu).astype(o_ref.dtype)

    return kernel


def _vmem_limit_bytes(want_bytes):
    """Clamp the requested scoped-VMEM budget to a per-generation safe cap."""
    try:
        cap = int(getattr(pltpu.get_tpu_info(), "vmem_capacity_bytes", 0)) or (64 << 20)
    except Exception:
        cap = 64 << 20  # conservative (v7x-sized) fallback
    # Leave headroom for compiler-internal scratch: ~51 MiB on v7x (64 MiB
    # physical), ~102 MiB on v5e/v6e (128 MiB).  Never request the whole VMEM.
    gen_cap = max(min(cap - (8 << 20), int(cap * 0.8)), 16 << 20)
    return int(min(max(int(want_bytes), 16 << 20), gen_cap))


def semantic_tower_block(x, params, *, use_semantic_attention=True,
                         block_rows=512, compute_dtype=jnp.bfloat16,
                         approx_gelu=True):
    """Fused SemanticTowerBlock forward pass (inference mode).

    x:      (B, d_in) float32
    params: dict of weights stored as (fan_in, fan_out) so the kernel computes
            x @ W + b on the MXU; LayerNorm params are 1-D vectors.
    compute_dtype=jnp.bfloat16 is the perf default (bf16 operands, f32
    accumulation); pass compute_dtype=None, approx_gelu=False for the exact
    f32 / erf parity path.
    """
    B, d_in = x.shape
    d_hidden = params["w1"].shape[1]
    d_out = params["w2"].shape[1]
    identity_residual = d_in == d_out
    del d_hidden  # shapes come from the weights themselves

    # Row tile: multiple of 8 (sublane); feature dims are lane-dense (multiples
    # of 128) in the demo shapes.  Ensure >= 2 grid steps whenever possible so
    # both v7x TensorCores get work from the "parallel" batch axis.
    b8 = pl.cdiv(B, 8) * 8
    tb = max(8, min((block_rows // 8) * 8, b8))
    if b8 // tb < 2 and b8 >= 16:
        tb = max(8, (b8 // 16) * 8)
    b_pad = pl.cdiv(b8, tb) * tb
    # TODO(synk): ragged batches still pad + slice on the host; a masked
    # partial-tile store inside the kernel would avoid that extra HBM pass.
    x_p = x if b_pad == B else jnp.pad(x, ((0, b_pad - B), (0, 0)))

    wdt = compute_dtype if compute_dtype is not None else jnp.float32

    def w2d(v):
        # Host-side cast of matmul weights to the MXU compute dtype: halves
        # weight HBM->VMEM DMA bytes / residency vs casting inside the kernel.
        return v.astype(wdt)

    def row(v):
        # Biases / LN params stay f32: negligible bytes, better parity.
        return v.reshape(1, -1).astype(jnp.float32)

    args = [x_p]
    specs = [pl.BlockSpec((tb, d_in), lambda i: (i, 0))]

    def add_const(arr):
        args.append(arr)
        # Constant index map -> fetched once; single-buffer it instead of the
        # default double buffer (halves weight VMEM footprint).
        specs.append(pl.BlockSpec(arr.shape, lambda i: (0, 0),
                                  pipeline_mode=pl.Buffered(1)))

    if use_semantic_attention:
        # NOTE: d_attn = hidden//4 under-fills the 256-wide MXU; kept as-is for
        # module parity (attention matmuls are a small flop fraction).
        add_const(w2d(params["wa1"]))
        add_const(row(params["ba1"]))
        add_const(w2d(params["wa2"]))
        add_const(row(params["ba2"]))
    add_const(w2d(params["w1"]))
    add_const(row(params["b1"]))
    add_const(row(params["ln1_g"]))
    add_const(row(params["ln1_b"]))
    add_const(w2d(params["w2"]))
    add_const(row(params["b2"]))
    add_const(row(params["ln2_g"]))
    add_const(row(params["ln2_b"]))
    if not identity_residual:
        add_const(w2d(params["wr"]))
        add_const(row(params["br"]))

    # Explicit VMEM budget: single-buffered resident weights + double-buffered
    # x/out row tiles + headroom for in-kernel temporaries.
    const_bytes = sum(int(a.size) * a.dtype.itemsize for a in args[1:])
    stream_bytes = 2 * tb * (d_in + d_out) * x.dtype.itemsize
    vmem_limit = _vmem_limit_bytes(const_bytes + stream_bytes + (8 << 20))

    kernel = _make_kernel(use_attention=use_semantic_attention,
                          identity_residual=identity_residual,
                          compute_dtype=compute_dtype,
                          approx_gelu=approx_gelu)

    out = pl.pallas_call(
        kernel,
        out_shape=jax.ShapeDtypeStruct((b_pad, d_out), x.dtype),
        grid_spec=pltpu.PrefetchScalarGridSpec(
            num_scalar_prefetch=0,
            grid=(b_pad // tb,),
            in_specs=specs,
            out_specs=pl.BlockSpec((tb, d_out), lambda i: (i, 0)),
        ),
        compiler_params=pltpu.CompilerParams(
            dimension_semantics=("parallel",),  # rows independent; megacore
            vmem_limit_bytes=vmem_limit,
        ),
    )(*args)

    return out[:B] if b_pad != B else out


def reference_semantic_tower_block(x, params, *, use_semantic_attention=True):
    def gelu(h):
        return 0.5 * h * (1.0 + lax.erf(h * _INV_SQRT2))

    def ln(h, g, b):
        mean = jnp.mean(h, axis=-1, keepdims=True)
        var = jnp.mean((h - mean) ** 2, axis=-1, keepdims=True)
        return (h - mean) / jnp.sqrt(var + _LN_EPS) * g + b

    d_in = x.shape[-1]
    d_out = params["w2"].shape[1]
    residual = x if d_in == d_out else x @ params["wr"] + params["br"]
    h_in = x
    if use_semantic_attention:
        a = gelu(x @ params["wa1"] + params["ba1"])
        gate = 1.0 / (1.0 + jnp.exp(-(a @ params["wa2"] + params["ba2"])))
        h_in = x * gate
    h = gelu(ln(h_in @ params["w1"] + params["b1"], params["ln1_g"], params["ln1_b"]))
    h = ln(h @ params["w2"] + params["b2"], params["ln2_g"], params["ln2_b"])
    return gelu(h + residual)


if __name__ == "__main__":
    # "highest" only affects f32 dots (the reference + the f32 parity path);
    # the bf16-operand perf path is a single MXU pass regardless.
    jax.config.update("jax_default_matmul_precision", "highest")

    # Small, lane-aligned shapes consistent with the module
    # (input_dim != output_dim so the residual Linear path is exercised).
    B, D_IN, D_HIDDEN, D_OUT = 16, 128, 256, 256
    D_ATTN = D_HIDDEN // 4

    key = jax.random.PRNGKey(0)
    keys = jax.random.split(key, 12)

    def linear_init(kw, kb, fan_in, fan_out):
        bound = 1.0 / math.sqrt(fan_in)
        w = jax.random.uniform(kw, (fan_in, fan_out), jnp.float32, -bound, bound)
        b = jax.random.uniform(kb, (fan_out,), jnp.float32, -bound, bound)
        return w, b

    x = jax.random.normal(keys[0], (B, D_IN), dtype=jnp.float32)

    wa1, ba1 = linear_init(keys[1], keys[2], D_IN, D_ATTN)
    wa2, ba2 = linear_init(keys[3], keys[4], D_ATTN, D_IN)
    w1, b1 = linear_init(keys[5], keys[6], D_IN, D_HIDDEN)
    w2, b2 = linear_init(keys[7], keys[8], D_HIDDEN, D_OUT)
    wr, br = linear_init(keys[9], keys[10], D_IN, D_OUT)

    params = dict(
        wa1=wa1, ba1=ba1, wa2=wa2, ba2=ba2,
        w1=w1, b1=b1, ln1_g=jnp.ones((D_HIDDEN,), jnp.float32),
        ln1_b=jnp.zeros((D_HIDDEN,), jnp.float32),
        w2=w2, b2=b2, ln2_g=jnp.ones((D_OUT,), jnp.float32),
        ln2_b=jnp.zeros((D_OUT,), jnp.float32),
        wr=wr, br=br,
    )

    ref = reference_semantic_tower_block(x, params)

    # Exact parity path: f32 MXU operands, erf GELU.
    out_f32 = semantic_tower_block(x, params, compute_dtype=None,
                                   approx_gelu=False)
    out_f32 = jax.block_until_ready(out_f32)
    assert out_f32.shape == (B, D_OUT)
    assert jnp.allclose(out_f32, ref, atol=5e-4, rtol=5e-4), "f32 path mismatch"

    # Perf default: bf16 MXU operands (f32 accumulation), tanh GELU / EUP sigmoid.
    out_perf = semantic_tower_block(x, params)
    out_perf = jax.block_until_ready(out_perf)
    assert out_perf.shape == (B, D_OUT)
    assert jnp.allclose(out_perf, ref, atol=1e-1, rtol=1e-1), "bf16 path mismatch"

    # TODO(synk): nn.Dropout(0.2) layers are treated as identity (inference);
    # training-mode dropout would need pltpu.prng_seed + pltpu.prng_random_bits.
    print("KERNEL_OK")
</pallas_src>

<mosaic_0001>
module attributes {stable_mosaic.version = 11 : i64} {
  func.func @kernel(%arg0: i32, %arg1: memref<8x128xf32, #tpu.memory_space<vmem>>, %arg2: memref<128x64xf32, #tpu.memory_space<vmem>>, %arg3: memref<1x64xf32, #tpu.memory_space<vmem>>, %arg4: memref<64x128xf32, #tpu.memory_space<vmem>>, %arg5: memref<1x128xf32, #tpu.memory_space<vmem>>, %arg6: memref<128x256xf32, #tpu.memory_space<vmem>>, %arg7: memref<1x256xf32, #tpu.memory_space<vmem>>, %arg8: memref<1x256xf32, #tpu.memory_space<vmem>>, %arg9: memref<1x256xf32, #tpu.memory_space<vmem>>, %arg10: memref<256x256xf32, #tpu.memory_space<vmem>>, %arg11: memref<1x256xf32, #tpu.memory_space<vmem>>, %arg12: memref<1x256xf32, #tpu.memory_space<vmem>>, %arg13: memref<1x256xf32, #tpu.memory_space<vmem>>, %arg14: memref<128x256xf32, #tpu.memory_space<vmem>>, %arg15: memref<1x256xf32, #tpu.memory_space<vmem>>, %arg16: memref<8x256xf32, #tpu.memory_space<vmem>>) attributes {dimension_semantics = [#tpu.dimension_semantics<parallel>], iteration_bounds = array<i64: 2>, scalar_prefetch = 0 : i64, scratch_operands = 0 : i64, tpu.core_type = #tpu.core_type<tc>, window_params = [{transform_indices = @transform_0, window_bounds = array<i64: 8, 128>}, {pipeline_mode = #tpu.pipeline_mode<synchronous>, transform_indices = @transform_1, window_bounds = array<i64: 128, 64>}, {pipeline_mode = #tpu.pipeline_mode<synchronous>, transform_indices = @transform_2, window_bounds = array<i64: 1, 64>}, {pipeline_mode = #tpu.pipeline_mode<synchronous>, transform_indices = @transform_3, window_bounds = array<i64: 64, 128>}, {pipeline_mode = #tpu.pipeline_mode<synchronous>, transform_indices = @transform_4, window_bounds = array<i64: 1, 128>}, {pipeline_mode = #tpu.pipeline_mode<synchronous>, transform_indices = @transform_5, window_bounds = array<i64: 128, 256>}, {pipeline_mode = #tpu.pipeline_mode<synchronous>, transform_indices = @transform_6, window_bounds = array<i64: 1, 256>}, {pipeline_mode = #tpu.pipeline_mode<synchronous>, transform_indices = @transform_7, window_bounds = array<i64: 1, 256>}, {pipeline_mode = #tpu.pipeline_mode<synchronous>, transform_indices = @transform_8, window_bounds = array<i64: 1, 256>}, {pipeline_mode = #tpu.pipeline_mode<synchronous>, transform_indices = @transform_9, window_bounds = array<i64: 256, 256>}, {pipeline_mode = #tpu.pipeline_mode<synchronous>, transform_indices = @transform_10, window_bounds = array<i64: 1, 256>}, {pipeline_mode = #tpu.pipeline_mode<synchronous>, transform_indices = @transform_11, window_bounds = array<i64: 1, 256>}, {pipeline_mode = #tpu.pipeline_mode<synchronous>, transform_indices = @transform_12, window_bounds = array<i64: 1, 256>}, {pipeline_mode = #tpu.pipeline_mode<synchronous>, transform_indices = @transform_13, window_bounds = array<i64: 128, 256>}, {pipeline_mode = #tpu.pipeline_mode<synchronous>, transform_indices = @transform_14, window_bounds = array<i64: 1, 256>}, {transform_indices = @transform_15, window_bounds = array<i64: 8, 256>}]} {
    %c0 = arith.constant 0 : index
    %c0_0 = arith.constant 0 : index
    %0 = vector.load %arg1[%c0, %c0_0] : memref<8x128xf32, #tpu.memory_space<vmem>>, vector<8x128xf32>
    %c0_1 = arith.constant 0 : index
    %c0_2 = arith.constant 0 : index
    %1 = vector.load %arg2[%c0_1, %c0_2] : memref<128x64xf32, #tpu.memory_space<vmem>>, vector<128x64xf32>
    %cst = arith.constant dense<0.000000e+00> : vector<8x64xf32>
    %2 = tpu.matmul %0, %1, %cst {dimension_numbers = #tpu.dot_dimension_numbers<[1], [0], [0], [1], [0, 0, 1, 1], [], []>, precision = #tpu.contract_precision<fp32>} : vector<8x128xf32>, vector<128x64xf32>, vector<8x64xf32> -> vector<8x64xf32>
    %c0_3 = arith.constant 0 : index
    %c0_4 = arith.constant 0 : index
    %3 = vector.load %arg3[%c0_3, %c0_4] : memref<1x64xf32, #tpu.memory_space<vmem>>, vector<1x64xf32>
    %4 = vector.broadcast %3 : vector<1x64xf32> to vector<8x64xf32>
    %5 = arith.addf %2, %4 : vector<8x64xf32>
    %cst_5 = arith.constant 5.000000e-01 : f32
    %6 = vector.broadcast %cst_5 : f32 to vector<8x64xf32>
    %7 = arith.mulf %6, %5 : vector<8x64xf32>
    %cst_6 = arith.constant 0.707106769 : f32
    %8 = vector.broadcast %cst_6 : f32 to vector<8x64xf32>
    %9 = arith.mulf %5, %8 : vector<8x64xf32>
    %10 = math.erf %9 : vector<8x64xf32>
    %cst_7 = arith.constant 1.000000e+00 : f32
    %11 = vector.broadcast %cst_7 : f32 to vector<8x64xf32>
    %12 = arith.addf %11, %10 : vector<8x64xf32>
    %13 = arith.mulf %7, %12 : vector<8x64xf32>
    %c0_8 = arith.constant 0 : index
    %c0_9 = arith.constant 0 : index
    %14 = vector.load %arg4[%c0_8, %c0_9] : memref<64x128xf32, #tpu.memory_space<vmem>>, vector<64x128xf32>
    %cst_10 = arith.constant dense<0.000000e+00> : vector<8x128xf32>
    %15 = tpu.matmul %13, %14, %cst_10 {dimension_numbers = #tpu.dot_dimension_numbers<[1], [0], [0], [1], [0, 0, 1, 1], [], []>, precision = #tpu.contract_precision<fp32>} : vector<8x64xf32>, vector<64x128xf32>, vector<8x128xf32> -> vector<8x128xf32>
    %c0_11 = arith.constant 0 : index
    %c0_12 = arith.constant 0 : index
    %16 = vector.load %arg5[%c0_11, %c0_12] : memref<1x128xf32, #tpu.memory_space<vmem>>, vector<1x128xf32>
    %17 = vector.broadcast %16 : vector<1x128xf32> to vector<8x128xf32>
    %18 = arith.addf %15, %17 : vector<8x128xf32>
    %cst_13 = arith.constant 5.000000e-01 : f32
    %19 = vector.broadcast %cst_13 : f32 to vector<8x128xf32>
    %20 = arith.mulf %19, %18 : vector<8x128xf32>
    %21 = math.tanh %20 : vector<8x128xf32>
    %cst_14 = arith.constant 1.000000e+00 : f32
    %22 = vector.broadcast %cst_14 : f32 to vector<8x128xf32>
    %23 = arith.addf %21, %22 : vector<8x128xf32>
    %cst_15 = arith.constant 5.000000e-01 : f32
    %24 = vector.broadcast %cst_15 : f32 to vector<8x128xf32>
    %25 = arith.mulf %24, %23 : vector<8x128xf32>
    %26 = arith.mulf %0, %25 : vector<8x128xf32>
    %c0_16 = arith.constant 0 : index
    %c0_17 = arith.constant 0 : index
    %27 = vector.load %arg6[%c0_16, %c0_17] : memref<128x256xf32, #tpu.memory_space<vmem>>, vector<128x256xf32>
    %cst_18 = arith.constant dense<0.000000e+00> : vector<8x256xf32>
    %28 = tpu.matmul %26, %27, %cst_18 {dimension_numbers = #tpu.dot_dimension_numbers<[1], [0], [0], [1], [0, 0, 1, 1], [], []>, precision = #tpu.contract_precision<fp32>} : vector<8x128xf32>, vector<128x256xf32>, vector<8x256xf32> -> vector<8x256xf32>
    %c0_19 = arith.constant 0 : index
    %c0_20 = arith.constant 0 : index
    %29 = vector.load %arg7[%c0_19, %c0_20] : memref<1x256xf32, #tpu.memory_space<vmem>>, vector<1x256xf32>
    %30 = vector.broadcast %29 : vector<1x256xf32> to vector<8x256xf32>
    %31 = arith.addf %28, %30 : vector<8x256xf32>
    %cst_21 = arith.constant dense<0.000000e+00> : vector<8xf32>
    %32 = vector.multi_reduction <add>, %31, %cst_21 [1] : vector<8x256xf32> to vector<8xf32>
    %33 = vector.shape_cast %32 : vector<8xf32> to vector<8x1xf32>
    %cst_22 = arith.constant 2.560000e+02 : f32
    %34 = vector.broadcast %cst_22 : f32 to vector<8x1xf32>
    %35 = arith.divf %33, %34 : vector<8x1xf32>
    %36 = vector.broadcast %35 : vector<8x1xf32> to vector<8x256xf32>
    %37 = arith.subf %31, %36 : vector<8x256xf32>
    %38 = arith.mulf %37, %37 : vector<8x256xf32>
    %cst_23 = arith.constant dense<0.000000e+00> : vector<8xf32>
    %39 = vector.multi_reduction <add>, %38, %cst_23 [1] : vector<8x256xf32> to vector<8xf32>
    %40 = vector.shape_cast %39 : vector<8xf32> to vector<8x1xf32>
    %cst_24 = arith.constant 2.560000e+02 : f32
    %41 = vector.broadcast %cst_24 : f32 to vector<8x1xf32>
    %42 = arith.divf %40, %41 : vector<8x1xf32>
    %cst_25 = arith.constant 9.99999974E-6 : f32
    %43 = vector.broadcast %cst_25 : f32 to vector<8x1xf32>
    %44 = arith.addf %42, %43 : vector<8x1xf32>
    %45 = math.rsqrt %44 : vector<8x1xf32>
    %46 = vector.broadcast %45 : vector<8x1xf32> to vector<8x256xf32>
    %47 = arith.mulf %37, %46 : vector<8x256xf32>
    %c0_26 = arith.constant 0 : index
    %c0_27 = arith.constant 0 : index
    %48 = vector.load %arg8[%c0_26, %c0_27] : memref<1x256xf32, #tpu.memory_space<vmem>>, vector<1x256xf32>
    %49 = vector.broadcast %48 : vector<1x256xf32> to vector<8x256xf32>
    %50 = arith.mulf %47, %49 : vector<8x256xf32>
    %c0_28 = arith.constant 0 : index
    %c0_29 = arith.constant 0 : index
    %51 = vector.load %arg9[%c0_28, %c0_29] : memref<1x256xf32, #tpu.memory_space<vmem>>, vector<1x256xf32>
    %52 = vector.broadcast %51 : vector<1x256xf32> to vector<8x256xf32>
    %53 = arith.addf %50, %52 : vector<8x256xf32>
    %cst_30 = arith.constant 5.000000e-01 : f32
    %54 = vector.broadcast %cst_30 : f32 to vector<8x256xf32>
    %55 = arith.mulf %54, %53 : vector<8x256xf32>
    %cst_31 = arith.constant 0.707106769 : f32
    %56 = vector.broadcast %cst_31 : f32 to vector<8x256xf32>
    %57 = arith.mulf %53, %56 : vector<8x256xf32>
    %58 = math.erf %57 : vector<8x256xf32>
    %cst_32 = arith.constant 1.000000e+00 : f32
    %59 = vector.broadcast %cst_32 : f32 to vector<8x256xf32>
    %60 = arith.addf %59, %58 : vector<8x256xf32>
    %61 = arith.mulf %55, %60 : vector<8x256xf32>
    %c0_33 = arith.constant 0 : index
    %c0_34 = arith.constant 0 : index
    %62 = vector.load %arg10[%c0_33, %c0_34] : memref<256x256xf32, #tpu.memory_space<vmem>>, vector<256x256xf32>
    %cst_35 = arith.constant dense<0.000000e+00> : vector<8x256xf32>
    %63 = tpu.matmul %61, %62, %cst_35 {dimension_numbers = #tpu.dot_dimension_numbers<[1], [0], [0], [1], [0, 0, 1, 1], [], []>, precision = #tpu.contract_precision<fp32>} : vector<8x256xf32>, vector<256x256xf32>, vector<8x256xf32> -> vector<8x256xf32>
    %c0_36 = arith.constant 0 : index
    %c0_37 = arith.constant 0 : index
    %64 = vector.load %arg11[%c0_36, %c0_37] : memref<1x256xf32, #tpu.memory_space<vmem>>, vector<1x256xf32>
    %65 = vector.broadcast %64 : vector<1x256xf32> to vector<8x256xf32>
    %66 = arith.addf %63, %65 : vector<8x256xf32>
    %cst_38 = arith.constant dense<0.000000e+00> : vector<8xf32>
    %67 = vector.multi_reduction <add>, %66, %cst_38 [1] : vector<8x256xf32> to vector<8xf32>
    %68 = vector.shape_cast %67 : vector<8xf32> to vector<8x1xf32>
    %cst_39 = arith.constant 2.560000e+02 : f32
    %69 = vector.broadcast %cst_39 : f32 to vector<8x1xf32>
    %70 = arith.divf %68, %69 : vector<8x1xf32>
    %71 = vector.broadcast %70 : vector<8x1xf32> to vector<8x256xf32>
    %72 = arith.subf %66, %71 : vector<8x256xf32>
    %73 = arith.mulf %72, %72 : vector<8x256xf32>
    %cst_40 = arith.constant dense<0.000000e+00> : vector<8xf32>
    %74 = vector.multi_reduction <add>, %73, %cst_40 [1] : vector<8x256xf32> to vector<8xf32>
    %75 = vector.shape_cast %74 : vector<8xf32> to vector<8x1xf32>
    %cst_41 = arith.constant 2.560000e+02 : f32
    %76 = vector.broadcast %cst_41 : f32 to vector<8x1xf32>
    %77 = arith.divf %75, %76 : vector<8x1xf32>
    %cst_42 = arith.constant 9.99999974E-6 : f32
    %78 = vector.broadcast %cst_42 : f32 to vector<8x1xf32>
    %79 = arith.addf %77, %78 : vector<8x1xf32>
    %80 = math.rsqrt %79 : vector<8x1xf32>
    %81 = vector.broadcast %80 : vector<8x1xf32> to vector<8x256xf32>
    %82 = arith.mulf %72, %81 : vector<8x256xf32>
    %c0_43 = arith.constant 0 : index
    %c0_44 = arith.constant 0 : index
    %83 = vector.load %arg12[%c0_43, %c0_44] : memref<1x256xf32, #tpu.memory_space<vmem>>, vector<1x256xf32>
    %84 = vector.broadcast %83 : vector<1x256xf32> to vector<8x256xf32>
    %85 = arith.mulf %82, %84 : vector<8x256xf32>
    %c0_45 = arith.constant 0 : index
    %c0_46 = arith.constant 0 : index
    %86 = vector.load %arg13[%c0_45, %c0_46] : memref<1x256xf32, #tpu.memory_space<vmem>>, vector<1x256xf32>
    %87 = vector.broadcast %86 : vector<1x256xf32> to vector<8x256xf32>
    %88 = arith.addf %85, %87 : vector<8x256xf32>
    %c0_47 = arith.constant 0 : index
    %c0_48 = arith.constant 0 : index
    %89 = vector.load %arg14[%c0_47, %c0_48] : memref<128x256xf32, #tpu.memory_space<vmem>>, vector<128x256xf32>
    %cst_49 = arith.constant dense<0.000000e+00> : vector<8x256xf32>
    %90 = tpu.matmul %0, %89, %cst_49 {dimension_numbers = #tpu.dot_dimension_numbers<[1], [0], [0], [1], [0, 0, 1, 1], [], []>, precision = #tpu.contract_precision<fp32>} : vector<8x128xf32>, vector<128x256xf32>, vector<8x256xf32> -> vector<8x256xf32>
    %c0_50 = arith.constant 0 : index
    %c0_51 = arith.constant 0 : index
    %91 = vector.load %arg15[%c0_50, %c0_51] : memref<1x256xf32, #tpu.memory_space<vmem>>, vector<1x256xf32>
    %92 = vector.broadcast %91 : vector<1x256xf32> to vector<8x256xf32>
    %93 = arith.addf %90, %92 : vector<8x256xf32>
    %94 = arith.addf %88, %93 : vector<8x256xf32>
    %cst_52 = arith.constant 5.000000e-01 : f32
    %95 = vector.broadcast %cst_52 : f32 to vector<8x256xf32>
    %96 = arith.mulf %95, %94 : vector<8x256xf32>
    %cst_53 = arith.constant 0.707106769 : f32
    %97 = vector.broadcast %cst_53 : f32 to vector<8x256xf32>
    %98 = arith.mulf %94, %97 : vector<8x256xf32>
    %99 = math.erf %98 : vector<8x256xf32>
    %cst_54 = arith.constant 1.000000e+00 : f32
    %100 = vector.broadcast %cst_54 : f32 to vector<8x256xf32>
    %101 = arith.addf %100, %99 : vector<8x256xf32>
    %102 = arith.mulf %96, %101 : vector<8x256xf32>
    %c0_55 = arith.constant 0 : index
    %c0_56 = arith.constant 0 : index
    %103 = vector.load %arg16[%c0_55, %c0_56] : memref<8x256xf32, #tpu.memory_space<vmem>>, vector<8x256xf32>
    tpu.vector_store %arg16[%c0_55, %c0_56], %102 {strides = array<i32>} : memref<8x256xf32, #tpu.memory_space<vmem>>, vector<8x256xf32>,
    return
  }
  func.func @transform_0(%arg0: i32) -> (i32, i32) {
    %c0_i32 = arith.constant 0 : i32
    %c0_i32_0 = arith.constant 0 : i32
    return %arg0, %c0_i32 : i32, i32
  }
  func.func @transform_1(%arg0: i32) -> (i32, i32) {
    %c0_i32 = arith.constant 0 : i32
    %c0_i32_0 = arith.constant 0 : i32
    %c0_i32_1 = arith.constant 0 : i32
    return %c0_i32, %c0_i32_0 : i32, i32
  }
  func.func @transform_2(%arg0: i32) -> (i32, i32) {
    %c0_i32 = arith.constant 0 : i32
    %c0_i32_0 = arith.constant 0 : i32
    %c0_i32_1 = arith.constant 0 : i32
    return %c0_i32, %c0_i32_0 : i32, i32
  }
  func.func @transform_3(%arg0: i32) -> (i32, i32) {
    %c0_i32 = arith.constant 0 : i32
    %c0_i32_0 = arith.constant 0 : i32
    %c0_i32_1 = arith.constant 0 : i32
    return %c0_i32, %c0_i32_0 : i32, i32
  }
  func.func @transform_4(%arg0: i32) -> (i32, i32) {
    %c0_i32 = arith.constant 0 : i32
    %c0_i32_0 = arith.constant 0 : i32
    %c0_i32_1 = arith.constant 0 : i32
    return %c0_i32, %c0_i32_0 : i32, i32
  }
  func.func @transform_5(%arg0: i32) -> (i32, i32) {
    %c0_i32 = arith.constant 0 : i32
    %c0_i32_0 = arith.constant 0 : i32
    %c0_i32_1 = arith.constant 0 : i32
    return %c0_i32, %c0_i32_0 : i32, i32
  }
  func.func @transform_6(%arg0: i32) -> (i32, i32) {
    %c0_i32 = arith.constant 0 : i32
    %c0_i32_0 = arith.constant 0 : i32
    %c0_i32_1 = arith.constant 0 : i32
    return %c0_i32, %c0_i32_0 : i32, i32
  }
  func.func @transform_7(%arg0: i32) -> (i32, i32) {
    %c0_i32 = arith.constant 0 : i32
    %c0_i32_0 = arith.constant 0 : i32
    %c0_i32_1 = arith.constant 0 : i32
    return %c0_i32, %c0_i32_0 : i32, i32
  }
  func.func @transform_8(%arg0: i32) -> (i32, i32) {
    %c0_i32 = arith.constant 0 : i32
    %c0_i32_0 = arith.constant 0 : i32
    %c0_i32_1 = arith.constant 0 : i32
    return %c0_i32, %c0_i32_0 : i32, i32
  }
  func.func @transform_9(%arg0: i32) -> (i32, i32) {
    %c0_i32 = arith.constant 0 : i32
    %c0_i32_0 = arith.constant 0 : i32
    %c0_i32_1 = arith.constant 0 : i32
    return %c0_i32, %c0_i32_0 : i32, i32
  }
  func.func @transform_10(%arg0: i32) -> (i32, i32) {
    %c0_i32 = arith.constant 0 : i32
    %c0_i32_0 = arith.constant 0 : i32
    %c0_i32_1 = arith.constant 0 : i32
    return %c0_i32, %c0_i32_0 : i32, i32
  }
  func.func @transform_11(%arg0: i32) -> (i32, i32) {
    %c0_i32 = arith.constant 0 : i32
    %c0_i32_0 = arith.constant 0 : i32
    %c0_i32_1 = arith.constant 0 : i32
    return %c0_i32, %c0_i32_0 : i32, i32
  }
  func.func @transform_12(%arg0: i32) -> (i32, i32) {
    %c0_i32 = arith.constant 0 : i32
    %c0_i32_0 = arith.constant 0 : i32
    %c0_i32_1 = arith.constant 0 : i32
    return %c0_i32, %c0_i32_0 : i32, i32
  }
  func.func @transform_13(%arg0: i32) -> (i32, i32) {
    %c0_i32 = arith.constant 0 : i32
    %c0_i32_0 = arith.constant 0 : i32
    %c0_i32_1 = arith.constant 0 : i32
    return %c0_i32, %c0_i32_0 : i32, i32
  }
  func.func @transform_14(%arg0: i32) -> (i32, i32) {
    %c0_i32 = arith.constant 0 : i32
    %c0_i32_0 = arith.constant 0 : i32
    %c0_i32_1 = arith.constant 0 : i32
    return %c0_i32, %c0_i32_0 : i32, i32
  }
  func.func @transform_15(%arg0: i32) -> (i32, i32) {
    %c0_i32 = arith.constant 0 : i32
    %c0_i32_0 = arith.constant 0 : i32
    return %arg0, %c0_i32 : i32, i32
  }
}

</mosaic_0001>

<llo_original>
// kernel: tpu_custom_call.1
$region0: #{tpu_custom_call.1}
  #allocation0 [shape = 'u32[]', space=smem, size = 0x4, offset = 0x4, fixed_abs, tag = 'smem constant byte address 0x4 - core index']
  #allocation1 [shape = 'u32[144,128]{1,0:T(1,128)}', space=vmem, size = 0x12000, scoped, tag = 'internal scratch']
  %s0 = inlined_call_operand.vmem [shape: f32[16,128], index: 0, kind: input, shape index: {}]
  %s1 = inlined_call_operand.vmem [shape: f32[128,64], index: 1, kind: input, shape index: {}]
  %s2 = inlined_call_operand.vmem [shape: f32[1,64], index: 2, kind: input, shape index: {}]
  %s3 = inlined_call_operand.vmem [shape: f32[64,128], index: 3, kind: input, shape index: {}]
  %s4 = inlined_call_operand.vmem [shape: f32[1,128], index: 4, kind: input, shape index: {}]
  %s5 = inlined_call_operand.hbm [shape: f32[128,256], index: 5, kind: input, shape index: {}]
  %s6 = inlined_call_operand.vmem [shape: f32[1,256], index: 6, kind: input, shape index: {}]
  %s7 = inlined_call_operand.vmem [shape: f32[1,256], index: 7, kind: input, shape index: {}]
  %s8 = inlined_call_operand.vmem [shape: f32[1,256], index: 8, kind: input, shape index: {}]
  %s9 = inlined_call_operand.hbm [shape: f32[256,256], index: 9, kind: input, shape index: {}]
  %s10 = inlined_call_operand.vmem [shape: f32[1,256], index: 10, kind: input, shape index: {}]
  %s11 = inlined_call_operand.vmem [shape: f32[1,256], index: 11, kind: input, shape index: {}]
  %s12 = inlined_call_operand.vmem [shape: f32[1,256], index: 12, kind: input, shape index: {}]
  %s13 = inlined_call_operand.hbm [shape: f32[128,256], index: 13, kind: input, shape index: {}]
  %s14 = inlined_call_operand.vmem [shape: f32[1,256], index: 14, kind: input, shape index: {}]
  %s15 = inlined_call_operand.hbm [shape: f32[16,256], index: 15, kind: output, shape index: {}]
  %s16 = sld [smem:[#allocation0]]
  $region105: #{tpu_custom_call.1} parent=0
    _
  %s18 = ssub.s32 1, %s16
  %s19 = scalar_select 0, %s18, %s16
  $region1: #{tpu_custom_call.1} parent=0
    #allocation2 [shape = 'u8[131072]{0}', space=vmem, size = 0x20000, scoped, tag = 'input window, operand 5, single buffered']
    #allocation3 [shape = 's32[2]{0}', space=sflag, size = 0x8, scoped, tag = 'scoped memory for tpu_custom_call.1']
    #allocation4 [shape = 's32[2]{0}', space=sflag, size = 0x8, scoped, tag = 'scoped memory for tpu_custom_call.1']
    #allocation5 [shape = 'u8[262144]{0}', space=vmem, size = 0x40000, scoped, tag = 'input window, operand 9, single buffered']
    #allocation6 [shape = 's32[1]{0}', space=sflag, size = 0x4, scoped, tag = 'scoped memory for tpu_custom_call.1']
    #allocation7 [shape = 'u8[131072]{0}', space=vmem, size = 0x20000, scoped, tag = 'input window, operand 13, single buffered']
    #allocation8 [shape = 'u8[16384]{0}', space=vmem, size = 0x4000, scoped, tag = 'output window, operand 0']
    %20 = vsyncpa [#allocation3], 0
    %21 = vsyncpa [#allocation6], 0
    %22 = vsyncpa [#allocation4], 0
    %s23 = scalar_lea.sflag [#allocation4], 1
    %24 = vsyncpa %s23, 0
    loop: start=0, step=1, limit=4
    $region2: #{tpu_custom_call.1} parent=1 // loop_pre_header
      _
    $region3: #{tpu_custom_call.1} parent=1 // loop_header
      %s26 = sphi 0, %s30
      %p27 = scmp.ge.s32.totalorder %s26, 4
      %s36 = sphi 0, %s38
      %s39 = sphi 0, %s36
      %s40 = sphi 0, %s39
      %s56 = sphi 0, %s40
      %s60 = sphi 0, %s60
      %s62 = sphi 0, %s60
      %s63 = sphi 0, %s62
      %s77 = sphi 0, %s63
      %s81 = sphi 0, %s81
      %s83 = sphi 0, %s81
      %s84 = sphi 0, %s83
      %s98 = sphi 0, %s84
      %s102 = sphi 0, %s102
      %s104 = sphi 0, %s102
      %s105 = sphi 0, %s104
      %s119 = sphi 0, %s105
      %s123 = sphi 0, %s123
      %s125 = sphi 0, %s123
      %s126 = sphi 0, %s125
      %s140 = sphi 0, %s126
      %s144 = sphi 0, %s144
      %s146 = sphi 0, %s144
      %s147 = sphi 0, %s146
      %s161 = sphi 0, %s147
      %s165 = sphi 0, %s165
      %s167 = sphi 0, %s165
      %s168 = sphi 0, %s167
      %s182 = sphi 0, %s168
      %s186 = sphi 0, %s186
      %s188 = sphi 0, %s186
      %s189 = sphi 0, %s188
      %s203 = sphi 0, %s189
      %s207 = sphi 0, %s207
      %s209 = sphi 0, %s207
      %s210 = sphi 0, %s209
      %s224 = sphi 0, %s210
      %s228 = sphi 0, %s228
      %s230 = sphi 0, %s228
      %s231 = sphi 0, %s230
      %s245 = sphi 0, %s231
      %s249 = sphi 0, %s249
      %s251 = sphi 0, %s249
      %s252 = sphi 0, %s251
      %s266 = sphi 0, %s252
      %s270 = sphi 0, %s270
      %s272 = sphi 0, %s270
      %s273 = sphi 0, %s272
      %s287 = sphi 0, %s273
      %s291 = sphi 0, %s291
      %s293 = sphi 0, %s291
      %s294 = sphi 0, %s293
      %s308 = sphi 0, %s294
      %s312 = sphi 0, %s312
      %s314 = sphi 0, %s312
      %s315 = sphi 0, %s314
      %s329 = sphi 0, %s315
      %s333 = sphi 0, %s333
      %s335 = sphi 0, %s333
      %s336 = sphi 0, %s335
      %s350 = sphi 0, %s336
      %s356 = sphi 0, %s358
      %s359 = sphi 0, %s356
      %s360 = sphi 0, %s359
      %s376 = sphi 0, %s360
    $region4: #{tpu_custom_call.1} parent=1 // loop_header_branch
      %29 = sbr.rel (%p27) target = $region8
    $region5: #{tpu_custom_call.1} parent=1 // loop_body
      %s31 = ssub.s32 %s26, 1
      %s32 = ssub.s32 %s26, 2
      %s33 = sadd.s32 %s26, 1
      %s34 = ssub.s32 %s26, %s33
      %p35 = scmp.eq.s32.totalorder %s34, 0
      %s37 = sadd.s32 %s36, 1
      %s38 = scalar_select %p35, %s36, %s37
      %p41 = pneg %p35
      %p42 = scmp.eq.s32.totalorder %s26, 1
      %p43 = por %p41, %p42
      %p44 = scmp.ne.s32.totalorder %s36, %s39
      %p45 = scmp.eq.s32.totalorder %s26, 0
      %p46 = por %p44, %p45
      %p47 = scmp.ne.s32.totalorder %s36, %s39
      %p48 = scmp.eq.s32.totalorder %s31, 1
      %p49 = por %p47, %p48
      %p50 = scmp.ne.s32.totalorder %s39, %s40
      %p51 = scmp.eq.s32.totalorder %s31, 0
      %p52 = por %p50, %p51
      %p53 = scmp.ne.s32.totalorder %s39, %s40
      %p54 = scmp.eq.s32.totalorder %s32, 1
      %p55 = por %p53, %p54
      %p57 = scmp.ne.s32.totalorder %s40, %s56
      %p58 = scmp.eq.s32.totalorder %s32, 0
      %p59 = por %p57, %p58
      %s61 = sadd.s32 %s60, 1
      %p64 = scmp.eq.s32.totalorder %s26, 1
      %p65 = scmp.ne.s32.totalorder %s60, %s62
      %p66 = scmp.eq.s32.totalorder %s26, 0
      %p67 = por %p65, %p66
      %p68 = scmp.ne.s32.totalorder %s60, %s62
      %p69 = scmp.eq.s32.totalorder %s31, 1
      %p70 = por %p68, %p69
      %p71 = scmp.ne.s32.totalorder %s62, %s63
      %p72 = scmp.eq.s32.totalorder %s31, 0
      %p73 = por %p71, %p72
      %p74 = scmp.ne.s32.totalorder %s62, %s63
      %p75 = scmp.eq.s32.totalorder %s32, 1
      %p76 = por %p74, %p75
      %p78 = scmp.ne.s32.totalorder %s63, %s77
      %p79 = scmp.eq.s32.totalorder %s32, 0
      %p80 = por %p78, %p79
      %s82 = sadd.s32 %s81, 1
      %p85 = scmp.eq.s32.totalorder %s26, 1
      %p86 = scmp.ne.s32.totalorder %s81, %s83
      %p87 = scmp.eq.s32.totalorder %s26, 0
      %p88 = por %p86, %p87
      %p89 = scmp.ne.s32.totalorder %s81, %s83
      %p90 = scmp.eq.s32.totalorder %s31, 1
      %p91 = por %p89, %p90
      %p92 = scmp.ne.s32.totalorder %s83, %s84
      %p93 = scmp.eq.s32.totalorder %s31, 0
      %p94 = por %p92, %p93
      %p95 = scmp.ne.s32.totalorder %s83, %s84
      %p96 = scmp.eq.s32.totalorder %s32, 1
      %p97 = por %p95, %p96
      %p99 = scmp.ne.s32.totalorder %s84, %s98
      %p100 = scmp.eq.s32.totalorder %s32, 0
      %p101 = por %p99, %p100
      %s103 = sadd.s32 %s102, 1
      %p106 = scmp.eq.s32.totalorder %s26, 1
      %p107 = scmp.ne.s32.totalorder %s102, %s104
      %p108 = scmp.eq.s32.totalorder %s26, 0
      %p109 = por %p107, %p108
      %p110 = scmp.ne.s32.totalorder %s102, %s104
      %p111 = scmp.eq.s32.totalorder %s31, 1
      %p112 = por %p110, %p111
      %p113 = scmp.ne.s32.totalorder %s104, %s105
      %p114 = scmp.eq.s32.totalorder %s31, 0
      %p115 = por %p113, %p114
      %p116 = scmp.ne.s32.totalorder %s104, %s105
      %p117 = scmp.eq.s32.totalorder %s32, 1
      %p118 = por %p116, %p117
      %p120 = scmp.ne.s32.totalorder %s105, %s119
      %p121 = scmp.eq.s32.totalorder %s32, 0
      %p122 = por %p120, %p121
      %s124 = sadd.s32 %s123, 1
      %p127 = scmp.eq.s32.totalorder %s26, 1
      %p128 = scmp.ne.s32.totalorder %s123, %s125
      %p129 = scmp.eq.s32.totalorder %s26, 0
      %p130 = por %p128, %p129
      %p131 = scmp.ne.s32.totalorder %s123, %s125
      %p132 = scmp.eq.s32.totalorder %s31, 1
      %p133 = por %p131, %p132
      %p134 = scmp.ne.s32.totalorder %s125, %s126
      %p135 = scmp.eq.s32.totalorder %s31, 0
      %p136 = por %p134, %p135
      %p137 = scmp.ne.s32.totalorder %s125, %s126
      %p138 = scmp.eq.s32.totalorder %s32, 1
      %p139 = por %p137, %p138
      %p141 = scmp.ne.s32.totalorder %s126, %s140
      %p142 = scmp.eq.s32.totalorder %s32, 0
      %p143 = por %p141, %p142
      %s145 = sadd.s32 %s144, 1
      %p148 = scmp.eq.s32.totalorder %s26, 1
      %p149 = scmp.ne.s32.totalorder %s144, %s146
      %p150 = scmp.eq.s32.totalorder %s26, 0
      %p151 = por %p149, %p150
      %p152 = scmp.ne.s32.totalorder %s144, %s146
      %p153 = scmp.eq.s32.totalorder %s31, 1
      %p154 = por %p152, %p153
      %p155 = scmp.ne.s32.totalorder %s146, %s147
      %p156 = scmp.eq.s32.totalorder %s31, 0
      %p157 = por %p155, %p156
      %p158 = scmp.ne.s32.totalorder %s146, %s147
      %p159 = scmp.eq.s32.totalorder %s32, 1
      %p160 = por %p158, %p159
      %p162 = scmp.ne.s32.totalorder %s147, %s161
      %p163 = scmp.eq.s32.totalorder %s32, 0
      %p164 = por %p162, %p163
      %s166 = sadd.s32 %s165, 1
      %p169 = scmp.eq.s32.totalorder %s26, 1
      %p170 = scmp.ne.s32.totalorder %s165, %s167
      %p171 = scmp.eq.s32.totalorder %s26, 0
      %p172 = por %p170, %p171
      %p173 = scmp.ne.s32.totalorder %s165, %s167
      %p174 = scmp.eq.s32.totalorder %s31, 1
      %p175 = por %p173, %p174
      %p176 = scmp.ne.s32.totalorder %s167, %s168
      %p177 = scmp.eq.s32.totalorder %s31, 0
      %p178 = por %p176, %p177
      %p179 = scmp.ne.s32.totalorder %s167, %s168
      %p180 = scmp.eq.s32.totalorder %s32, 1
      %p181 = por %p179, %p180
      %p183 = scmp.ne.s32.totalorder %s168, %s182
      %p184 = scmp.eq.s32.totalorder %s32, 0
      %p185 = por %p183, %p184
      %s187 = sadd.s32 %s186, 1
      %p190 = scmp.eq.s32.totalorder %s26, 1
      %p191 = scmp.ne.s32.totalorder %s186, %s188
      %p192 = scmp.eq.s32.totalorder %s26, 0
      %p193 = por %p191, %p192
      %p194 = scmp.ne.s32.totalorder %s186, %s188
      %p195 = scmp.eq.s32.totalorder %s31, 1
      %p196 = por %p194, %p195
      %p197 = scmp.ne.s32.totalorder %s188, %s189
      %p198 = scmp.eq.s32.totalorder %s31, 0
      %p199 = por %p197, %p198
      %p200 = scmp.ne.s32.totalorder %s188, %s189
      %p201 = scmp.eq.s32.totalorder %s32, 1
      %p202 = por %p200, %p201
      %p204 = scmp.ne.s32.totalorder %s189, %s203
      %p205 = scmp.eq.s32.totalorder %s32, 0
      %p206 = por %p204, %p205
      %s208 = sadd.s32 %s207, 1
      %p211 = scmp.eq.s32.totalorder %s26, 1
      %p212 = scmp.ne.s32.totalorder %s207, %s209
      %p213 = scmp.eq.s32.totalorder %s26, 0
      %p214 = por %p212, %p213
      %p215 = scmp.ne.s32.totalorder %s207, %s209
      %p216 = scmp.eq.s32.totalorder %s31, 1
      %p217 = por %p215, %p216
      %p218 = scmp.ne.s32.totalorder %s209, %s210
      %p219 = scmp.eq.s32.totalorder %s31, 0
      %p220 = por %p218, %p219
      %p221 = scmp.ne.s32.totalorder %s209, %s210
      %p222 = scmp.eq.s32.totalorder %s32, 1
      %p223 = por %p221, %p222
      %p225 = scmp.ne.s32.totalorder %s210, %s224
      %p226 = scmp.eq.s32.totalorder %s32, 0
      %p227 = por %p225, %p226
      %s229 = sadd.s32 %s228, 1
      %p232 = scmp.eq.s32.totalorder %s26, 1
      %p233 = scmp.ne.s32.totalorder %s228, %s230
      %p234 = scmp.eq.s32.totalorder %s26, 0
      %p235 = por %p233, %p234
      %p236 = scmp.ne.s32.totalorder %s228, %s230
      %p237 = scmp.eq.s32.totalorder %s31, 1
      %p238 = por %p236, %p237
      %p239 = scmp.ne.s32.totalorder %s230, %s231
      %p240 = scmp.eq.s32.totalorder %s31, 0
      %p241 = por %p239, %p240
      %p242 = scmp.ne.s32.totalorder %s230, %s231
      %p243 = scmp.eq.s32.totalorder %s32, 1
      %p244 = por %p242, %p243
      %p246 = scmp.ne.s32.totalorder %s231, %s245
      %p247 = scmp.eq.s32.totalorder %s32, 0
      %p248 = por %p246, %p247
      %s250 = sadd.s32 %s249, 1
      %p253 = scmp.eq.s32.totalorder %s26, 1
      %p254 = scmp.ne.s32.totalorder %s249, %s251
      %p255 = scmp.eq.s32.totalorder %s26, 0
      %p256 = por %p254, %p255
      %p257 = scmp.ne.s32.totalorder %s249, %s251
      %p258 = scmp.eq.s32.totalorder %s31, 1
      %p259 = por %p257, %p258
      %p260 = scmp.ne.s32.totalorder %s251, %s252
      %p261 = scmp.eq.s32.totalorder %s31, 0
      %p262 = por %p260, %p261
      %p263 = scmp.ne.s32.totalorder %s251, %s252
      %p264 = scmp.eq.s32.totalorder %s32, 1
      %p265 = por %p263, %p264
      %p267 = scmp.ne.s32.totalorder %s252, %s266
      %p268 = scmp.eq.s32.totalorder %s32, 0
      %p269 = por %p267, %p268
      %s271 = sadd.s32 %s270, 1
      %p274 = scmp.eq.s32.totalorder %s26, 1
      %p275 = scmp.ne.s32.totalorder %s270, %s272
      %p276 = scmp.eq.s32.totalorder %s26, 0
      %p277 = por %p275, %p276
      %p278 = scmp.ne.s32.totalorder %s270, %s272
      %p279 = scmp.eq.s32.totalorder %s31, 1
      %p280 = por %p278, %p279
      %p281 = scmp.ne.s32.totalorder %s272, %s273
      %p282 = scmp.eq.s32.totalorder %s31, 0
      %p283 = por %p281, %p282
      %p284 = scmp.ne.s32.totalorder %s272, %s273
      %p285 = scmp.eq.s32.totalorder %s32, 1
      %p286 = por %p284, %p285
      %p288 = scmp.ne.s32.totalorder %s273, %s287
      %p289 = scmp.eq.s32.totalorder %s32, 0
      %p290 = por %p288, %p289
      %s292 = sadd.s32 %s291, 1
      %p295 = scmp.eq.s32.totalorder %s26, 1
      %p296 = scmp.ne.s32.totalorder %s291, %s293
      %p297 = scmp.eq.s32.totalorder %s26, 0
      %p298 = por %p296, %p297
      %p299 = scmp.ne.s32.totalorder %s291, %s293
      %p300 = scmp.eq.s32.totalorder %s31, 1
      %p301 = por %p299, %p300
      %p302 = scmp.ne.s32.totalorder %s293, %s294
      %p303 = scmp.eq.s32.totalorder %s31, 0
      %p304 = por %p302, %p303
      %p305 = scmp.ne.s32.totalorder %s293, %s294
      %p306 = scmp.eq.s32.totalorder %s32, 1
      %p307 = por %p305, %p306
      %p309 = scmp.ne.s32.totalorder %s294, %s308
      %p310 = scmp.eq.s32.totalorder %s32, 0
      %p311 = por %p309, %p310
      %s313 = sadd.s32 %s312, 1
      %p316 = scmp.eq.s32.totalorder %s26, 1
      %p317 = scmp.ne.s32.totalorder %s312, %s314
      %p318 = scmp.eq.s32.totalorder %s26, 0
      %p319 = por %p317, %p318
      %p320 = scmp.ne.s32.totalorder %s312, %s314
      %p321 = scmp.eq.s32.totalorder %s31, 1
      %p322 = por %p320, %p321
      %p323 = scmp.ne.s32.totalorder %s314, %s315
      %p324 = scmp.eq.s32.totalorder %s31, 0
      %p325 = por %p323, %p324
      %p326 = scmp.ne.s32.totalorder %s314, %s315
      %p327 = scmp.eq.s32.totalorder %s32, 1
      %p328 = por %p326, %p327
      %p330 = scmp.ne.s32.totalorder %s315, %s329
      %p331 = scmp.eq.s32.totalorder %s32, 0
      %p332 = por %p330, %p331
      %s334 = sadd.s32 %s333, 1
      %p337 = scmp.eq.s32.totalorder %s26, 1
      %p338 = scmp.ne.s32.totalorder %s333, %s335
      %p339 = scmp.eq.s32.totalorder %s26, 0
      %p340 = por %p338, %p339
      %p341 = scmp.ne.s32.totalorder %s333, %s335
      %p342 = scmp.eq.s32.totalorder %s31, 1
      %p343 = por %p341, %p342
      %p344 = scmp.ne.s32.totalorder %s335, %s336
      %p345 = scmp.eq.s32.totalorder %s31, 0
      %p346 = por %p344, %p345
      %p347 = scmp.ne.s32.totalorder %s335, %s336
      %p348 = scmp.eq.s32.totalorder %s32, 1
      %p349 = por %p347, %p348
      %p351 = scmp.ne.s32.totalorder %s336, %s350
      %p352 = scmp.eq.s32.totalorder %s32, 0
      %p353 = por %p351, %p352
      %s354 = ssub.s32 %s26, %s33
      %p355 = scmp.eq.s32.totalorder %s354, 0
      %s357 = sadd.s32 %s356, 1
      %s358 = scalar_select %p355, %s356, %s357
      %p361 = pneg %p355
      %p362 = scmp.eq.s32.totalorder %s26, 1
      %p363 = por %p361, %p362
      %p364 = scmp.ne.s32.totalorder %s356, %s359
      %p365 = scmp.eq.s32.totalorder %s26, 0
      %p366 = por %p364, %p365
      %p367 = scmp.ne.s32.totalorder %s356, %s359
      %p368 = scmp.eq.s32.totalorder %s31, 1
      %p369 = por %p367, %p368
      %p370 = scmp.ne.s32.totalorder %s359, %s360
      %p371 = scmp.eq.s32.totalorder %s31, 0
      %p372 = por %p370, %p371
      %p373 = scmp.ne.s32.totalorder %s359, %s360
      %p374 = scmp.eq.s32.totalorder %s32, 1
      %p375 = por %p373, %p374
      %p377 = scmp.ne.s32.totalorder %s360, %s376
      %p378 = scmp.eq.s32.totalorder %s32, 0
      %p379 = por %p377, %p378
      %p380 = scmp.le.s32.totalorder 1, %s26
      %p381 = scmp.lt.s32.totalorder %s26, 3
      %p382 = pnand %p380, %p381
      %p383 = pneg %p382
      // Predicated region
      $region9: #{tpu_custom_call.1} parent=5 // pred_check
        _
      $region10: #{tpu_custom_call.1} parent=5 // pred_check_branch
        %385 = sbr.rel (%p382) target = $region12
      $region11: #{tpu_custom_call.1} parent=5 // pred_region
        %s386 = ssub.s32 %s26, 1
        // Predicated region
        $region13: #{tpu_custom_call.1} parent=11 // pred_check
          %p387 = pneg %p73
        $region14: #{tpu_custom_call.1} parent=11 // pred_check_branch
          %389 = sbr.rel (%p387) target = $region16
        $region15: #{tpu_custom_call.1} parent=11 // pred_region
          _
        $region16: #{tpu_custom_call.1} parent=11 // pred_fallthru
          _
        // Predicated region
        $region17: #{tpu_custom_call.1} parent=11 // pred_check
          %p390 = pneg %p94
        $region18: #{tpu_custom_call.1} parent=11 // pred_check_branch
          %392 = sbr.rel (%p390) target = $region20
        $region19: #{tpu_custom_call.1} parent=11 // pred_region
          _
        $region20: #{tpu_custom_call.1} parent=11 // pred_fallthru
          _
        // Predicated region
        $region21: #{tpu_custom_call.1} parent=11 // pred_check
          %p393 = pneg %p115
        $region22: #{tpu_custom_call.1} parent=11 // pred_check_branch
          %395 = sbr.rel (%p393) target = $region24
        $region23: #{tpu_custom_call.1} parent=11 // pred_region
          _
        $region24: #{tpu_custom_call.1} parent=11 // pred_fallthru
          _
        // Predicated region
        $region25: #{tpu_custom_call.1} parent=11 // pred_check
          %p396 = pneg %p136
        $region26: #{tpu_custom_call.1} parent=11 // pred_check_branch
          %398 = sbr.rel (%p396) target = $region28
        $region27: #{tpu_custom_call.1} parent=11 // pred_region
          _
        $region28: #{tpu_custom_call.1} parent=11 // pred_fallthru
          _
        // Predicated region
        $region29: #{tpu_custom_call.1} parent=11 // pred_check
          %p399 = pneg %p157
        $region30: #{tpu_custom_call.1} parent=11 // pred_check_branch
          %401 = sbr.rel (%p399) target = $region32
        $region31: #{tpu_custom_call.1} parent=11 // pred_region
          %s403 = ssub.s32 4096, 4096
          %404 = vsyncadd [#allocation3], %s403
          %s405 = sshll.u32 [#allocation2], 4
          %s406 = int_to_ptr.vmem [resolvable:$true] %s405
          %411 = dma.hbm_to_vmem [thread:$0]  %s5, 4096, %s406, [#allocation3], 256, 256, 16
        $region32: #{tpu_custom_call.1} parent=11 // pred_fallthru
          _
        // Predicated region
        $region33: #{tpu_custom_call.1} parent=11 // pred_check
          %p412 = pneg %p178
        $region34: #{tpu_custom_call.1} parent=11 // pred_check_branch
          %414 = sbr.rel (%p412) target = $region36
        $region35: #{tpu_custom_call.1} parent=11 // pred_region
          _
        $region36: #{tpu_custom_call.1} parent=11 // pred_fallthru
          _
        // Predicated region
        $region37: #{tpu_custom_call.1} parent=11 // pred_check
          %p415 = pneg %p199
        $region38: #{tpu_custom_call.1} parent=11 // pred_check_branch
          %417 = sbr.rel (%p415) target = $region40
        $region39: #{tpu_custom_call.1} parent=11 // pred_region
          _
        $region40: #{tpu_custom_call.1} parent=11 // pred_fallthru
          _
        // Predicated region
        $region41: #{tpu_custom_call.1} parent=11 // pred_check
          %p418 = pneg %p220
        $region42: #{tpu_custom_call.1} parent=11 // pred_check_branch
          %420 = sbr.rel (%p418) target = $region44
        $region43: #{tpu_custom_call.1} parent=11 // pred_region
          _
        $region44: #{tpu_custom_call.1} parent=11 // pred_fallthru
          _
        // Predicated region
        $region45: #{tpu_custom_call.1} parent=11 // pred_check
          %p421 = pneg %p241
        $region46: #{tpu_custom_call.1} parent=11 // pred_check_branch
          %423 = sbr.rel (%p421) target = $region48
        $region47: #{tpu_custom_call.1} parent=11 // pred_region
          %s425 = ssub.s32 8192, 8192
          %426 = vsyncadd [#allocation6], %s425
          %s427 = sshll.u32 [#allocation5], 4
          %s428 = int_to_ptr.vmem [resolvable:$true] %s427
          %433 = dma.hbm_to_vmem [thread:$0]  %s9, 8192, %s428, [#allocation6], 256, 256, 16
        $region48: #{tpu_custom_call.1} parent=11 // pred_fallthru
          _
        // Predicated region
        $region49: #{tpu_custom_call.1} parent=11 // pred_check
          %p434 = pneg %p262
        $region50: #{tpu_custom_call.1} parent=11 // pred_check_branch
          %436 = sbr.rel (%p434) target = $region52
        $region51: #{tpu_custom_call.1} parent=11 // pred_region
          _
        $region52: #{tpu_custom_call.1} parent=11 // pred_fallthru
          _
        // Predicated region
        $region53: #{tpu_custom_call.1} parent=11 // pred_check
          %p437 = pneg %p283
        $region54: #{tpu_custom_call.1} parent=11 // pred_check_branch
          %439 = sbr.rel (%p437) target = $region56
        $region55: #{tpu_custom_call.1} parent=11 // pred_region
          _
        $region56: #{tpu_custom_call.1} parent=11 // pred_fallthru
          _
        // Predicated region
        $region57: #{tpu_custom_call.1} parent=11 // pred_check
          %p440 = pneg %p304
        $region58: #{tpu_custom_call.1} parent=11 // pred_check_branch
          %442 = sbr.rel (%p440) target = $region60
        $region59: #{tpu_custom_call.1} parent=11 // pred_region
          _
        $region60: #{tpu_custom_call.1} parent=11 // pred_fallthru
          _
        // Predicated region
        $region61: #{tpu_custom_call.1} parent=11 // pred_check
          %p443 = pneg %p325
        $region62: #{tpu_custom_call.1} parent=11 // pred_check_branch
          %445 = sbr.rel (%p443) target = $region64
        $region63: #{tpu_custom_call.1} parent=11 // pred_region
          %s447 = ssub.s32 4096, 4096
          %448 = vsyncadd [#allocation6], %s447
          %s449 = sshll.u32 [#allocation7], 4
          %s450 = int_to_ptr.vmem [resolvable:$true] %s449
          %455 = dma.hbm_to_vmem [thread:$0]  %s13, 4096, %s450, [#allocation6], 256, 256, 16
        $region64: #{tpu_custom_call.1} parent=11 // pred_fallthru
          _
        // Predicated region
        $region65: #{tpu_custom_call.1} parent=11 // pred_check
          %p456 = pneg %p346
        $region66: #{tpu_custom_call.1} parent=11 // pred_check_branch
          %458 = sbr.rel (%p456) target = $region68
        $region67: #{tpu_custom_call.1} parent=11 // pred_region
          _
        $region68: #{tpu_custom_call.1} parent=11 // pred_fallthru
          _
      $region12: #{tpu_custom_call.1} parent=5 // pred_fallthru
        _
      %p459 = scmp.lt.s32.totalorder %s26, 2
      // Predicated region
      $region69: #{tpu_custom_call.1} parent=5 // pred_check
        %p460 = pneg %p459
      $region70: #{tpu_custom_call.1} parent=5 // pred_check_branch
        %462 = sbr.rel (%p460) target = $region72
      $region71: #{tpu_custom_call.1} parent=5 // pred_region
        // Predicated region
        $region73: #{tpu_custom_call.1} parent=71 // pred_check
          %p463 = pneg %p46
        $region74: #{tpu_custom_call.1} parent=71 // pred_check_branch
          %465 = sbr.rel (%p463) target = $region76
        $region75: #{tpu_custom_call.1} parent=71 // pred_region
          %p466 = scmp.lt.s32.totalorder %s26, 1
          %s467 = scalar_select %p466, %s26, 1
          %s468 = smul.addr %s467, 8
          %s469 = scalar_lea.vmem %s0, %s468
        $region76: #{tpu_custom_call.1} parent=71 // pred_fallthru
          _
      $region72: #{tpu_custom_call.1} parent=5 // pred_fallthru
        _
      %p470 = scmp.le.s32.totalorder 1, %s26
      %p471 = scmp.lt.s32.totalorder %s26, 3
      %p472 = pnand %p470, %p471
      %p473 = pneg %p472
      // Predicated region
      $region77: #{tpu_custom_call.1} parent=5 // pred_check
        _
      $region78: #{tpu_custom_call.1} parent=5 // pred_check_branch
        %475 = sbr.rel (%p472) target = $region80
      $region79: #{tpu_custom_call.1} parent=5 // pred_region
        %s476 = ssub.s32 %s26, 1
        // Predicated region
        $region81: #{tpu_custom_call.1} parent=79 // pred_check
          %p477 = pneg %p157
        $region82: #{tpu_custom_call.1} parent=79 // pred_check_branch
          %479 = sbr.rel (%p477) target = $region84
        $region83: #{tpu_custom_call.1} parent=79 // pred_region
          %480 = dma.done [#allocation3], 4096
        $region84: #{tpu_custom_call.1} parent=79 // pred_fallthru
          _
        // Predicated region
        $region85: #{tpu_custom_call.1} parent=79 // pred_check
          %p481 = pneg %p241
        $region86: #{tpu_custom_call.1} parent=79 // pred_check_branch
          %483 = sbr.rel (%p481) target = $region88
        $region87: #{tpu_custom_call.1} parent=79 // pred_region
          %484 = dma.done [#allocation6], 8192
        $region88: #{tpu_custom_call.1} parent=79 // pred_fallthru
          _
        // Predicated region
        $region89: #{tpu_custom_call.1} parent=79 // pred_check
          %p485 = pneg %p325
        $region90: #{tpu_custom_call.1} parent=79 // pred_check_branch
          %487 = sbr.rel (%p485) target = $region92
        $region91: #{tpu_custom_call.1} parent=79 // pred_region
          %488 = dma.done [#allocation6], 4096
        $region92: #{tpu_custom_call.1} parent=79 // pred_fallthru
          _
        %p489 = scmp.lt.s32.totalorder %s31, 1
        %s490 = scalar_select %p489, %s31, 1
        %s491 = smul.addr %s490, 8
        %s492 = scalar_lea.vmem %s0, %s491
        %p493 = pneg %p52
        %p494 = pneg %p49
        %p495 = pneg %p73
        %p496 = pneg %p70
        %p497 = pneg %p94
        %p498 = pneg %p91
        %p499 = pneg %p115
        %p500 = pneg %p112
        %p501 = pneg %p136
        %p502 = pneg %p133
        %p503 = pneg %p157
        %p504 = pneg %p154
        %p505 = pneg %p178
        %p506 = pneg %p175
        %p507 = pneg %p199
        %p508 = pneg %p196
        %p509 = pneg %p220
        %p510 = pneg %p217
        %p511 = pneg %p241
        %p512 = pneg %p238
        %p513 = pneg %p262
        %p514 = pneg %p259
        %p515 = pneg %p283
        %p516 = pneg %p280
        %p517 = pneg %p304
        %p518 = pneg %p301
        %p519 = pneg %p325
        %p520 = pneg %p322
        %p521 = pneg %p346
        %p522 = pneg %p343
        %p523 = pneg %p372
        %p524 = pneg %p369
        %s525 = sand.u32 %s359, 1
        %s526 = scalar_lea.sflag [#allocation4], %s525
        %s527 = sand.u32 %s359, 1
        %s528 = smul.addr %s527, 16
        %s529 = scalar_lea.vmem [#allocation8], %s528
        %p530 = scmp.lt.s32.totalorder %s31, 1
        %s531 = scalar_select %p530, %s31, 1
        %s532 = smul.addr %s531, 8
        %s533 = scalar_lea.vmem %s0, %s532
        %v534 = vld [vmem:[%s533] sm:$0xff]
        %v535 = vld [vmem:[%s1] sm:$0xff]
        %v536 = vld [vmem:[%s1 + $0x8] sm:$0xff]
        %v537 = vld [vmem:[%s1 + $0x10] sm:$0xff]
        %v538 = vld [vmem:[%s1 + $0x18] sm:$0xff]
        %v539 = vld [vmem:[%s1 + $0x20] sm:$0xff]
        %v540 = vld [vmem:[%s1 + $0x28] sm:$0xff]
        %v541 = vld [vmem:[%s1 + $0x30] sm:$0xff]
        %v542 = vld [vmem:[%s1 + $0x38] sm:$0xff]
        %v543 = vld [vmem:[%s1 + $0x40] sm:$0xff]
        %v544 = vld [vmem:[%s1 + $0x48] sm:$0xff]
        %v545 = vld [vmem:[%s1 + $0x50] sm:$0xff]
        %v546 = vld [vmem:[%s1 + $0x58] sm:$0xff]
        %v547 = vld [vmem:[%s1 + $0x60] sm:$0xff]
        %v548 = vld [vmem:[%s1 + $0x68] sm:$0xff]
        %v549 = vld [vmem:[%s1 + $0x70] sm:$0xff]
        %v550 = vld [vmem:[%s1 + $0x78] sm:$0xff]
        %v551 = vld [vmem:[%s2] sm:$0x1]
        %v553 = vlaneseq
        %v554 = vshrl.u32 %v553, 7
        %v555 = vsub.s32 0, %v554
        %v556 = vrot.slane %v551, %v555
        %558 = vmatprep.subr.mxu0 0.0
        %v559 = vand.u32 %v550, 4294901760
        %560 = vmatpush1.msra.mxu0 %v559
        %561 = vmatprep.subr.mxu0 0.0
        %v562 = vand.u32 %v549, 4294901760
        %563 = vmatpush1.msra.mxu0 %v562
        %564 = vmatprep.subr.mxu0 0.0
        %v565 = vand.u32 %v548, 4294901760
        %566 = vmatpush1.msra.mxu0 %v565
        %567 = vmatprep.subr.mxu0 0.0
        %v568 = vand.u32 %v547, 4294901760
        %569 = vmatpush1.msra.mxu0 %v568
        %570 = vmatprep.subr.mxu0 0.0
        %v571 = vand.u32 %v546, 4294901760
        %572 = vmatpush1.msra.mxu0 %v571
        %573 = vmatprep.subr.mxu0 0.0
        %v574 = vand.u32 %v545, 4294901760
        %575 = vmatpush1.msra.mxu0 %v574
        %576 = vmatprep.subr.mxu0 0.0
        %v577 = vand.u32 %v544, 4294901760
        %578 = vmatpush1.msra.mxu0 %v577
        %579 = vmatprep.subr.mxu0 0.0
        %v580 = vand.u32 %v543, 4294901760
        %581 = vmatpush1.msra.mxu0 %v580
        %582 = vmatprep.subr.mxu0 0.0
        %v583 = vand.u32 %v542, 4294901760
        %584 = vmatpush1.msra.mxu0 %v583
        %585 = vmatprep.subr.mxu0 0.0
        %v586 = vand.u32 %v541, 4294901760
        %587 = vmatpush1.msra.mxu0 %v586
        %588 = vmatprep.subr.mxu0 0.0
        %v589 = vand.u32 %v540, 4294901760
        %590 = vmatpush1.msra.mxu0 %v589
        %591 = vmatprep.subr.mxu0 0.0
        %v592 = vand.u32 %v539, 4294901760
        %593 = vmatpush1.msra.mxu0 %v592
        %594 = vmatprep.subr.mxu0 0.0
        %v595 = vand.u32 %v538, 4294901760
        %596 = vmatpush1.msra.mxu0 %v595
        %597 = vmatprep.subr.mxu0 0.0
        %v598 = vand.u32 %v537, 4294901760
        %599 = vmatpush1.msra.mxu0 %v598
        %600 = vmatprep.subr.mxu0 0.0
        %v601 = vand.u32 %v536, 4294901760
        %602 = vmatpush1.msra.mxu0 %v601
        %603 = vmatprep.subr.mxu0 0.0
        %v604 = vand.u32 %v535, 4294901760
        %605 = vmatpush1.msra.mxu0 %v604
        %606 = vmatprep.subr.mxu0 0.0
        %607 = vmatpush2.msra.mxu0 0.0
        %608 = vmatprep.subr.mxu0 0.0
        %609 = vmatpush2.msra.mxu0 0.0
        %610 = vmatprep.subr.mxu0 0.0
        %611 = vmatpush2.msra.mxu0 0.0
        %612 = vmatprep.subr.mxu0 0.0
        %613 = vmatpush2.msra.mxu0 0.0
        %614 = vmatprep.subr.mxu0 0.0
        %615 = vmatpush2.msra.mxu0 0.0
        %616 = vmatprep.subr.mxu0 0.0
        %617 = vmatpush2.msra.mxu0 0.0
        %618 = vmatprep.subr.mxu0 0.0
        %619 = vmatpush2.msra.mxu0 0.0
        %620 = vmatprep.subr.mxu0 0.0
        %621 = vmatpush2.msra.mxu0 0.0
        %622 = vmatprep.subr.mxu0 0.0
        %623 = vmatpush2.msra.mxu0 0.0
        %624 = vmatprep.subr.mxu0 0.0
        %625 = vmatpush2.msra.mxu0 0.0
        %626 = vmatprep.subr.mxu0 0.0
        %627 = vmatpush2.msra.mxu0 0.0
        %628 = vmatprep.subr.mxu0 0.0
        %629 = vmatpush2.msra.mxu0 0.0
        %630 = vmatprep.subr.mxu0 0.0
        %631 = vmatpush2.msra.mxu0 0.0
        %632 = vmatprep.subr.mxu0 0.0
        %633 = vmatpush2.msra.mxu0 0.0
        %634 = vmatprep.subr.mxu0 0.0
        %635 = vmatpush2.msra.mxu0 0.0
        %636 = vmatprep.subr.mxu0 0.0
        %637 = vmatpush2.msra.mxu0 0.0
        %638 = vmatprep.mubr.f32.mxu0 0.0
        %v639 = vand.u32 %v534, 4294901760
        %v640 = vsub.f32 %v534, %v639
        %v641 = vand.u32 %v640, 4294901760
        %v642 = vsub.f32 %v640, %v641
        %v643 = vand.u32 %v642, 4294901760
        %644 = vmatmul.mubr.f32.gmra.mxu0 %v643
        %v645 = vpop.f32.mrf.mxu0
        %v646 = vadd.f32 %v556, %v645
        %v647 = vpop.f32.mrf.mxu0
        %648 = vdwg.mxu0
        %649 = vmatprep.subr.mxu0 0.0
        %v650 = vand.u32 %v550, 4294901760
        %v651 = vsub.f32 %v550, %v650
        %v652 = vand.u32 %v651, 4294901760
        %v653 = vsub.f32 %v651, %v652
        %v654 = vand.u32 %v653, 4294901760
        %655 = vmatpush1.msra.mxu0 %v654
        %656 = vmatprep.subr.mxu0 0.0
        %v657 = vand.u32 %v549, 4294901760
        %v658 = vsub.f32 %v549, %v657
        %v659 = vand.u32 %v658, 4294901760
        %v660 = vsub.f32 %v658, %v659
        %v661 = vand.u32 %v660, 4294901760
        %662 = vmatpush1.msra.mxu0 %v661
        %663 = vmatprep.subr.mxu0 0.0
        %v664 = vand.u32 %v548, 4294901760
        %v665 = vsub.f32 %v548, %v664
        %v666 = vand.u32 %v665, 4294901760
        %v667 = vsub.f32 %v665, %v666
        %v668 = vand.u32 %v667, 4294901760
        %669 = vmatpush1.msra.mxu0 %v668
        %670 = vmatprep.subr.mxu0 0.0
        %v671 = vand.u32 %v547, 4294901760
        %v672 = vsub.f32 %v547, %v671
        %v673 = vand.u32 %v672, 4294901760
        %v674 = vsub.f32 %v672, %v673
        %v675 = vand.u32 %v674, 4294901760
        %676 = vmatpush1.msra.mxu0 %v675
        %677 = vmatprep.subr.mxu0 0.0
        %v678 = vand.u32 %v546, 4294901760
        %v679 = vsub.f32 %v546, %v678
        %v680 = vand.u32 %v679, 4294901760
        %v681 = vsub.f32 %v679, %v680
        %v682 = vand.u32 %v681, 4294901760
        %683 = vmatpush1.msra.mxu0 %v682
        %684 = vmatprep.subr.mxu0 0.0
        %v685 = vand.u32 %v545, 4294901760
        %v686 = vsub.f32 %v545, %v685
        %v687 = vand.u32 %v686, 4294901760
        %v688 = vsub.f32 %v686, %v687
        %v689 = vand.u32 %v688, 4294901760
        %690 = vmatpush1.msra.mxu0 %v689
        %691 = vmatprep.subr.mxu0 0.0
        %v692 = vand.u32 %v544, 4294901760
        %v693 = vsub.f32 %v544, %v692
        %v694 = vand.u32 %v693, 4294901760
        %v695 = vsub.f32 %v693, %v694
        %v696 = vand.u32 %v695, 4294901760
        %697 = vmatpush1.msra.mxu0 %v696
        %698 = vmatprep.subr.mxu0 0.0
        %v699 = vand.u32 %v543, 4294901760
        %v700 = vsub.f32 %v543, %v699
        %v701 = vand.u32 %v700, 4294901760
        %v702 = vsub.f32 %v700, %v701
        %v703 = vand.u32 %v702, 4294901760
        %704 = vmatpush1.msra.mxu0 %v703
        %705 = vmatprep.subr.mxu0 0.0
        %v706 = vand.u32 %v542, 4294901760
        %v707 = vsub.f32 %v542, %v706
        %v708 = vand.u32 %v707, 4294901760
        %v709 = vsub.f32 %v707, %v708
        %v710 = vand.u32 %v709, 4294901760
        %711 = vmatpush1.msra.mxu0 %v710
        %712 = vmatprep.subr.mxu0 0.0
        %v713 = vand.u32 %v541, 4294901760
        %v714 = vsub.f32 %v541, %v713
        %v715 = vand.u32 %v714, 4294901760
        %v716 = vsub.f32 %v714, %v715
        %v717 = vand.u32 %v716, 4294901760
        %718 = vmatpush1.msra.mxu0 %v717
        %719 = vmatprep.subr.mxu0 0.0
        %v720 = vand.u32 %v540, 4294901760
        %v721 = vsub.f32 %v540, %v720
        %v722 = vand.u32 %v721, 4294901760
        %v723 = vsub.f32 %v721, %v722
        %v724 = vand.u32 %v723, 4294901760
        %725 = vmatpush1.msra.mxu0 %v724
        %726 = vmatprep.subr.mxu0 0.0
        %v727 = vand.u32 %v539, 4294901760
        %v728 = vsub.f32 %v539, %v727
        %v729 = vand.u32 %v728, 4294901760
        %v730 = vsub.f32 %v728, %v729
        %v731 = vand.u32 %v730, 4294901760
        %732 = vmatpush1.msra.mxu0 %v731
        %733 = vmatprep.subr.mxu0 0.0
        %v734 = vand.u32 %v538, 4294901760
        %v735 = vsub.f32 %v538, %v734
        %v736 = vand.u32 %v735, 4294901760
        %v737 = vsub.f32 %v735, %v736
        %v738 = vand.u32 %v737, 4294901760
        %739 = vmatpush1.msra.mxu0 %v738
        %740 = vmatprep.subr.mxu0 0.0
        %v741 = vand.u32 %v537, 4294901760
        %v742 = vsub.f32 %v537, %v741
        %v743 = vand.u32 %v742, 4294901760
        %v744 = vsub.f32 %v742, %v743
        %v745 = vand.u32 %v744, 4294901760
        %746 = vmatpush1.msra.mxu0 %v745
        %747 = vmatprep.subr.mxu0 0.0
        %v748 = vand.u32 %v536, 4294901760
        %v749 = vsub.f32 %v536, %v748
        %v750 = vand.u32 %v749, 4294901760
        %v751 = vsub.f32 %v749, %v750
        %v752 = vand.u32 %v751, 4294901760
        %753 = vmatpush1.msra.mxu0 %v752
        %754 = vmatprep.subr.mxu0 0.0
        %v755 = vand.u32 %v535, 4294901760
        %v756 = vsub.f32 %v535, %v755
        %v757 = vand.u32 %v756, 4294901760
        %v758 = vsub.f32 %v756, %v757
        %v759 = vand.u32 %v758, 4294901760
        %760 = vmatpush1.msra.mxu0 %v759
        %761 = vmatprep.subr.mxu0 0.0
        %762 = vmatpush2.msra.mxu0 0.0
        %763 = vmatprep.subr.mxu0 0.0
        %764 = vmatpush2.msra.mxu0 0.0
        %765 = vmatprep.subr.mxu0 0.0
        %766 = vmatpush2.msra.mxu0 0.0
        %767 = vmatprep.subr.mxu0 0.0
        %768 = vmatpush2.msra.mxu0 0.0
        %769 = vmatprep.subr.mxu0 0.0
        %770 = vmatpush2.msra.mxu0 0.0
        %771 = vmatprep.subr.mxu0 0.0
        %772 = vmatpush2.msra.mxu0 0.0
        %773 = vmatprep.subr.mxu0 0.0
        %774 = vmatpush2.msra.mxu0 0.0
        %775 = vmatprep.subr.mxu0 0.0
        %776 = vmatpush2.msra.mxu0 0.0
        %777 = vmatprep.subr.mxu0 0.0
        %778 = vmatpush2.msra.mxu0 0.0
        %779 = vmatprep.subr.mxu0 0.0
        %780 = vmatpush2.msra.mxu0 0.0
        %781 = vmatprep.subr.mxu0 0.0
        %782 = vmatpush2.msra.mxu0 0.0
        %783 = vmatprep.subr.mxu0 0.0
        %784 = vmatpush2.msra.mxu0 0.0
        %785 = vmatprep.subr.mxu0 0.0
        %786 = vmatpush2.msra.mxu0 0.0
        %787 = vmatprep.subr.mxu0 0.0
        %788 = vmatpush2.msra.mxu0 0.0
        %789 = vmatprep.subr.mxu0 0.0
        %790 = vmatpush2.msra.mxu0 0.0
        %791 = vmatprep.subr.mxu0 0.0
        %792 = vmatpush2.msra.mxu0 0.0
        %793 = vmatprep.mubr.f32.mxu0 0.0
        %v794 = vand.u32 %v534, 4294901760
        %795 = vmatmul.mubr.f32.gmra.mxu0 %v794
        %v796 = vpop.f32.mrf.mxu0
        %v797 = vadd.f32 %v646, %v796
        %v798 = vpop.f32.mrf.mxu0
        %799 = vdwg.mxu0
        %800 = vmatprep.subr.mxu0 0.0
        %v801 = vand.u32 %v550, 4294901760
        %v802 = vsub.f32 %v550, %v801
        %803 = vmatpush1.msra.mxu0 %v802
        %804 = vmatprep.subr.mxu0 0.0
        %v805 = vand.u32 %v549, 4294901760
        %v806 = vsub.f32 %v549, %v805
        %807 = vmatpush1.msra.mxu0 %v806
        %808 = vmatprep.subr.mxu0 0.0
        %v809 = vand.u32 %v548, 4294901760
        %v810 = vsub.f32 %v548, %v809
        %811 = vmatpush1.msra.mxu0 %v810
        %812 = vmatprep.subr.mxu0 0.0
        %v813 = vand.u32 %v547, 4294901760
        %v814 = vsub.f32 %v547, %v813
        %815 = vmatpush1.msra.mxu0 %v814
        %816 = vmatprep.subr.mxu0 0.0
        %v817 = vand.u32 %v546, 4294901760
        %v818 = vsub.f32 %v546, %v817
        %819 = vmatpush1.msra.mxu0 %v818
        %820 = vmatprep.subr.mxu0 0.0
        %v821 = vand.u32 %v545, 4294901760
        %v822 = vsub.f32 %v545, %v821
        %823 = vmatpush1.msra.mxu0 %v822
        %824 = vmatprep.subr.mxu0 0.0
        %v825 = vand.u32 %v544, 4294901760
        %v826 = vsub.f32 %v544, %v825
        %827 = vmatpush1.msra.mxu0 %v826
        %828 = vmatprep.subr.mxu0 0.0
        %v829 = vand.u32 %v543, 4294901760
        %v830 = vsub.f32 %v543, %v829
        %831 = vmatpush1.msra.mxu0 %v830
        %832 = vmatprep.subr.mxu0 0.0
        %v833 = vand.u32 %v542, 4294901760
        %v834 = vsub.f32 %v542, %v833
        %835 = vmatpush1.msra.mxu0 %v834
        %836 = vmatprep.subr.mxu0 0.0
        %v837 = vand.u32 %v541, 4294901760
        %v838 = vsub.f32 %v541, %v837
        %839 = vmatpush1.msra.mxu0 %v838
        %840 = vmatprep.subr.mxu0 0.0
        %v841 = vand.u32 %v540, 4294901760
        %v842 = vsub.f32 %v540, %v841
        %843 = vmatpush1.msra.mxu0 %v842
        %844 = vmatprep.subr.mxu0 0.0
        %v845 = vand.u32 %v539, 4294901760
        %v846 = vsub.f32 %v539, %v845
        %847 = vmatpush1.msra.mxu0 %v846
        %848 = vmatprep.subr.mxu0 0.0
        %v849 = vand.u32 %v538, 4294901760
        %v850 = vsub.f32 %v538, %v849
        %851 = vmatpush1.msra.mxu0 %v850
        %852 = vmatprep.subr.mxu0 0.0
        %v853 = vand.u32 %v537, 4294901760
        %v854 = vsub.f32 %v537, %v853
        %855 = vmatpush1.msra.mxu0 %v854
        %856 = vmatprep.subr.mxu0 0.0
        %v857 = vand.u32 %v536, 4294901760
        %v858 = vsub.f32 %v536, %v857
        %859 = vmatpush1.msra.mxu0 %v858
        %860 = vmatprep.subr.mxu0 0.0
        %v861 = vand.u32 %v535, 4294901760
        %v862 = vsub.f32 %v535, %v861
        %863 = vmatpush1.msra.mxu0 %v862
        %864 = vmatprep.subr.mxu0 0.0
        %865 = vmatpush2.msra.mxu0 0.0
        %866 = vmatprep.subr.mxu0 0.0
        %867 = vmatpush2.msra.mxu0 0.0
        %868 = vmatprep.subr.mxu0 0.0
        %869 = vmatpush2.msra.mxu0 0.0
        %870 = vmatprep.subr.mxu0 0.0
        %871 = vmatpush2.msra.mxu0 0.0
        %872 = vmatprep.subr.mxu0 0.0
        %873 = vmatpush2.msra.mxu0 0.0
        %874 = vmatprep.subr.mxu0 0.0
        %875 = vmatpush2.msra.mxu0 0.0
        %876 = vmatprep.subr.mxu0 0.0
        %877 = vmatpush2.msra.mxu0 0.0
        %878 = vmatprep.subr.mxu0 0.0
        %879 = vmatpush2.msra.mxu0 0.0
        %880 = vmatprep.subr.mxu0 0.0
        %881 = vmatpush2.msra.mxu0 0.0
        %882 = vmatprep.subr.mxu0 0.0
        %883 = vmatpush2.msra.mxu0 0.0
        %884 = vmatprep.subr.mxu0 0.0
        %885 = vmatpush2.msra.mxu0 0.0
        %886 = vmatprep.subr.mxu0 0.0
        %887 = vmatpush2.msra.mxu0 0.0
        %888 = vmatprep.subr.mxu0 0.0
        %889 = vmatpush2.msra.mxu0 0.0
        %890 = vmatprep.subr.mxu0 0.0
        %891 = vmatpush2.msra.mxu0 0.0
        %892 = vmatprep.subr.mxu0 0.0
        %893 = vmatpush2.msra.mxu0 0.0
        %894 = vmatprep.subr.mxu0 0.0
        %895 = vmatpush2.msra.mxu0 0.0
        %896 = vmatprep.mubr.f32.mxu0 0.0
        %v897 = vand.u32 %v534, 4294901760
        %v898 = vsub.f32 %v534, %v897
        %899 = vmatmul.mubr.f32.gmra.mxu0 %v898
        %v900 = vpop.f32.mrf.mxu0
        %v901 = vadd.f32 %v797, %v900
        %v902 = vpop.f32.mrf.mxu0
        %903 = vdwg.mxu0
        %904 = vmatprep.subr.mxu0 0.0
        %v905 = vand.u32 %v550, 4294901760
        %906 = vmatpush1.msra.mxu0 %v905
        %907 = vmatprep.subr.mxu0 0.0
        %v908 = vand.u32 %v549, 4294901760
        %909 = vmatpush1.msra.mxu0 %v908
        %910 = vmatprep.subr.mxu0 0.0
        %v911 = vand.u32 %v548, 4294901760
        %912 = vmatpush1.msra.mxu0 %v911
        %913 = vmatprep.subr.mxu0 0.0
        %v914 = vand.u32 %v547, 4294901760
        %915 = vmatpush1.msra.mxu0 %v914
        %916 = vmatprep.subr.mxu0 0.0
        %v917 = vand.u32 %v546, 4294901760
        %918 = vmatpush1.msra.mxu0 %v917
        %919 = vmatprep.subr.mxu0 0.0
        %v920 = vand.u32 %v545, 4294901760
        %921 = vmatpush1.msra.mxu0 %v920
        %922 = vmatprep.subr.mxu0 0.0
        %v923 = vand.u32 %v544, 4294901760
        %924 = vmatpush1.msra.mxu0 %v923
        %925 = vmatprep.subr.mxu0 0.0
        %v926 = vand.u32 %v543, 4294901760
        %927 = vmatpush1.msra.mxu0 %v926
        %928 = vmatprep.subr.mxu0 0.0
        %v929 = vand.u32 %v542, 4294901760
        %930 = vmatpush1.msra.mxu0 %v929
        %931 = vmatprep.subr.mxu0 0.0
        %v932 = vand.u32 %v541, 4294901760
        %933 = vmatpush1.msra.mxu0 %v932
        %934 = vmatprep.subr.mxu0 0.0
        %v935 = vand.u32 %v540, 4294901760
        %936 = vmatpush1.msra.mxu0 %v935
        %937 = vmatprep.subr.mxu0 0.0
        %v938 = vand.u32 %v539, 4294901760
        %939 = vmatpush1.msra.mxu0 %v938
        %940 = vmatprep.subr.mxu0 0.0
        %v941 = vand.u32 %v538, 4294901760
        %942 = vmatpush1.msra.mxu0 %v941
        %943 = vmatprep.subr.mxu0 0.0
        %v944 = vand.u32 %v537, 4294901760
        %945 = vmatpush1.msra.mxu0 %v944
        %946 = vmatprep.subr.mxu0 0.0
        %v947 = vand.u32 %v536, 4294901760
        %948 = vmatpush1.msra.mxu0 %v947
        %949 = vmatprep.subr.mxu0 0.0
        %v950 = vand.u32 %v535, 4294901760
        %951 = vmatpush1.msra.mxu0 %v950
        %952 = vmatprep.subr.mxu0 0.0
        %953 = vmatpush2.msra.mxu0 0.0
        %954 = vmatprep.subr.mxu0 0.0
        %955 = vmatpush2.msra.mxu0 0.0
        %956 = vmatprep.subr.mxu0 0.0
        %957 = vmatpush2.msra.mxu0 0.0
        %958 = vmatprep.subr.mxu0 0.0
        %959 = vmatpush2.msra.mxu0 0.0
        %960 = vmatprep.subr.mxu0 0.0
        %961 = vmatpush2.msra.mxu0 0.0
        %962 = vmatprep.subr.mxu0 0.0
        %963 = vmatpush2.msra.mxu0 0.0
        %964 = vmatprep.subr.mxu0 0.0
        %965 = vmatpush2.msra.mxu0 0.0
        %966 = vmatprep.subr.mxu0 0.0
        %967 = vmatpush2.msra.mxu0 0.0
        %968 = vmatprep.subr.mxu0 0.0
        %969 = vmatpush2.msra.mxu0 0.0
        %970 = vmatprep.subr.mxu0 0.0
        %971 = vmatpush2.msra.mxu0 0.0
        %972 = vmatprep.subr.mxu0 0.0
        %973 = vmatpush2.msra.mxu0 0.0
        %974 = vmatprep.subr.mxu0 0.0
        %975 = vmatpush2.msra.mxu0 0.0
        %976 = vmatprep.subr.mxu0 0.0
        %977 = vmatpush2.msra.mxu0 0.0
        %978 = vmatprep.subr.mxu0 0.0
        %979 = vmatpush2.msra.mxu0 0.0
        %980 = vmatprep.subr.mxu0 0.0
        %981 = vmatpush2.msra.mxu0 0.0
        %982 = vmatprep.subr.mxu0 0.0
        %983 = vmatpush2.msra.mxu0 0.0
        %984 = vmatprep.mubr.f32.mxu0 0.0
        %v985 = vand.u32 %v534, 4294901760
        %v986 = vsub.f32 %v534, %v985
        %v987 = vand.u32 %v986, 4294901760
        %988 = vmatmul.mubr.f32.gmra.mxu0 %v987
        %v989 = vpop.f32.mrf.mxu0
        %v990 = vadd.f32 %v901, %v989
        %v991 = vpop.f32.mrf.mxu0
        %992 = vdwg.mxu0
        %993 = vmatprep.subr.mxu0 0.0
        %v994 = vand.u32 %v550, 4294901760
        %v995 = vsub.f32 %v550, %v994
        %v996 = vand.u32 %v995, 4294901760
        %997 = vmatpush1.msra.mxu0 %v996
        %998 = vmatprep.subr.mxu0 0.0
        %v999 = vand.u32 %v549, 4294901760
        %v1000 = vsub.f32 %v549, %v999
        %v1001 = vand.u32 %v1000, 4294901760
        %1002 = vmatpush1.msra.mxu0 %v1001
        %1003 = vmatprep.subr.mxu0 0.0
        %v1004 = vand.u32 %v548, 4294901760
        %v1005 = vsub.f32 %v548, %v1004
        %v1006 = vand.u32 %v1005, 4294901760
        %1007 = vmatpush1.msra.mxu0 %v1006
        %1008 = vmatprep.subr.mxu0 0.0
        %v1009 = vand.u32 %v547, 4294901760
        %v1010 = vsub.f32 %v547, %v1009
        %v1011 = vand.u32 %v1010, 4294901760
        %1012 = vmatpush1.msra.mxu0 %v1011
        %1013 = vmatprep.subr.mxu0 0.0
        %v1014 = vand.u32 %v546, 4294901760
        %v1015 = vsub.f32 %v546, %v1014
        %v1016 = vand.u32 %v1015, 4294901760
        %1017 = vmatpush1.msra.mxu0 %v1016
        %1018 = vmatprep.subr.mxu0 0.0
        %v1019 = vand.u32 %v545, 4294901760
        %v1020 = vsub.f32 %v545, %v1019
        %v1021 = vand.u32 %v1020, 4294901760
        %1022 = vmatpush1.msra.mxu0 %v1021
        %1023 = vmatprep.subr.mxu0 0.0
        %v1024 = vand.u32 %v544, 4294901760
        %v1025 = vsub.f32 %v544, %v1024
        %v1026 = vand.u32 %v1025, 4294901760
        %1027 = vmatpush1.msra.mxu0 %v1026
        %1028 = vmatprep.subr.mxu0 0.0
        %v1029 = vand.u32 %v543, 4294901760
        %v1030 = vsub.f32 %v543, %v1029
        %v1031 = vand.u32 %v1030, 4294901760
        %1032 = vmatpush1.msra.mxu0 %v1031
        %1033 = vmatprep.subr.mxu0 0.0
        %v1034 = vand.u32 %v542, 4294901760
        %v1035 = vsub.f32 %v542, %v1034
        %v1036 = vand.u32 %v1035, 4294901760
        %1037 = vmatpush1.msra.mxu0 %v1036
        %1038 = vmatprep.subr.mxu0 0.0
        %v1039 = vand.u32 %v541, 4294901760
        %v1040 = vsub.f32 %v541, %v1039
        %v1041 = vand.u32 %v1040, 4294901760
        %1042 = vmatpush1.msra.mxu0 %v1041
        %1043 = vmatprep.subr.mxu0 0.0
        %v1044 = vand.u32 %v540, 4294901760
        %v1045 = vsub.f32 %v540, %v1044
        %v1046 = vand.u32 %v1045, 4294901760
        %1047 = vmatpush1.msra.mxu0 %v1046
        %1048 = vmatprep.subr.mxu0 0.0
        %v1049 = vand.u32 %v539, 4294901760
        %v1050 = vsub.f32 %v539, %v1049
        %v1051 = vand.u32 %v1050, 4294901760
        %1052 = vmatpush1.msra.mxu0 %v1051
        %1053 = vmatprep.subr.mxu0 0.0
        %v1054 = vand.u32 %v538, 4294901760
        %v1055 = vsub.f32 %v538, %v1054
        %v1056 = vand.u32 %v1055, 4294901760
        %1057 = vmatpush1.msra.mxu0 %v1056
        %1058 = vmatprep.subr.mxu0 0.0
        %v1059 = vand.u32 %v537, 4294901760
        %v1060 = vsub.f32 %v537, %v1059
        %v1061 = vand.u32 %v1060, 4294901760
        %1062 = vmatpush1.msra.mxu0 %v1061
        %1063 = vmatprep.subr.mxu0 0.0
        %v1064 = vand.u32 %v536, 4294901760
        %v1065 = vsub.f32 %v536, %v1064
        %v1066 = vand.u32 %v1065, 4294901760
        %1067 = vmatpush1.msra.mxu0 %v1066
        %1068 = vmatprep.subr.mxu0 0.0
        %v1069 = vand.u32 %v535, 4294901760
        %v1070 = vsub.f32 %v535, %v1069
        %v1071 = vand.u32 %v1070, 4294901760
        %1072 = vmatpush1.msra.mxu0 %v1071
        %1073 = vmatprep.subr.mxu0 0.0
        %1074 = vmatpush2.msra.mxu0 0.0
        %1075 = vmatprep.subr.mxu0 0.0
        %1076 = vmatpush2.msra.mxu0 0.0
        %1077 = vmatprep.subr.mxu0 0.0
        %1078 = vmatpush2.msra.mxu0 0.0
        %1079 = vmatprep.subr.mxu0 0.0
        %1080 = vmatpush2.msra.mxu0 0.0
        %1081 = vmatprep.subr.mxu0 0.0
        %1082 = vmatpush2.msra.mxu0 0.0
        %1083 = vmatprep.subr.mxu0 0.0
        %1084 = vmatpush2.msra.mxu0 0.0
        %1085 = vmatprep.subr.mxu0 0.0
        %1086 = vmatpush2.msra.mxu0 0.0
        %1087 = vmatprep.subr.mxu0 0.0
        %1088 = vmatpush2.msra.mxu0 0.0
        %1089 = vmatprep.subr.mxu0 0.0
        %1090 = vmatpush2.msra.mxu0 0.0
        %1091 = vmatprep.subr.mxu0 0.0
        %1092 = vmatpush2.msra.mxu0 0.0
        %1093 = vmatprep.subr.mxu0 0.0
        %1094 = vmatpush2.msra.mxu0 0.0
        %1095 = vmatprep.subr.mxu0 0.0
        %1096 = vmatpush2.msra.mxu0 0.0
        %1097 = vmatprep.subr.mxu0 0.0
        %1098 = vmatpush2.msra.mxu0 0.0
        %1099 = vmatprep.subr.mxu0 0.0
        %1100 = vmatpush2.msra.mxu0 0.0
        %1101 = vmatprep.subr.mxu0 0.0
        %1102 = vmatpush2.msra.mxu0 0.0
        %1103 = vmatprep.subr.mxu0 0.0
        %1104 = vmatpush2.msra.mxu0 0.0
        %1105 = vmatprep.mubr.f32.mxu0 0.0
        %v1106 = vand.u32 %v534, 4294901760
        %1107 = vmatmul.mubr.f32.gmra.mxu0 %v1106
        %v1108 = vpop.f32.mrf.mxu0
        %v1109 = vadd.f32 %v990, %v1108
        %v1110 = vpop.f32.mrf.mxu0
        %1111 = vdwg.mxu0
        %1112 = vmatprep.subr.mxu0 0.0
        %v1113 = vand.u32 %v550, 4294901760
        %1114 = vmatpush1.msra.mxu0 %v1113
        %1115 = vmatprep.subr.mxu0 0.0
        %v1116 = vand.u32 %v549, 4294901760
        %1117 = vmatpush1.msra.mxu0 %v1116
        %1118 = vmatprep.subr.mxu0 0.0
        %v1119 = vand.u32 %v548, 4294901760
        %1120 = vmatpush1.msra.mxu0 %v1119
        %1121 = vmatprep.subr.mxu0 0.0
        %v1122 = vand.u32 %v547, 4294901760
        %1123 = vmatpush1.msra.mxu0 %v1122
        %1124 = vmatprep.subr.mxu0 0.0
        %v1125 = vand.u32 %v546, 4294901760
        %1126 = vmatpush1.msra.mxu0 %v1125
        %1127 = vmatprep.subr.mxu0 0.0
        %v1128 = vand.u32 %v545, 4294901760
        %1129 = vmatpush1.msra.mxu0 %v1128
        %1130 = vmatprep.subr.mxu0 0.0
        %v1131 = vand.u32 %v544, 4294901760
        %1132 = vmatpush1.msra.mxu0 %v1131
        %1133 = vmatprep.subr.mxu0 0.0
        %v1134 = vand.u32 %v543, 4294901760
        %1135 = vmatpush1.msra.mxu0 %v1134
        %1136 = vmatprep.subr.mxu0 0.0
        %v1137 = vand.u32 %v542, 4294901760
        %1138 = vmatpush1.msra.mxu0 %v1137
        %1139 = vmatprep.subr.mxu0 0.0
        %v1140 = vand.u32 %v541, 4294901760
        %1141 = vmatpush1.msra.mxu0 %v1140
        %1142 = vmatprep.subr.mxu0 0.0
        %v1143 = vand.u32 %v540, 4294901760
        %1144 = vmatpush1.msra.mxu0 %v1143
        %1145 = vmatprep.subr.mxu0 0.0
        %v1146 = vand.u32 %v539, 4294901760
        %1147 = vmatpush1.msra.mxu0 %v1146
        %1148 = vmatprep.subr.mxu0 0.0
        %v1149 = vand.u32 %v538, 4294901760
        %1150 = vmatpush1.msra.mxu0 %v1149
        %1151 = vmatprep.subr.mxu0 0.0
        %v1152 = vand.u32 %v537, 4294901760
        %1153 = vmatpush1.msra.mxu0 %v1152
        %1154 = vmatprep.subr.mxu0 0.0
        %v1155 = vand.u32 %v536, 4294901760
        %1156 = vmatpush1.msra.mxu0 %v1155
        %1157 = vmatprep.subr.mxu0 0.0
        %v1158 = vand.u32 %v535, 4294901760
        %1159 = vmatpush1.msra.mxu0 %v1158
        %1160 = vmatprep.subr.mxu0 0.0
        %1161 = vmatpush2.msra.mxu0 0.0
        %1162 = vmatprep.subr.mxu0 0.0
        %1163 = vmatpush2.msra.mxu0 0.0
        %1164 = vmatprep.subr.mxu0 0.0
        %1165 = vmatpush2.msra.mxu0 0.0
        %1166 = vmatprep.subr.mxu0 0.0
        %1167 = vmatpush2.msra.mxu0 0.0
        %1168 = vmatprep.subr.mxu0 0.0
        %1169 = vmatpush2.msra.mxu0 0.0
        %1170 = vmatprep.subr.mxu0 0.0
        %1171 = vmatpush2.msra.mxu0 0.0
        %1172 = vmatprep.subr.mxu0 0.0
        %1173 = vmatpush2.msra.mxu0 0.0
        %1174 = vmatprep.subr.mxu0 0.0
        %1175 = vmatpush2.msra.mxu0 0.0
        %1176 = vmatprep.subr.mxu0 0.0
        %1177 = vmatpush2.msra.mxu0 0.0
        %1178 = vmatprep.subr.mxu0 0.0
        %1179 = vmatpush2.msra.mxu0 0.0
        %1180 = vmatprep.subr.mxu0 0.0
        %1181 = vmatpush2.msra.mxu0 0.0
        %1182 = vmatprep.subr.mxu0 0.0
        %1183 = vmatpush2.msra.mxu0 0.0
        %1184 = vmatprep.subr.mxu0 0.0
        %1185 = vmatpush2.msra.mxu0 0.0
        %1186 = vmatprep.subr.mxu0 0.0
        %1187 = vmatpush2.msra.mxu0 0.0
        %1188 = vmatprep.subr.mxu0 0.0
        %1189 = vmatpush2.msra.mxu0 0.0
        %1190 = vmatprep.subr.mxu0 0.0
        %1191 = vmatpush2.msra.mxu0 0.0
        %1192 = vmatprep.mubr.f32.mxu0 0.0
        %v1193 = vand.u32 %v534, 4294901760
        %1194 = vmatmul.mubr.f32.gmra.mxu0 %v1193
        %v1195 = vpop.f32.mrf.mxu0
        %v1196 = vadd.f32 %v1109, %v1195
        %v1197 = vpop.f32.mrf.mxu0
        %1198 = vdwg.mxu0
        %v1199 = vmul.f32 %v1196, 0.5
        %v1200 = vmul.f32 %v1196, 0.70710677
        %v1201 = verf.f32.pop %v1200
        %v1202 = vadd.f32 %v1201, 1.0
        %v1203 = vmul.f32 %v1199, %v1202
        %v1204 = vld [vmem:[%s3] sm:$0xff]
        %v1205 = vld [vmem:[%s3 + $0x8] sm:$0xff]
        %v1206 = vld [vmem:[%s3 + $0x10] sm:$0xff]
        %v1207 = vld [vmem:[%s3 + $0x18] sm:$0xff]
        %v1208 = vld [vmem:[%s3 + $0x20] sm:$0xff]
        %v1209 = vld [vmem:[%s3 + $0x28] sm:$0xff]
        %v1210 = vld [vmem:[%s3 + $0x30] sm:$0xff]
        %v1211 = vld [vmem:[%s3 + $0x38] sm:$0xff]
        %v1212 = vld [vmem:[%s4] sm:$0x1]
        %v1214 = vlaneseq
        %v1215 = vshrl.u32 %v1214, 7
        %v1216 = vsub.s32 0, %v1215
        %v1217 = vrot.slane %v1212, %v1216
        %vm1219 = vcmask 523264
        %v1221 = vsel %vm1219, %v1203, 0
        %1223 = vmatprep.subr.mxu0 0.0
        %1224 = vmatpush1.msra.mxu0 0.0
        %1225 = vmatprep.subr.mxu0 0.0
        %1226 = vmatpush1.msra.mxu0 0.0
        %1227 = vmatprep.subr.mxu0 0.0
        %1228 = vmatpush1.msra.mxu0 0.0
        %1229 = vmatprep.subr.mxu0 0.0
        %1230 = vmatpush1.msra.mxu0 0.0
        %1231 = vmatprep.subr.mxu0 0.0
        %1232 = vmatpush1.msra.mxu0 0.0
        %1233 = vmatprep.subr.mxu0 0.0
        %1234 = vmatpush1.msra.mxu0 0.0
        %1235 = vmatprep.subr.mxu0 0.0
        %1236 = vmatpush1.msra.mxu0 0.0
        %1237 = vmatprep.subr.mxu0 0.0
        %1238 = vmatpush1.msra.mxu0 0.0
        %1239 = vmatprep.subr.mxu0 0.0
        %v1240 = vand.u32 %v1211, 4294901760
        %1241 = vmatpush1.msra.mxu0 %v1240
        %1242 = vmatprep.subr.mxu0 0.0
        %v1243 = vand.u32 %v1210, 4294901760
        %1244 = vmatpush1.msra.mxu0 %v1243
        %1245 = vmatprep.subr.mxu0 0.0
        %v1246 = vand.u32 %v1209, 4294901760
        %1247 = vmatpush1.msra.mxu0 %v1246
        %1248 = vmatprep.subr.mxu0 0.0
        %v1249 = vand.u32 %v1208, 4294901760
        %1250 = vmatpush1.msra.mxu0 %v1249
        %1251 = vmatprep.subr.mxu0 0.0
        %v1252 = vand.u32 %v1207, 4294901760
        %1253 = vmatpush1.msra.mxu0 %v1252
        %1254 = vmatprep.subr.mxu0 0.0
        %v1255 = vand.u32 %v1206, 4294901760
        %1256 = vmatpush1.msra.mxu0 %v1255
        %1257 = vmatprep.subr.mxu0 0.0
        %v1258 = vand.u32 %v1205, 4294901760
        %1259 = vmatpush1.msra.mxu0 %v1258
        %1260 = vmatprep.subr.mxu0 0.0
        %v1261 = vand.u32 %v1204, 4294901760
        %1262 = vmatpush1.msra.mxu0 %v1261
        %1263 = vmatprep.subr.mxu0 0.0
        %1264 = vmatpush2.msra.mxu0 0.0
        %1265 = vmatprep.subr.mxu0 0.0
        %1266 = vmatpush2.msra.mxu0 0.0
        %1267 = vmatprep.subr.mxu0 0.0
        %1268 = vmatpush2.msra.mxu0 0.0
        %1269 = vmatprep.subr.mxu0 0.0
        %1270 = vmatpush2.msra.mxu0 0.0
        %1271 = vmatprep.subr.mxu0 0.0
        %1272 = vmatpush2.msra.mxu0 0.0
        %1273 = vmatprep.subr.mxu0 0.0
        %1274 = vmatpush2.msra.mxu0 0.0
        %1275 = vmatprep.subr.mxu0 0.0
        %1276 = vmatpush2.msra.mxu0 0.0
        %1277 = vmatprep.subr.mxu0 0.0
        %1278 = vmatpush2.msra.mxu0 0.0
        %1279 = vmatprep.subr.mxu0 0.0
        %1280 = vmatpush2.msra.mxu0 0.0
        %1281 = vmatprep.subr.mxu0 0.0
        %1282 = vmatpush2.msra.mxu0 0.0
        %1283 = vmatprep.subr.mxu0 0.0
        %1284 = vmatpush2.msra.mxu0 0.0
        %1285 = vmatprep.subr.mxu0 0.0
        %1286 = vmatpush2.msra.mxu0 0.0
        %1287 = vmatprep.subr.mxu0 0.0
        %1288 = vmatpush2.msra.mxu0 0.0
        %1289 = vmatprep.subr.mxu0 0.0
        %1290 = vmatpush2.msra.mxu0 0.0
        %1291 = vmatprep.subr.mxu0 0.0
        %1292 = vmatpush2.msra.mxu0 0.0
        %1293 = vmatprep.subr.mxu0 0.0
        %1294 = vmatpush2.msra.mxu0 0.0
        %1295 = vmatprep.mubr.f32.mxu0 0.0
        %v1296 = vand.u32 %v1221, 4294901760
        %v1297 = vsub.f32 %v1221, %v1296
        %v1298 = vand.u32 %v1297, 4294901760
        %v1299 = vsub.f32 %v1297, %v1298
        %v1300 = vand.u32 %v1299, 4294901760
        %1301 = vmatmul.mubr.f32.gmra.mxu0 %v1300
        %v1302 = vpop.f32.mrf.mxu0
        %v1303 = vadd.f32 %v1217, %v1302
        %v1304 = vpop.f32.mrf.mxu0
        %1305 = vdwg.mxu0
        %1306 = vmatprep.subr.mxu0 0.0
        %1307 = vmatpush1.msra.mxu0 0.0
        %1308 = vmatprep.subr.mxu0 0.0
        %1309 = vmatpush1.msra.mxu0 0.0
        %1310 = vmatprep.subr.mxu0 0.0
        %1311 = vmatpush1.msra.mxu0 0.0
        %1312 = vmatprep.subr.mxu0 0.0
        %1313 = vmatpush1.msra.mxu0 0.0
        %1314 = vmatprep.subr.mxu0 0.0
        %1315 = vmatpush1.msra.mxu0 0.0
        %1316 = vmatprep.subr.mxu0 0.0
        %1317 = vmatpush1.msra.mxu0 0.0
        %1318 = vmatprep.subr.mxu0 0.0
        %1319 = vmatpush1.msra.mxu0 0.0
        %1320 = vmatprep.subr.mxu0 0.0
        %1321 = vmatpush1.msra.mxu0 0.0
        %1322 = vmatprep.subr.mxu0 0.0
        %v1323 = vand.u32 %v1211, 4294901760
        %v1324 = vsub.f32 %v1211, %v1323
        %v1325 = vand.u32 %v1324, 4294901760
        %v1326 = vsub.f32 %v1324, %v1325
        %v1327 = vand.u32 %v1326, 4294901760
        %1328 = vmatpush1.msra.mxu0 %v1327
        %1329 = vmatprep.subr.mxu0 0.0
        %v1330 = vand.u32 %v1210, 4294901760
        %v1331 = vsub.f32 %v1210, %v1330
        %v1332 = vand.u32 %v1331, 4294901760
        %v1333 = vsub.f32 %v1331, %v1332
        %v1334 = vand.u32 %v1333, 4294901760
        %1335 = vmatpush1.msra.mxu0 %v1334
        %1336 = vmatprep.subr.mxu0 0.0
        %v1337 = vand.u32 %v1209, 4294901760
        %v1338 = vsub.f32 %v1209, %v1337
        %v1339 = vand.u32 %v1338, 4294901760
        %v1340 = vsub.f32 %v1338, %v1339
        %v1341 = vand.u32 %v1340, 4294901760
        %1342 = vmatpush1.msra.mxu0 %v1341
        %1343 = vmatprep.subr.mxu0 0.0
        %v1344 = vand.u32 %v1208, 4294901760
        %v1345 = vsub.f32 %v1208, %v1344
        %v1346 = vand.u32 %v1345, 4294901760
        %v1347 = vsub.f32 %v1345, %v1346
        %v1348 = vand.u32 %v1347, 4294901760
        %1349 = vmatpush1.msra.mxu0 %v1348
        %1350 = vmatprep.subr.mxu0 0.0
        %v1351 = vand.u32 %v1207, 4294901760
        %v1352 = vsub.f32 %v1207, %v1351
        %v1353 = vand.u32 %v1352, 4294901760
        %v1354 = vsub.f32 %v1352, %v1353
        %v1355 = vand.u32 %v1354, 4294901760
        %1356 = vmatpush1.msra.mxu0 %v1355
        %1357 = vmatprep.subr.mxu0 0.0
        %v1358 = vand.u32 %v1206, 4294901760
        %v1359 = vsub.f32 %v1206, %v1358
        %v1360 = vand.u32 %v1359, 4294901760
        %v1361 = vsub.f32 %v1359, %v1360
        %v1362 = vand.u32 %v1361, 4294901760
        %1363 = vmatpush1.msra.mxu0 %v1362
        %1364 = vmatprep.subr.mxu0 0.0
        %v1365 = vand.u32 %v1205, 4294901760
        %v1366 = vsub.f32 %v1205, %v1365
        %v1367 = vand.u32 %v1366, 4294901760
        %v1368 = vsub.f32 %v1366, %v1367
        %v1369 = vand.u32 %v1368, 4294901760
        %1370 = vmatpush1.msra.mxu0 %v1369
        %1371 = vmatprep.subr.mxu0 0.0
        %v1372 = vand.u32 %v1204, 4294901760
        %v1373 = vsub.f32 %v1204, %v1372
        %v1374 = vand.u32 %v1373, 4294901760
        %v1375 = vsub.f32 %v1373, %v1374
        %v1376 = vand.u32 %v1375, 4294901760
        %1377 = vmatpush1.msra.mxu0 %v1376
        %1378 = vmatprep.subr.mxu0 0.0
        %1379 = vmatpush2.msra.mxu0 0.0
        %1380 = vmatprep.subr.mxu0 0.0
        %1381 = vmatpush2.msra.mxu0 0.0
        %1382 = vmatprep.subr.mxu0 0.0
        %1383 = vmatpush2.msra.mxu0 0.0
        %1384 = vmatprep.subr.mxu0 0.0
        %1385 = vmatpush2.msra.mxu0 0.0
        %1386 = vmatprep.subr.mxu0 0.0
        %1387 = vmatpush2.msra.mxu0 0.0
        %1388 = vmatprep.subr.mxu0 0.0
        %1389 = vmatpush2.msra.mxu0 0.0
        %1390 = vmatprep.subr.mxu0 0.0
        %1391 = vmatpush2.msra.mxu0 0.0
        %1392 = vmatprep.subr.mxu0 0.0
        %1393 = vmatpush2.msra.mxu0 0.0
        %1394 = vmatprep.subr.mxu0 0.0
        %1395 = vmatpush2.msra.mxu0 0.0
        %1396 = vmatprep.subr.mxu0 0.0
        %1397 = vmatpush2.msra.mxu0 0.0
        %1398 = vmatprep.subr.mxu0 0.0
        %1399 = vmatpush2.msra.mxu0 0.0
        %1400 = vmatprep.subr.mxu0 0.0
        %1401 = vmatpush2.msra.mxu0 0.0
        %1402 = vmatprep.subr.mxu0 0.0
        %1403 = vmatpush2.msra.mxu0 0.0
        %1404 = vmatprep.subr.mxu0 0.0
        %1405 = vmatpush2.msra.mxu0 0.0
        %1406 = vmatprep.subr.mxu0 0.0
        %1407 = vmatpush2.msra.mxu0 0.0
        %1408 = vmatprep.subr.mxu0 0.0
        %1409 = vmatpush2.msra.mxu0 0.0
        %1410 = vmatprep.mubr.f32.mxu0 0.0
        %v1411 = vand.u32 %v1221, 4294901760
        %1412 = vmatmul.mubr.f32.gmra.mxu0 %v1411
        %v1413 = vpop.f32.mrf.mxu0
        %v1414 = vadd.f32 %v1303, %v1413
        %v1415 = vpop.f32.mrf.mxu0
        %1416 = vdwg.mxu0
        %1417 = vmatprep.subr.mxu0 0.0
        %1418 = vmatpush1.msra.mxu0 0.0
        %1419 = vmatprep.subr.mxu0 0.0
        %1420 = vmatpush1.msra.mxu0 0.0
        %1421 = vmatprep.subr.mxu0 0.0
        %1422 = vmatpush1.msra.mxu0 0.0
        %1423 = vmatprep.subr.mxu0 0.0
        %1424 = vmatpush1.msra.mxu0 0.0
        %1425 = vmatprep.subr.mxu0 0.0
        %1426 = vmatpush1.msra.mxu0 0.0
        %1427 = vmatprep.subr.mxu0 0.0
        %1428 = vmatpush1.msra.mxu0 0.0
        %1429 = vmatprep.subr.mxu0 0.0
        %1430 = vmatpush1.msra.mxu0 0.0
        %1431 = vmatprep.subr.mxu0 0.0
        %1432 = vmatpush1.msra.mxu0 0.0
        %1433 = vmatprep.subr.mxu0 0.0
        %v1434 = vand.u32 %v1211, 4294901760
        %v1435 = vsub.f32 %v1211, %v1434
        %1436 = vmatpush1.msra.mxu0 %v1435
        %1437 = vmatprep.subr.mxu0 0.0
        %v1438 = vand.u32 %v1210, 4294901760
        %v1439 = vsub.f32 %v1210, %v1438
        %1440 = vmatpush1.msra.mxu0 %v1439
        %1441 = vmatprep.subr.mxu0 0.0
        %v1442 = vand.u32 %v1209, 4294901760
        %v1443 = vsub.f32 %v1209, %v1442
        %1444 = vmatpush1.msra.mxu0 %v1443
        %1445 = vmatprep.subr.mxu0 0.0
        %v1446 = vand.u32 %v1208, 4294901760
        %v1447 = vsub.f32 %v1208, %v1446
        %1448 = vmatpush1.msra.mxu0 %v1447
        %1449 = vmatprep.subr.mxu0 0.0
        %v1450 = vand.u32 %v1207, 4294901760
        %v1451 = vsub.f32 %v1207, %v1450
        %1452 = vmatpush1.msra.mxu0 %v1451
        %1453 = vmatprep.subr.mxu0 0.0
        %v1454 = vand.u32 %v1206, 4294901760
        %v1455 = vsub.f32 %v1206, %v1454
        %1456 = vmatpush1.msra.mxu0 %v1455
        %1457 = vmatprep.subr.mxu0 0.0
        %v1458 = vand.u32 %v1205, 4294901760
        %v1459 = vsub.f32 %v1205, %v1458
        %1460 = vmatpush1.msra.mxu0 %v1459
        %1461 = vmatprep.subr.mxu0 0.0
        %v1462 = vand.u32 %v1204, 4294901760
        %v1463 = vsub.f32 %v1204, %v1462
        %1464 = vmatpush1.msra.mxu0 %v1463
        %1465 = vmatprep.subr.mxu0 0.0
        %1466 = vmatpush2.msra.mxu0 0.0
        %1467 = vmatprep.subr.mxu0 0.0
        %1468 = vmatpush2.msra.mxu0 0.0
        %1469 = vmatprep.subr.mxu0 0.0
        %1470 = vmatpush2.msra.mxu0 0.0
        %1471 = vmatprep.subr.mxu0 0.0
        %1472 = vmatpush2.msra.mxu0 0.0
        %1473 = vmatprep.subr.mxu0 0.0
        %1474 = vmatpush2.msra.mxu0 0.0
        %1475 = vmatprep.subr.mxu0 0.0
        %1476 = vmatpush2.msra.mxu0 0.0
        %1477 = vmatprep.subr.mxu0 0.0
        %1478 = vmatpush2.msra.mxu0 0.0
        %1479 = vmatprep.subr.mxu0 0.0
        %1480 = vmatpush2.msra.mxu0 0.0
        %1481 = vmatprep.subr.mxu0 0.0
        %1482 = vmatpush2.msra.mxu0 0.0
        %1483 = vmatprep.subr.mxu0 0.0
        %1484 = vmatpush2.msra.mxu0 0.0
        %1485 = vmatprep.subr.mxu0 0.0
        %1486 = vmatpush2.msra.mxu0 0.0
        %1487 = vmatprep.subr.mxu0 0.0
        %1488 = vmatpush2.msra.mxu0 0.0
        %1489 = vmatprep.subr.mxu0 0.0
        %1490 = vmatpush2.msra.mxu0 0.0
        %1491 = vmatprep.subr.mxu0 0.0
        %1492 = vmatpush2.msra.mxu0 0.0
        %1493 = vmatprep.subr.mxu0 0.0
        %1494 = vmatpush2.msra.mxu0 0.0
        %1495 = vmatprep.subr.mxu0 0.0
        %1496 = vmatpush2.msra.mxu0 0.0
        %1497 = vmatprep.mubr.f32.mxu0 0.0
        %v1498 = vand.u32 %v1221, 4294901760
        %v1499 = vsub.f32 %v1221, %v1498
        %1500 = vmatmul.mubr.f32.gmra.mxu0 %v1499
        %v1501 = vpop.f32.mrf.mxu0
        %v1502 = vadd.f32 %v1414, %v1501
        %v1503 = vpop.f32.mrf.mxu0
        %1504 = vdwg.mxu0
        %1505 = vmatprep.subr.mxu0 0.0
        %1506 = vmatpush1.msra.mxu0 0.0
        %1507 = vmatprep.subr.mxu0 0.0
        %1508 = vmatpush1.msra.mxu0 0.0
        %1509 = vmatprep.subr.mxu0 0.0
        %1510 = vmatpush1.msra.mxu0 0.0
        %1511 = vmatprep.subr.mxu0 0.0
        %1512 = vmatpush1.msra.mxu0 0.0
        %1513 = vmatprep.subr.mxu0 0.0
        %1514 = vmatpush1.msra.mxu0 0.0
        %1515 = vmatprep.subr.mxu0 0.0
        %1516 = vmatpush1.msra.mxu0 0.0
        %1517 = vmatprep.subr.mxu0 0.0
        %1518 = vmatpush1.msra.mxu0 0.0
        %1519 = vmatprep.subr.mxu0 0.0
        %1520 = vmatpush1.msra.mxu0 0.0
        %1521 = vmatprep.subr.mxu0 0.0
        %v1522 = vand.u32 %v1211, 4294901760
        %1523 = vmatpush1.msra.mxu0 %v1522
        %1524 = vmatprep.subr.mxu0 0.0
        %v1525 = vand.u32 %v1210, 4294901760
        %1526 = vmatpush1.msra.mxu0 %v1525
        %1527 = vmatprep.subr.mxu0 0.0
        %v1528 = vand.u32 %v1209, 4294901760
        %1529 = vmatpush1.msra.mxu0 %v1528
        %1530 = vmatprep.subr.mxu0 0.0
        %v1531 = vand.u32 %v1208, 4294901760
        %1532 = vmatpush1.msra.mxu0 %v1531
        %1533 = vmatprep.subr.mxu0 0.0
        %v1534 = vand.u32 %v1207, 4294901760
        %1535 = vmatpush1.msra.mxu0 %v1534
        %1536 = vmatprep.subr.mxu0 0.0
        %v1537 = vand.u32 %v1206, 4294901760
        %1538 = vmatpush1.msra.mxu0 %v1537
        %1539 = vmatprep.subr.mxu0 0.0
        %v1540 = vand.u32 %v1205, 4294901760
        %1541 = vmatpush1.msra.mxu0 %v1540
        %1542 = vmatprep.subr.mxu0 0.0
        %v1543 = vand.u32 %v1204, 4294901760
        %1544 = vmatpush1.msra.mxu0 %v1543
        %1545 = vmatprep.subr.mxu0 0.0
        %1546 = vmatpush2.msra.mxu0 0.0
        %1547 = vmatprep.subr.mxu0 0.0
        %1548 = vmatpush2.msra.mxu0 0.0
        %1549 = vmatprep.subr.mxu0 0.0
        %1550 = vmatpush2.msra.mxu0 0.0
        %1551 = vmatprep.subr.mxu0 0.0
        %1552 = vmatpush2.msra.mxu0 0.0
        %1553 = vmatprep.subr.mxu0 0.0
        %1554 = vmatpush2.msra.mxu0 0.0
        %1555 = vmatprep.subr.mxu0 0.0
        %1556 = vmatpush2.msra.mxu0 0.0
        %1557 = vmatprep.subr.mxu0 0.0
        %1558 = vmatpush2.msra.mxu0 0.0
        %1559 = vmatprep.subr.mxu0 0.0
        %1560 = vmatpush2.msra.mxu0 0.0
        %1561 = vmatprep.subr.mxu0 0.0
        %1562 = vmatpush2.msra.mxu0 0.0
        %1563 = vmatprep.subr.mxu0 0.0
        %1564 = vmatpush2.msra.mxu0 0.0
        %1565 = vmatprep.subr.mxu0 0.0
        %1566 = vmatpush2.msra.mxu0 0.0
        %1567 = vmatprep.subr.mxu0 0.0
        %1568 = vmatpush2.msra.mxu0 0.0
        %1569 = vmatprep.subr.mxu0 0.0
        %1570 = vmatpush2.msra.mxu0 0.0
        %1571 = vmatprep.subr.mxu0 0.0
        %1572 = vmatpush2.msra.mxu0 0.0
        %1573 = vmatprep.subr.mxu0 0.0
        %1574 = vmatpush2.msra.mxu0 0.0
        %1575 = vmatprep.subr.mxu0 0.0
        %1576 = vmatpush2.msra.mxu0 0.0
        %1577 = vmatprep.mubr.f32.mxu0 0.0
        %v1578 = vand.u32 %v1221, 4294901760
        %v1579 = vsub.f32 %v1221, %v1578
        %v1580 = vand.u32 %v1579, 4294901760
        %1581 = vmatmul.mubr.f32.gmra.mxu0 %v1580
        %v1582 = vpop.f32.mrf.mxu0
        %v1583 = vadd.f32 %v1502, %v1582
        %v1584 = vpop.f32.mrf.mxu0
        %1585 = vdwg.mxu0
        %1586 = vmatprep.subr.mxu0 0.0
        %1587 = vmatpush1.msra.mxu0 0.0
        %1588 = vmatprep.subr.mxu0 0.0
        %1589 = vmatpush1.msra.mxu0 0.0
        %1590 = vmatprep.subr.mxu0 0.0
        %1591 = vmatpush1.msra.mxu0 0.0
        %1592 = vmatprep.subr.mxu0 0.0
        %1593 = vmatpush1.msra.mxu0 0.0
        %1594 = vmatprep.subr.mxu0 0.0
        %1595 = vmatpush1.msra.mxu0 0.0
        %1596 = vmatprep.subr.mxu0 0.0
        %1597 = vmatpush1.msra.mxu0 0.0
        %1598 = vmatprep.subr.mxu0 0.0
        %1599 = vmatpush1.msra.mxu0 0.0
        %1600 = vmatprep.subr.mxu0 0.0
        %1601 = vmatpush1.msra.mxu0 0.0
        %1602 = vmatprep.subr.mxu0 0.0
        %v1603 = vand.u32 %v1211, 4294901760
        %v1604 = vsub.f32 %v1211, %v1603
        %v1605 = vand.u32 %v1604, 4294901760
        %1606 = vmatpush1.msra.mxu0 %v1605
        %1607 = vmatprep.subr.mxu0 0.0
        %v1608 = vand.u32 %v1210, 4294901760
        %v1609 = vsub.f32 %v1210, %v1608
        %v1610 = vand.u32 %v1609, 4294901760
        %1611 = vmatpush1.msra.mxu0 %v1610
        %1612 = vmatprep.subr.mxu0 0.0
        %v1613 = vand.u32 %v1209, 4294901760
        %v1614 = vsub.f32 %v1209, %v1613
        %v1615 = vand.u32 %v1614, 4294901760
        %1616 = vmatpush1.msra.mxu0 %v1615
        %1617 = vmatprep.subr.mxu0 0.0
        %v1618 = vand.u32 %v1208, 4294901760
        %v1619 = vsub.f32 %v1208, %v1618
        %v1620 = vand.u32 %v1619, 4294901760
        %1621 = vmatpush1.msra.mxu0 %v1620
        %1622 = vmatprep.subr.mxu0 0.0
        %v1623 = vand.u32 %v1207, 4294901760
        %v1624 = vsub.f32 %v1207, %v1623
        %v1625 = vand.u32 %v1624, 4294901760
        %1626 = vmatpush1.msra.mxu0 %v1625
        %1627 = vmatprep.subr.mxu0 0.0
        %v1628 = vand.u32 %v1206, 4294901760
        %v1629 = vsub.f32 %v1206, %v1628
        %v1630 = vand.u32 %v1629, 4294901760
        %1631 = vmatpush1.msra.mxu0 %v1630
        %1632 = vmatprep.subr.mxu0 0.0
        %v1633 = vand.u32 %v1205, 4294901760
        %v1634 = vsub.f32 %v1205, %v1633
        %v1635 = vand.u32 %v1634, 4294901760
        %1636 = vmatpush1.msra.mxu0 %v1635
        %1637 = vmatprep.subr.mxu0 0.0
        %v1638 = vand.u32 %v1204, 4294901760
        %v1639 = vsub.f32 %v1204, %v1638
        %v1640 = vand.u32 %v1639, 4294901760
        %1641 = vmatpush1.msra.mxu0 %v1640
        %1642 = vmatprep.subr.mxu0 0.0
        %1643 = vmatpush2.msra.mxu0 0.0
        %1644 = vmatprep.subr.mxu0 0.0
        %1645 = vmatpush2.msra.mxu0 0.0
        %1646 = vmatprep.subr.mxu0 0.0
        %1647 = vmatpush2.msra.mxu0 0.0
        %1648 = vmatprep.subr.mxu0 0.0
        %1649 = vmatpush2.msra.mxu0 0.0
        %1650 = vmatprep.subr.mxu0 0.0
        %1651 = vmatpush2.msra.mxu0 0.0
        %1652 = vmatprep.subr.mxu0 0.0
        %1653 = vmatpush2.msra.mxu0 0.0
        %1654 = vmatprep.subr.mxu0 0.0
        %1655 = vmatpush2.msra.mxu0 0.0
        %1656 = vmatprep.subr.mxu0 0.0
        %1657 = vmatpush2.msra.mxu0 0.0
        %1658 = vmatprep.subr.mxu0 0.0
        %1659 = vmatpush2.msra.mxu0 0.0
        %1660 = vmatprep.subr.mxu0 0.0
        %1661 = vmatpush2.msra.mxu0 0.0
        %1662 = vmatprep.subr.mxu0 0.0
        %1663 = vmatpush2.msra.mxu0 0.0
        %1664 = vmatprep.subr.mxu0 0.0
        %1665 = vmatpush2.msra.mxu0 0.0
        %1666 = vmatprep.subr.mxu0 0.0
        %1667 = vmatpush2.msra.mxu0 0.0
        %1668 = vmatprep.subr.mxu0 0.0
        %1669 = vmatpush2.msra.mxu0 0.0
        %1670 = vmatprep.subr.mxu0 0.0
        %1671 = vmatpush2.msra.mxu0 0.0
        %1672 = vmatprep.subr.mxu0 0.0
        %1673 = vmatpush2.msra.mxu0 0.0
        %1674 = vmatprep.mubr.f32.mxu0 0.0
        %v1675 = vand.u32 %v1221, 4294901760
        %1676 = vmatmul.mubr.f32.gmra.mxu0 %v1675
        %v1677 = vpop.f32.mrf.mxu0
        %v1678 = vadd.f32 %v1583, %v1677
        %v1679 = vpop.f32.mrf.mxu0
        %1680 = vdwg.mxu0
        %1681 = vmatprep.subr.mxu0 0.0
        %1682 = vmatpush1.msra.mxu0 0.0
        %1683 = vmatprep.subr.mxu0 0.0
        %1684 = vmatpush1.msra.mxu0 0.0
        %1685 = vmatprep.subr.mxu0 0.0
        %1686 = vmatpush1.msra.mxu0 0.0
        %1687 = vmatprep.subr.mxu0 0.0
        %1688 = vmatpush1.msra.mxu0 0.0
        %1689 = vmatprep.subr.mxu0 0.0
        %1690 = vmatpush1.msra.mxu0 0.0
        %1691 = vmatprep.subr.mxu0 0.0
        %1692 = vmatpush1.msra.mxu0 0.0
        %1693 = vmatprep.subr.mxu0 0.0
        %1694 = vmatpush1.msra.mxu0 0.0
        %1695 = vmatprep.subr.mxu0 0.0
        %1696 = vmatpush1.msra.mxu0 0.0
        %1697 = vmatprep.subr.mxu0 0.0
        %v1698 = vand.u32 %v1211, 4294901760
        %1699 = vmatpush1.msra.mxu0 %v1698
        %1700 = vmatprep.subr.mxu0 0.0
        %v1701 = vand.u32 %v1210, 4294901760
        %1702 = vmatpush1.msra.mxu0 %v1701
        %1703 = vmatprep.subr.mxu0 0.0
        %v1704 = vand.u32 %v1209, 4294901760
        %1705 = vmatpush1.msra.mxu0 %v1704
        %1706 = vmatprep.subr.mxu0 0.0
        %v1707 = vand.u32 %v1208, 4294901760
        %1708 = vmatpush1.msra.mxu0 %v1707
        %1709 = vmatprep.subr.mxu0 0.0
        %v1710 = vand.u32 %v1207, 4294901760
        %1711 = vmatpush1.msra.mxu0 %v1710
        %1712 = vmatprep.subr.mxu0 0.0
        %v1713 = vand.u32 %v1206, 4294901760
        %1714 = vmatpush1.msra.mxu0 %v1713
        %1715 = vmatprep.subr.mxu0 0.0
        %v1716 = vand.u32 %v1205, 4294901760
        %1717 = vmatpush1.msra.mxu0 %v1716
        %1718 = vmatprep.subr.mxu0 0.0
        %v1719 = vand.u32 %v1204, 4294901760
        %1720 = vmatpush1.msra.mxu0 %v1719
        %1721 = vmatprep.subr.mxu0 0.0
        %1722 = vmatpush2.msra.mxu0 0.0
        %1723 = vmatprep.subr.mxu0 0.0
        %1724 = vmatpush2.msra.mxu0 0.0
        %1725 = vmatprep.subr.mxu0 0.0
        %1726 = vmatpush2.msra.mxu0 0.0
        %1727 = vmatprep.subr.mxu0 0.0
        %1728 = vmatpush2.msra.mxu0 0.0
        %1729 = vmatprep.subr.mxu0 0.0
        %1730 = vmatpush2.msra.mxu0 0.0
        %1731 = vmatprep.subr.mxu0 0.0
        %1732 = vmatpush2.msra.mxu0 0.0
        %1733 = vmatprep.subr.mxu0 0.0
        %1734 = vmatpush2.msra.mxu0 0.0
        %1735 = vmatprep.subr.mxu0 0.0
        %1736 = vmatpush2.msra.mxu0 0.0
        %1737 = vmatprep.subr.mxu0 0.0
        %1738 = vmatpush2.msra.mxu0 0.0
        %1739 = vmatprep.subr.mxu0 0.0
        %1740 = vmatpush2.msra.mxu0 0.0
        %1741 = vmatprep.subr.mxu0 0.0
        %1742 = vmatpush2.msra.mxu0 0.0
        %1743 = vmatprep.subr.mxu0 0.0
        %1744 = vmatpush2.msra.mxu0 0.0
        %1745 = vmatprep.subr.mxu0 0.0
        %1746 = vmatpush2.msra.mxu0 0.0
        %1747 = vmatprep.subr.mxu0 0.0
        %1748 = vmatpush2.msra.mxu0 0.0
        %1749 = vmatprep.subr.mxu0 0.0
        %1750 = vmatpush2.msra.mxu0 0.0
        %1751 = vmatprep.subr.mxu0 0.0
        %1752 = vmatpush2.msra.mxu0 0.0
        %1753 = vmatprep.mubr.f32.mxu0 0.0
        %v1754 = vand.u32 %v1221, 4294901760
        %1755 = vmatmul.mubr.f32.gmra.mxu0 %v1754
        %v1756 = vpop.f32.mrf.mxu0
        %v1757 = vadd.f32 %v1678, %v1756
        %v1758 = vpop.f32.mrf.mxu0
        %1759 = vdwg.mxu0
        %v1760 = vmul.f32 %v1757, 0.5
        %v1761 = vtanh.pop %v1760
        %v1762 = vadd.f32 %v1761, 1.0
        %v1763 = vmul.f32 %v1762, 0.5
        %v1764 = vmul.f32 %v534, %v1763
        %v1765 = vld [vmem:[#allocation2] sm:$0xff]
        %v1766 = vld [vmem:[#allocation2 + $0x8] sm:$0xff]
        %v1767 = vld [vmem:[#allocation2 + $0x10] sm:$0xff]
        %v1768 = vld [vmem:[#allocation2 + $0x18] sm:$0xff]
        %v1769 = vld [vmem:[#allocation2 + $0x20] sm:$0xff]
        %v1770 = vld [vmem:[#allocation2 + $0x28] sm:$0xff]
        %v1771 = vld [vmem:[#allocation2 + $0x30] sm:$0xff]
        %v1772 = vld [vmem:[#allocation2 + $0x38] sm:$0xff]
        %v1773 = vld [vmem:[#allocation2 + $0x40] sm:$0xff]
        %v1774 = vld [vmem:[#allocation2 + $0x48] sm:$0xff]
        %v1775 = vld [vmem:[#allocation2 + $0x50] sm:$0xff]
        %v1776 = vld [vmem:[#allocation2 + $0x58] sm:$0xff]
        %v1777 = vld [vmem:[#allocation2 + $0x60] sm:$0xff]
        %v1778 = vld [vmem:[#allocation2 + $0x68] sm:$0xff]
        %v1779 = vld [vmem:[#allocation2 + $0x70] sm:$0xff]
        %v1780 = vld [vmem:[#allocation2 + $0x78] sm:$0xff]
        %v1781 = vld [vmem:[#allocation2 + $0x80] sm:$0xff]
        %v1782 = vld [vmem:[#allocation2 + $0x88] sm:$0xff]
        %v1783 = vld [vmem:[#allocation2 + $0x90] sm:$0xff]
        %v1784 = vld [vmem:[#allocation2 + $0x98] sm:$0xff]
        %v1785 = vld [vmem:[#allocation2 + $0xa0] sm:$0xff]
        %v1786 = vld [vmem:[#allocation2 + $0xa8] sm:$0xff]
        %v1787 = vld [vmem:[#allocation2 + $0xb0] sm:$0xff]
        %v1788 = vld [vmem:[#allocation2 + $0xb8] sm:$0xff]
        %v1789 = vld [vmem:[#allocation2 + $0xc0] sm:$0xff]
        %v1790 = vld [vmem:[#allocation2 + $0xc8] sm:$0xff]
        %v1791 = vld [vmem:[#allocation2 + $0xd0] sm:$0xff]
        %v1792 = vld [vmem:[#allocation2 + $0xd8] sm:$0xff]
        %v1793 = vld [vmem:[#allocation2 + $0xe0] sm:$0xff]
        %v1794 = vld [vmem:[#allocation2 + $0xe8] sm:$0xff]
        %v1795 = vld [vmem:[#allocation2 + $0xf0] sm:$0xff]
        %v1796 = vld [vmem:[#allocation2 + $0xf8] sm:$0xff]
        %v1797 = vld [vmem:[%s6] sm:$0x3]
        %v1799 = vlaneseq
        %v1800 = vshrl.u32 %v1799, 7
        %v1801 = vsub.s32 0, %v1800
        %v1802 = vrot.slane %v1797, %v1801
        %v1803 = vlaneseq
        %v1804 = vshrl.u32 %v1803, 7
        %v1805 = vsub.s32 1, %v1804
        %v1806 = vrot.slane %v1797, %v1805
        %v1809 = vand.u32 %v1796, 4294901760
        %1810 = vmatprep.subr.mxu0 %v1809
        %v1811 = vand.u32 %v1795, 4294901760
        %1812 = vmatpush1.msra.mxu0 %v1811
        %v1813 = vand.u32 %v1794, 4294901760
        %1814 = vmatprep.subr.mxu0 %v1813
        %v1815 = vand.u32 %v1793, 4294901760
        %1816 = vmatpush1.msra.mxu0 %v1815
        %v1817 = vand.u32 %v1792, 4294901760
        %1818 = vmatprep.subr.mxu0 %v1817
        %v1819 = vand.u32 %v1791, 4294901760
        %1820 = vmatpush1.msra.mxu0 %v1819
        %v1821 = vand.u32 %v1790, 4294901760
        %1822 = vmatprep.subr.mxu0 %v1821
        %v1823 = vand.u32 %v1789, 4294901760
        %1824 = vmatpush1.msra.mxu0 %v1823
        %v1825 = vand.u32 %v1788, 4294901760
        %1826 = vmatprep.subr.mxu0 %v1825
        %v1827 = vand.u32 %v1787, 4294901760
        %1828 = vmatpush1.msra.mxu0 %v1827
        %v1829 = vand.u32 %v1786, 4294901760
        %1830 = vmatprep.subr.mxu0 %v1829
        %v1831 = vand.u32 %v1785, 4294901760
        %1832 = vmatpush1.msra.mxu0 %v1831
        %v1833 = vand.u32 %v1784, 4294901760
        %1834 = vmatprep.subr.mxu0 %v1833
        %v1835 = vand.u32 %v1783, 4294901760
        %1836 = vmatpush1.msra.mxu0 %v1835
        %v1837 = vand.u32 %v1782, 4294901760
        %1838 = vmatprep.subr.mxu0 %v1837
        %v1839 = vand.u32 %v1781, 4294901760
        %1840 = vmatpush1.msra.mxu0 %v1839
        %v1841 = vand.u32 %v1780, 4294901760
        %1842 = vmatprep.subr.mxu0 %v1841
        %v1843 = vand.u32 %v1779, 4294901760
        %1844 = vmatpush1.msra.mxu0 %v1843
        %v1845 = vand.u32 %v1778, 4294901760
        %1846 = vmatprep.subr.mxu0 %v1845
        %v1847 = vand.u32 %v1777, 4294901760
        %1848 = vmatpush1.msra.mxu0 %v1847
        %v1849 = vand.u32 %v1776, 4294901760
        %1850 = vmatprep.subr.mxu0 %v1849
        %v1851 = vand.u32 %v1775, 4294901760
        %1852 = vmatpush1.msra.mxu0 %v1851
        %v1853 = vand.u32 %v1774, 4294901760
        %1854 = vmatprep.subr.mxu0 %v1853
        %v1855 = vand.u32 %v1773, 4294901760
        %1856 = vmatpush1.msra.mxu0 %v1855
        %v1857 = vand.u32 %v1772, 4294901760
        %1858 = vmatprep.subr.mxu0 %v1857
        %v1859 = vand.u32 %v1771, 4294901760
        %1860 = vmatpush1.msra.mxu0 %v1859
        %v1861 = vand.u32 %v1770, 4294901760
        %1862 = vmatprep.subr.mxu0 %v1861
        %v1863 = vand.u32 %v1769, 4294901760
        %1864 = vmatpush1.msra.mxu0 %v1863
        %v1865 = vand.u32 %v1768, 4294901760
        %1866 = vmatprep.subr.mxu0 %v1865
        %v1867 = vand.u32 %v1767, 4294901760
        %1868 = vmatpush1.msra.mxu0 %v1867
        %v1869 = vand.u32 %v1766, 4294901760
        %1870 = vmatprep.subr.mxu0 %v1869
        %v1871 = vand.u32 %v1765, 4294901760
        %1872 = vmatpush1.msra.mxu0 %v1871
        %1873 = vmatprep.subr.mxu0 0.0
        %1874 = vmatpush2.msra.mxu0 0.0
        %1875 = vmatprep.subr.mxu0 0.0
        %1876 = vmatpush2.msra.mxu0 0.0
        %1877 = vmatprep.subr.mxu0 0.0
        %1878 = vmatpush2.msra.mxu0 0.0
        %1879 = vmatprep.subr.mxu0 0.0
        %1880 = vmatpush2.msra.mxu0 0.0
        %1881 = vmatprep.subr.mxu0 0.0
        %1882 = vmatpush2.msra.mxu0 0.0
        %1883 = vmatprep.subr.mxu0 0.0
        %1884 = vmatpush2.msra.mxu0 0.0
        %1885 = vmatprep.subr.mxu0 0.0
        %1886 = vmatpush2.msra.mxu0 0.0
        %1887 = vmatprep.subr.mxu0 0.0
        %1888 = vmatpush2.msra.mxu0 0.0
        %1889 = vmatprep.subr.mxu0 0.0
        %1890 = vmatpush2.msra.mxu0 0.0
        %1891 = vmatprep.subr.mxu0 0.0
        %1892 = vmatpush2.msra.mxu0 0.0
        %1893 = vmatprep.subr.mxu0 0.0
        %1894 = vmatpush2.msra.mxu0 0.0
        %1895 = vmatprep.subr.mxu0 0.0
        %1896 = vmatpush2.msra.mxu0 0.0
        %1897 = vmatprep.subr.mxu0 0.0
        %1898 = vmatpush2.msra.mxu0 0.0
        %1899 = vmatprep.subr.mxu0 0.0
        %1900 = vmatpush2.msra.mxu0 0.0
        %1901 = vmatprep.subr.mxu0 0.0
        %1902 = vmatpush2.msra.mxu0 0.0
        %1903 = vmatprep.subr.mxu0 0.0
        %1904 = vmatpush2.msra.mxu0 0.0
        %1905 = vmatprep.mubr.f32.mxu0 0.0
        %v1906 = vand.u32 %v1764, 4294901760
        %v1907 = vsub.f32 %v1764, %v1906
        %v1908 = vand.u32 %v1907, 4294901760
        %v1909 = vsub.f32 %v1907, %v1908
        %v1910 = vand.u32 %v1909, 4294901760
        %1911 = vmatmul.mubr.f32.gmra.mxu0 %v1910
        %v1912 = vpop.f32.mrf.mxu0
        %v1913 = vadd.f32 %v1802, %v1912
        %v1914 = vpop.f32.mrf.mxu0
        %v1915 = vadd.f32 %v1806, %v1914
        %1916 = vdwg.mxu0
        %v1917 = vand.u32 %v1796, 4294901760
        %v1918 = vsub.f32 %v1796, %v1917
        %v1919 = vand.u32 %v1918, 4294901760
        %v1920 = vsub.f32 %v1918, %v1919
        %v1921 = vand.u32 %v1920, 4294901760
        %1922 = vmatprep.subr.mxu0 %v1921
        %v1923 = vand.u32 %v1795, 4294901760
        %v1924 = vsub.f32 %v1795, %v1923
        %v1925 = vand.u32 %v1924, 4294901760
        %v1926 = vsub.f32 %v1924, %v1925
        %v1927 = vand.u32 %v1926, 4294901760
        %1928 = vmatpush1.msra.mxu0 %v1927
        %v1929 = vand.u32 %v1794, 4294901760
        %v1930 = vsub.f32 %v1794, %v1929
        %v1931 = vand.u32 %v1930, 4294901760
        %v1932 = vsub.f32 %v1930, %v1931
        %v1933 = vand.u32 %v1932, 4294901760
        %1934 = vmatprep.subr.mxu0 %v1933
        %v1935 = vand.u32 %v1793, 4294901760
        %v1936 = vsub.f32 %v1793, %v1935
        %v1937 = vand.u32 %v1936, 4294901760
        %v1938 = vsub.f32 %v1936, %v1937
        %v1939 = vand.u32 %v1938, 4294901760
        %1940 = vmatpush1.msra.mxu0 %v1939
        %v1941 = vand.u32 %v1792, 4294901760
        %v1942 = vsub.f32 %v1792, %v1941
        %v1943 = vand.u32 %v1942, 4294901760
        %v1944 = vsub.f32 %v1942, %v1943
        %v1945 = vand.u32 %v1944, 4294901760
        %1946 = vmatprep.subr.mxu0 %v1945
        %v1947 = vand.u32 %v1791, 4294901760
        %v1948 = vsub.f32 %v1791, %v1947
        %v1949 = vand.u32 %v1948, 4294901760
        %v1950 = vsub.f32 %v1948, %v1949
        %v1951 = vand.u32 %v1950, 4294901760
        %1952 = vmatpush1.msra.mxu0 %v1951
        %v1953 = vand.u32 %v1790, 4294901760
        %v1954 = vsub.f32 %v1790, %v1953
        %v1955 = vand.u32 %v1954, 4294901760
        %v1956 = vsub.f32 %v1954, %v1955
        %v1957 = vand.u32 %v1956, 4294901760
        %1958 = vmatprep.subr.mxu0 %v1957
        %v1959 = vand.u32 %v1789, 4294901760
        %v1960 = vsub.f32 %v1789, %v1959
        %v1961 = vand.u32 %v1960, 4294901760
        %v1962 = vsub.f32 %v1960, %v1961
        %v1963 = vand.u32 %v1962, 4294901760
        %1964 = vmatpush1.msra.mxu0 %v1963
        %v1965 = vand.u32 %v1788, 4294901760
        %v1966 = vsub.f32 %v1788, %v1965
        %v1967 = vand.u32 %v1966, 4294901760
        %v1968 = vsub.f32 %v1966, %v1967
        %v1969 = vand.u32 %v1968, 4294901760
        %1970 = vmatprep.subr.mxu0 %v1969
        %v1971 = vand.u32 %v1787, 4294901760
        %v1972 = vsub.f32 %v1787, %v1971
        %v1973 = vand.u32 %v1972, 4294901760
        %v1974 = vsub.f32 %v1972, %v1973
        %v1975 = vand.u32 %v1974, 4294901760
        %1976 = vmatpush1.msra.mxu0 %v1975
        %v1977 = vand.u32 %v1786, 4294901760
        %v1978 = vsub.f32 %v1786, %v1977
        %v1979 = vand.u32 %v1978, 4294901760
        %v1980 = vsub.f32 %v1978, %v1979
        %v1981 = vand.u32 %v1980, 4294901760
        %1982 = vmatprep.subr.mxu0 %v1981
        %v1983 = vand.u32 %v1785, 4294901760
        %v1984 = vsub.f32 %v1785, %v1983
        %v1985 = vand.u32 %v1984, 4294901760
        %v1986 = vsub.f32 %v1984, %v1985
        %v1987 = vand.u32 %v1986, 4294901760
        %1988 = vmatpush1.msra.mxu0 %v1987
        %v1989 = vand.u32 %v1784, 4294901760
        %v1990 = vsub.f32 %v1784, %v1989
        %v1991 = vand.u32 %v1990, 4294901760
        %v1992 = vsub.f32 %v1990, %v1991
        %v1993 = vand.u32 %v1992, 4294901760
        %1994 = vmatprep.subr.mxu0 %v1993
        %v1995 = vand.u32 %v1783, 4294901760
        %v1996 = vsub.f32 %v1783, %v1995
        %v1997 = vand.u32 %v1996, 4294901760
        %v1998 = vsub.f32 %v1996, %v1997
        %v1999 = vand.u32 %v1998, 4294901760
        %2000 = vmatpush1.msra.mxu0 %v1999
        %v2001 = vand.u32 %v1782, 4294901760
        %v2002 = vsub.f32 %v1782, %v2001
        %v2003 = vand.u32 %v2002, 4294901760
        %v2004 = vsub.f32 %v2002, %v2003
        %v2005 = vand.u32 %v2004, 4294901760
        %2006 = vmatprep.subr.mxu0 %v2005
        %v2007 = vand.u32 %v1781, 4294901760
        %v2008 = vsub.f32 %v1781, %v2007
        %v2009 = vand.u32 %v2008, 4294901760
        %v2010 = vsub.f32 %v2008, %v2009
        %v2011 = vand.u32 %v2010, 4294901760
        %2012 = vmatpush1.msra.mxu0 %v2011
        %v2013 = vand.u32 %v1780, 4294901760
        %v2014 = vsub.f32 %v1780, %v2013
        %v2015 = vand.u32 %v2014, 4294901760
        %v2016 = vsub.f32 %v2014, %v2015
        %v2017 = vand.u32 %v2016, 4294901760
        %2018 = vmatprep.subr.mxu0 %v2017
        %v2019 = vand.u32 %v1779, 4294901760
        %v2020 = vsub.f32 %v1779, %v2019
        %v2021 = vand.u32 %v2020, 4294901760
        %v2022 = vsub.f32 %v2020, %v2021
        %v2023 = vand.u32 %v2022, 4294901760
        %2024 = vmatpush1.msra.mxu0 %v2023
        %v2025 = vand.u32 %v1778, 4294901760
        %v2026 = vsub.f32 %v1778, %v2025
        %v2027 = vand.u32 %v2026, 4294901760
        %v2028 = vsub.f32 %v2026, %v2027
        %v2029 = vand.u32 %v2028, 4294901760
        %2030 = vmatprep.subr.mxu0 %v2029
        %v2031 = vand.u32 %v1777, 4294901760
        %v2032 = vsub.f32 %v1777, %v2031
        %v2033 = vand.u32 %v2032, 4294901760
        %v2034 = vsub.f32 %v2032, %v2033
        %v2035 = vand.u32 %v2034, 4294901760
        %2036 = vmatpush1.msra.mxu0 %v2035
        %v2037 = vand.u32 %v1776, 4294901760
        %v2038 = vsub.f32 %v1776, %v2037
        %v2039 = vand.u32 %v2038, 4294901760
        %v2040 = vsub.f32 %v2038, %v2039
        %v2041 = vand.u32 %v2040, 4294901760
        %2042 = vmatprep.subr.mxu0 %v2041
        %v2043 = vand.u32 %v1775, 4294901760
        %v2044 = vsub.f32 %v1775, %v2043
        %v2045 = vand.u32 %v2044, 4294901760
        %v2046 = vsub.f32 %v2044, %v2045
        %v2047 = vand.u32 %v2046, 4294901760
        %2048 = vmatpush1.msra.mxu0 %v2047
        %v2049 = vand.u32 %v1774, 4294901760
        %v2050 = vsub.f32 %v1774, %v2049
        %v2051 = vand.u32 %v2050, 4294901760
        %v2052 = vsub.f32 %v2050, %v2051
        %v2053 = vand.u32 %v2052, 4294901760
        %2054 = vmatprep.subr.mxu0 %v2053
        %v2055 = vand.u32 %v1773, 4294901760
        %v2056 = vsub.f32 %v1773, %v2055
        %v2057 = vand.u32 %v2056, 4294901760
        %v2058 = vsub.f32 %v2056, %v2057
        %v2059 = vand.u32 %v2058, 4294901760
        %2060 = vmatpush1.msra.mxu0 %v2059
        %v2061 = vand.u32 %v1772, 4294901760
        %v2062 = vsub.f32 %v1772, %v2061
        %v2063 = vand.u32 %v2062, 4294901760
        %v2064 = vsub.f32 %v2062, %v2063
        %v2065 = vand.u32 %v2064, 4294901760
        %2066 = vmatprep.subr.mxu0 %v2065
        %v2067 = vand.u32 %v1771, 4294901760
        %v2068 = vsub.f32 %v1771, %v2067
        %v2069 = vand.u32 %v2068, 4294901760
        %v2070 = vsub.f32 %v2068, %v2069
        %v2071 = vand.u32 %v2070, 4294901760
        %2072 = vmatpush1.msra.mxu0 %v2071
        %v2073 = vand.u32 %v1770, 4294901760
        %v2074 = vsub.f32 %v1770, %v2073
        %v2075 = vand.u32 %v2074, 4294901760
        %v2076 = vsub.f32 %v2074, %v2075
        %v2077 = vand.u32 %v2076, 4294901760
        %2078 = vmatprep.subr.mxu0 %v2077
        %v2079 = vand.u32 %v1769, 4294901760
        %v2080 = vsub.f32 %v1769, %v2079
        %v2081 = vand.u32 %v2080, 4294901760
        %v2082 = vsub.f32 %v2080, %v2081
        %v2083 = vand.u32 %v2082, 4294901760
        %2084 = vmatpush1.msra.mxu0 %v2083
        %v2085 = vand.u32 %v1768, 4294901760
        %v2086 = vsub.f32 %v1768, %v2085
        %v2087 = vand.u32 %v2086, 4294901760
        %v2088 = vsub.f32 %v2086, %v2087
        %v2089 = vand.u32 %v2088, 4294901760
        %2090 = vmatprep.subr.mxu0 %v2089
        %v2091 = vand.u32 %v1767, 4294901760
        %v2092 = vsub.f32 %v1767, %v2091
        %v2093 = vand.u32 %v2092, 4294901760
        %v2094 = vsub.f32 %v2092, %v2093
        %v2095 = vand.u32 %v2094, 4294901760
        %2096 = vmatpush1.msra.mxu0 %v2095
        %v2097 = vand.u32 %v1766, 4294901760
        %v2098 = vsub.f32 %v1766, %v2097
        %v2099 = vand.u32 %v2098, 4294901760
        %v2100 = vsub.f32 %v2098, %v2099
        %v2101 = vand.u32 %v2100, 4294901760
        %2102 = vmatprep.subr.mxu0 %v2101
        %v2103 = vand.u32 %v1765, 4294901760
        %v2104 = vsub.f32 %v1765, %v2103
        %v2105 = vand.u32 %v2104, 4294901760
        %v2106 = vsub.f32 %v2104, %v2105
        %v2107 = vand.u32 %v2106, 4294901760
        %2108 = vmatpush1.msra.mxu0 %v2107
        %2109 = vmatprep.subr.mxu0 0.0
        %2110 = vmatpush2.msra.mxu0 0.0
        %2111 = vmatprep.subr.mxu0 0.0
        %2112 = vmatpush2.msra.mxu0 0.0
        %2113 = vmatprep.subr.mxu0 0.0
        %2114 = vmatpush2.msra.mxu0 0.0
        %2115 = vmatprep.subr.mxu0 0.0
        %2116 = vmatpush2.msra.mxu0 0.0
        %2117 = vmatprep.subr.mxu0 0.0
        %2118 = vmatpush2.msra.mxu0 0.0
        %2119 = vmatprep.subr.mxu0 0.0
        %2120 = vmatpush2.msra.mxu0 0.0
        %2121 = vmatprep.subr.mxu0 0.0
        %2122 = vmatpush2.msra.mxu0 0.0
        %2123 = vmatprep.subr.mxu0 0.0
        %2124 = vmatpush2.msra.mxu0 0.0
        %2125 = vmatprep.subr.mxu0 0.0
        %2126 = vmatpush2.msra.mxu0 0.0
        %2127 = vmatprep.subr.mxu0 0.0
        %2128 = vmatpush2.msra.mxu0 0.0
        %2129 = vmatprep.subr.mxu0 0.0
        %2130 = vmatpush2.msra.mxu0 0.0
        %2131 = vmatprep.subr.mxu0 0.0
        %2132 = vmatpush2.msra.mxu0 0.0
        %2133 = vmatprep.subr.mxu0 0.0
        %2134 = vmatpush2.msra.mxu0 0.0
        %2135 = vmatprep.subr.mxu0 0.0
        %2136 = vmatpush2.msra.mxu0 0.0
        %2137 = vmatprep.subr.mxu0 0.0
        %2138 = vmatpush2.msra.mxu0 0.0
        %2139 = vmatprep.subr.mxu0 0.0
        %2140 = vmatpush2.msra.mxu0 0.0
        %2141 = vmatprep.mubr.f32.mxu0 0.0
        %v2142 = vand.u32 %v1764, 4294901760
        %2143 = vmatmul.mubr.f32.gmra.mxu0 %v2142
        %v2144 = vpop.f32.mrf.mxu0
        %v2145 = vadd.f32 %v1913, %v2144
        %v2146 = vpop.f32.mrf.mxu0
        %v2147 = vadd.f32 %v1915, %v2146
        %2148 = vdwg.mxu0
        %v2149 = vand.u32 %v1796, 4294901760
        %v2150 = vsub.f32 %v1796, %v2149
        %2151 = vmatprep.subr.mxu0 %v2150
        %v2152 = vand.u32 %v1795, 4294901760
        %v2153 = vsub.f32 %v1795, %v2152
        %2154 = vmatpush1.msra.mxu0 %v2153
        %v2155 = vand.u32 %v1794, 4294901760
        %v2156 = vsub.f32 %v1794, %v2155
        %2157 = vmatprep.subr.mxu0 %v2156
        %v2158 = vand.u32 %v1793, 4294901760
        %v2159 = vsub.f32 %v1793, %v2158
        %2160 = vmatpush1.msra.mxu0 %v2159
        %v2161 = vand.u32 %v1792, 4294901760
        %v2162 = vsub.f32 %v1792, %v2161
        %2163 = vmatprep.subr.mxu0 %v2162
        %v2164 = vand.u32 %v1791, 4294901760
        %v2165 = vsub.f32 %v1791, %v2164
        %2166 = vmatpush1.msra.mxu0 %v2165
        %v2167 = vand.u32 %v1790, 4294901760
        %v2168 = vsub.f32 %v1790, %v2167
        %2169 = vmatprep.subr.mxu0 %v2168
        %v2170 = vand.u32 %v1789, 4294901760
        %v2171 = vsub.f32 %v1789, %v2170
        %2172 = vmatpush1.msra.mxu0 %v2171
        %v2173 = vand.u32 %v1788, 4294901760
        %v2174 = vsub.f32 %v1788, %v2173
        %2175 = vmatprep.subr.mxu0 %v2174
        %v2176 = vand.u32 %v1787, 4294901760
        %v2177 = vsub.f32 %v1787, %v2176
        %2178 = vmatpush1.msra.mxu0 %v2177
        %v2179 = vand.u32 %v1786, 4294901760
        %v2180 = vsub.f32 %v1786, %v2179
        %2181 = vmatprep.subr.mxu0 %v2180
        %v2182 = vand.u32 %v1785, 4294901760
        %v2183 = vsub.f32 %v1785, %v2182
        %2184 = vmatpush1.msra.mxu0 %v2183
        %v2185 = vand.u32 %v1784, 4294901760
        %v2186 = vsub.f32 %v1784, %v2185
        %2187 = vmatprep.subr.mxu0 %v2186
        %v2188 = vand.u32 %v1783, 4294901760
        %v2189 = vsub.f32 %v1783, %v2188
        %2190 = vmatpush1.msra.mxu0 %v2189
        %v2191 = vand.u32 %v1782, 4294901760
        %v2192 = vsub.f32 %v1782, %v2191
        %2193 = vmatprep.subr.mxu0 %v2192
        %v2194 = vand.u32 %v1781, 4294901760
        %v2195 = vsub.f32 %v1781, %v2194
        %2196 = vmatpush1.msra.mxu0 %v2195
        %v2197 = vand.u32 %v1780, 4294901760
        %v2198 = vsub.f32 %v1780, %v2197
        %2199 = vmatprep.subr.mxu0 %v2198
        %v2200 = vand.u32 %v1779, 4294901760
        %v2201 = vsub.f32 %v1779, %v2200
        %2202 = vmatpush1.msra.mxu0 %v2201
        %v2203 = vand.u32 %v1778, 4294901760
        %v2204 = vsub.f32 %v1778, %v2203
        %2205 = vmatprep.subr.mxu0 %v2204
        %v2206 = vand.u32 %v1777, 4294901760
        %v2207 = vsub.f32 %v1777, %v2206
        %2208 = vmatpush1.msra.mxu0 %v2207
        %v2209 = vand.u32 %v1776, 4294901760
        %v2210 = vsub.f32 %v1776, %v2209
        %2211 = vmatprep.subr.mxu0 %v2210
        %v2212 = vand.u32 %v1775, 4294901760
        %v2213 = vsub.f32 %v1775, %v2212
        %2214 = vmatpush1.msra.mxu0 %v2213
        %v2215 = vand.u32 %v1774, 4294901760
        %v2216 = vsub.f32 %v1774, %v2215
        %2217 = vmatprep.subr.mxu0 %v2216
        %v2218 = vand.u32 %v1773, 4294901760
        %v2219 = vsub.f32 %v1773, %v2218
        %2220 = vmatpush1.msra.mxu0 %v2219
        %v2221 = vand.u32 %v1772, 4294901760
        %v2222 = vsub.f32 %v1772, %v2221
        %2223 = vmatprep.subr.mxu0 %v2222
        %v2224 = vand.u32 %v1771, 4294901760
        %v2225 = vsub.f32 %v1771, %v2224
        %2226 = vmatpush1.msra.mxu0 %v2225
        %v2227 = vand.u32 %v1770, 4294901760
        %v2228 = vsub.f32 %v1770, %v2227
        %2229 = vmatprep.subr.mxu0 %v2228
        %v2230 = vand.u32 %v1769, 4294901760
        %v2231 = vsub.f32 %v1769, %v2230
        %2232 = vmatpush1.msra.mxu0 %v2231
        %v2233 = vand.u32 %v1768, 4294901760
        %v2234 = vsub.f32 %v1768, %v2233
        %2235 = vmatprep.subr.mxu0 %v2234
        %v2236 = vand.u32 %v1767, 4294901760
        %v2237 = vsub.f32 %v1767, %v2236
        %2238 = vmatpush1.msra.mxu0 %v2237
        %v2239 = vand.u32 %v1766, 4294901760
        %v2240 = vsub.f32 %v1766, %v2239
        %2241 = vmatprep.subr.mxu0 %v2240
        %v2242 = vand.u32 %v1765, 4294901760
        %v2243 = vsub.f32 %v1765, %v2242
        %2244 = vmatpush1.msra.mxu0 %v2243
        %2245 = vmatprep.subr.mxu0 0.0
        %2246 = vmatpush2.msra.mxu0 0.0
        %2247 = vmatprep.subr.mxu0 0.0
        %2248 = vmatpush2.msra.mxu0 0.0
        %2249 = vmatprep.subr.mxu0 0.0
        %2250 = vmatpush2.msra.mxu0 0.0
        %2251 = vmatprep.subr.mxu0 0.0
        %2252 = vmatpush2.msra.mxu0 0.0
        %2253 = vmatprep.subr.mxu0 0.0
        %2254 = vmatpush2.msra.mxu0 0.0
        %2255 = vmatprep.subr.mxu0 0.0
        %2256 = vmatpush2.msra.mxu0 0.0
        %2257 = vmatprep.subr.mxu0 0.0
        %2258 = vmatpush2.msra.mxu0 0.0
        %2259 = vmatprep.subr.mxu0 0.0
        %2260 = vmatpush2.msra.mxu0 0.0
        %2261 = vmatprep.subr.mxu0 0.0
        %2262 = vmatpush2.msra.mxu0 0.0
        %2263 = vmatprep.subr.mxu0 0.0
        %2264 = vmatpush2.msra.mxu0 0.0
        %2265 = vmatprep.subr.mxu0 0.0
        %2266 = vmatpush2.msra.mxu0 0.0
        %2267 = vmatprep.subr.mxu0 0.0
        %2268 = vmatpush2.msra.mxu0 0.0
        %2269 = vmatprep.subr.mxu0 0.0
        %2270 = vmatpush2.msra.mxu0 0.0
        %2271 = vmatprep.subr.mxu0 0.0
        %2272 = vmatpush2.msra.mxu0 0.0
        %2273 = vmatprep.subr.mxu0 0.0
        %2274 = vmatpush2.msra.mxu0 0.0
        %2275 = vmatprep.subr.mxu0 0.0
        %2276 = vmatpush2.msra.mxu0 0.0
        %2277 = vmatprep.mubr.f32.mxu0 0.0
        %v2278 = vand.u32 %v1764, 4294901760
        %v2279 = vsub.f32 %v1764, %v2278
        %2280 = vmatmul.mubr.f32.gmra.mxu0 %v2279
        %v2281 = vpop.f32.mrf.mxu0
        %v2282 = vadd.f32 %v2145, %v2281
        %v2283 = vpop.f32.mrf.mxu0
        %v2284 = vadd.f32 %v2147, %v2283
        %2285 = vdwg.mxu0
        %v2286 = vand.u32 %v1796, 4294901760
        %2287 = vmatprep.subr.mxu0 %v2286
        %v2288 = vand.u32 %v1795, 4294901760
        %2289 = vmatpush1.msra.mxu0 %v2288
        %v2290 = vand.u32 %v1794, 4294901760
        %2291 = vmatprep.subr.mxu0 %v2290
        %v2292 = vand.u32 %v1793, 4294901760
        %2293 = vmatpush1.msra.mxu0 %v2292
        %v2294 = vand.u32 %v1792, 4294901760
        %2295 = vmatprep.subr.mxu0 %v2294
        %v2296 = vand.u32 %v1791, 4294901760
        %2297 = vmatpush1.msra.mxu0 %v2296
        %v2298 = vand.u32 %v1790, 4294901760
        %2299 = vmatprep.subr.mxu0 %v2298
        %v2300 = vand.u32 %v1789, 4294901760
        %2301 = vmatpush1.msra.mxu0 %v2300
        %v2302 = vand.u32 %v1788, 4294901760
        %2303 = vmatprep.subr.mxu0 %v2302
        %v2304 = vand.u32 %v1787, 4294901760
        %2305 = vmatpush1.msra.mxu0 %v2304
        %v2306 = vand.u32 %v1786, 4294901760
        %2307 = vmatprep.subr.mxu0 %v2306
        %v2308 = vand.u32 %v1785, 4294901760
        %2309 = vmatpush1.msra.mxu0 %v2308
        %v2310 = vand.u32 %v1784, 4294901760
        %2311 = vmatprep.subr.mxu0 %v2310
        %v2312 = vand.u32 %v1783, 4294901760
        %2313 = vmatpush1.msra.mxu0 %v2312
        %v2314 = vand.u32 %v1782, 4294901760
        %2315 = vmatprep.subr.mxu0 %v2314
        %v2316 = vand.u32 %v1781, 4294901760
        %2317 = vmatpush1.msra.mxu0 %v2316
        %v2318 = vand.u32 %v1780, 4294901760
        %2319 = vmatprep.subr.mxu0 %v2318
        %v2320 = vand.u32 %v1779, 4294901760
        %2321 = vmatpush1.msra.mxu0 %v2320
        %v2322 = vand.u32 %v1778, 4294901760
        %2323 = vmatprep.subr.mxu0 %v2322
        %v2324 = vand.u32 %v1777, 4294901760
        %2325 = vmatpush1.msra.mxu0 %v2324
        %v2326 = vand.u32 %v1776, 4294901760
        %2327 = vmatprep.subr.mxu0 %v2326
        %v2328 = vand.u32 %v1775, 4294901760
        %2329 = vmatpush1.msra.mxu0 %v2328
        %v2330 = vand.u32 %v1774, 4294901760
        %2331 = vmatprep.subr.mxu0 %v2330
        %v2332 = vand.u32 %v1773, 4294901760
        %2333 = vmatpush1.msra.mxu0 %v2332
        %v2334 = vand.u32 %v1772, 4294901760
        %2335 = vmatprep.subr.mxu0 %v2334
        %v2336 = vand.u32 %v1771, 4294901760
        %2337 = vmatpush1.msra.mxu0 %v2336
        %v2338 = vand.u32 %v1770, 4294901760
        %2339 = vmatprep.subr.mxu0 %v2338
        %v2340 = vand.u32 %v1769, 4294901760
        %2341 = vmatpush1.msra.mxu0 %v2340
        %v2342 = vand.u32 %v1768, 4294901760
        %2343 = vmatprep.subr.mxu0 %v2342
        %v2344 = vand.u32 %v1767, 4294901760
        %2345 = vmatpush1.msra.mxu0 %v2344
        %v2346 = vand.u32 %v1766, 4294901760
        %2347 = vmatprep.subr.mxu0 %v2346
        %v2348 = vand.u32 %v1765, 4294901760
        %2349 = vmatpush1.msra.mxu0 %v2348
        %2350 = vmatprep.subr.mxu0 0.0
        %2351 = vmatpush2.msra.mxu0 0.0
        %2352 = vmatprep.subr.mxu0 0.0
        %2353 = vmatpush2.msra.mxu0 0.0
        %2354 = vmatprep.subr.mxu0 0.0
        %2355 = vmatpush2.msra.mxu0 0.0
        %2356 = vmatprep.subr.mxu0 0.0
        %2357 = vmatpush2.msra.mxu0 0.0
        %2358 = vmatprep.subr.mxu0 0.0
        %2359 = vmatpush2.msra.mxu0 0.0
        %2360 = vmatprep.subr.mxu0 0.0
        %2361 = vmatpush2.msra.mxu0 0.0
        %2362 = vmatprep.subr.mxu0 0.0
        %2363 = vmatpush2.msra.mxu0 0.0
        %2364 = vmatprep.subr.mxu0 0.0
        %2365 = vmatpush2.msra.mxu0 0.0
        %2366 = vmatprep.subr.mxu0 0.0
        %2367 = vmatpush2.msra.mxu0 0.0
        %2368 = vmatprep.subr.mxu0 0.0
        %2369 = vmatpush2.msra.mxu0 0.0
        %2370 = vmatprep.subr.mxu0 0.0
        %2371 = vmatpush2.msra.mxu0 0.0
        %2372 = vmatprep.subr.mxu0 0.0
        %2373 = vmatpush2.msra.mxu0 0.0
        %2374 = vmatprep.subr.mxu0 0.0
        %2375 = vmatpush2.msra.mxu0 0.0
        %2376 = vmatprep.subr.mxu0 0.0
        %2377 = vmatpush2.msra.mxu0 0.0
        %2378 = vmatprep.subr.mxu0 0.0
        %2379 = vmatpush2.msra.mxu0 0.0
        %2380 = vmatprep.subr.mxu0 0.0
        %2381 = vmatpush2.msra.mxu0 0.0
        %2382 = vmatprep.mubr.f32.mxu0 0.0
        %v2383 = vand.u32 %v1764, 4294901760
        %v2384 = vsub.f32 %v1764, %v2383
        %v2385 = vand.u32 %v2384, 4294901760
        %2386 = vmatmul.mubr.f32.gmra.mxu0 %v2385
        %v2387 = vpop.f32.mrf.mxu0
        %v2388 = vadd.f32 %v2282, %v2387
        %v2389 = vpop.f32.mrf.mxu0
        %v2390 = vadd.f32 %v2284, %v2389
        %2391 = vdwg.mxu0
        %v2392 = vand.u32 %v1796, 4294901760
        %v2393 = vsub.f32 %v1796, %v2392
        %v2394 = vand.u32 %v2393, 4294901760
        %2395 = vmatprep.subr.mxu0 %v2394
        %v2396 = vand.u32 %v1795, 4294901760
        %v2397 = vsub.f32 %v1795, %v2396
        %v2398 = vand.u32 %v2397, 4294901760
        %2399 = vmatpush1.msra.mxu0 %v2398
        %v2400 = vand.u32 %v1794, 4294901760
        %v2401 = vsub.f32 %v1794, %v2400
        %v2402 = vand.u32 %v2401, 4294901760
        %2403 = vmatprep.subr.mxu0 %v2402
        %v2404 = vand.u32 %v1793, 4294901760
        %v2405 = vsub.f32 %v1793, %v2404
        %v2406 = vand.u32 %v2405, 4294901760
        %2407 = vmatpush1.msra.mxu0 %v2406
        %v2408 = vand.u32 %v1792, 4294901760
        %v2409 = vsub.f32 %v1792, %v2408
        %v2410 = vand.u32 %v2409, 4294901760
        %2411 = vmatprep.subr.mxu0 %v2410
        %v2412 = vand.u32 %v1791, 4294901760
        %v2413 = vsub.f32 %v1791, %v2412
        %v2414 = vand.u32 %v2413, 4294901760
        %2415 = vmatpush1.msra.mxu0 %v2414
        %v2416 = vand.u32 %v1790, 4294901760
        %v2417 = vsub.f32 %v1790, %v2416
        %v2418 = vand.u32 %v2417, 4294901760
        %2419 = vmatprep.subr.mxu0 %v2418
        %v2420 = vand.u32 %v1789, 4294901760
        %v2421 = vsub.f32 %v1789, %v2420
        %v2422 = vand.u32 %v2421, 4294901760
        %2423 = vmatpush1.msra.mxu0 %v2422
        %v2424 = vand.u32 %v1788, 4294901760
        %v2425 = vsub.f32 %v1788, %v2424
        %v2426 = vand.u32 %v2425, 4294901760
        %2427 = vmatprep.subr.mxu0 %v2426
        %v2428 = vand.u32 %v1787, 4294901760
        %v2429 = vsub.f32 %v1787, %v2428
        %v2430 = vand.u32 %v2429, 4294901760
        %2431 = vmatpush1.msra.mxu0 %v2430
        %v2432 = vand.u32 %v1786, 4294901760
        %v2433 = vsub.f32 %v1786, %v2432
        %v2434 = vand.u32 %v2433, 4294901760
        %2435 = vmatprep.subr.mxu0 %v2434
        %v2436 = vand.u32 %v1785, 4294901760
        %v2437 = vsub.f32 %v1785, %v2436
        %v2438 = vand.u32 %v2437, 4294901760
        %2439 = vmatpush1.msra.mxu0 %v2438
        %v2440 = vand.u32 %v1784, 4294901760
        %v2441 = vsub.f32 %v1784, %v2440
        %v2442 = vand.u32 %v2441, 4294901760
        %2443 = vmatprep.subr.mxu0 %v2442
        %v2444 = vand.u32 %v1783, 4294901760
        %v2445 = vsub.f32 %v1783, %v2444
        %v2446 = vand.u32 %v2445, 4294901760
        %2447 = vmatpush1.msra.mxu0 %v2446
        %v2448 = vand.u32 %v1782, 4294901760
        %v2449 = vsub.f32 %v1782, %v2448
        %v2450 = vand.u32 %v2449, 4294901760
        %2451 = vmatprep.subr.mxu0 %v2450
        %v2452 = vand.u32 %v1781, 4294901760
        %v2453 = vsub.f32 %v1781, %v2452
        %v2454 = vand.u32 %v2453, 4294901760
        %2455 = vmatpush1.msra.mxu0 %v2454
        %v2456 = vand.u32 %v1780, 4294901760
        %v2457 = vsub.f32 %v1780, %v2456
        %v2458 = vand.u32 %v2457, 4294901760
        %2459 = vmatprep.subr.mxu0 %v2458
        %v2460 = vand.u32 %v1779, 4294901760
        %v2461 = vsub.f32 %v1779, %v2460
        %v2462 = vand.u32 %v2461, 4294901760
        %2463 = vmatpush1.msra.mxu0 %v2462
        %v2464 = vand.u32 %v1778, 4294901760
        %v2465 = vsub.f32 %v1778, %v2464
        %v2466 = vand.u32 %v2465, 4294901760
        %2467 = vmatprep.subr.mxu0 %v2466
        %v2468 = vand.u32 %v1777, 4294901760
        %v2469 = vsub.f32 %v1777, %v2468
        %v2470 = vand.u32 %v2469, 4294901760
        %2471 = vmatpush1.msra.mxu0 %v2470
        %v2472 = vand.u32 %v1776, 4294901760
        %v2473 = vsub.f32 %v1776, %v2472
        %v2474 = vand.u32 %v2473, 4294901760
        %2475 = vmatprep.subr.mxu0 %v2474
        %v2476 = vand.u32 %v1775, 4294901760
        %v2477 = vsub.f32 %v1775, %v2476
        %v2478 = vand.u32 %v2477, 4294901760
        %2479 = vmatpush1.msra.mxu0 %v2478
        %v2480 = vand.u32 %v1774, 4294901760
        %v2481 = vsub.f32 %v1774, %v2480
        %v2482 = vand.u32 %v2481, 4294901760
        %2483 = vmatprep.subr.mxu0 %v2482
        %v2484 = vand.u32 %v1773, 4294901760
        %v2485 = vsub.f32 %v1773, %v2484
        %v2486 = vand.u32 %v2485, 4294901760
        %2487 = vmatpush1.msra.mxu0 %v2486
        %v2488 = vand.u32 %v1772, 4294901760
        %v2489 = vsub.f32 %v1772, %v2488
        %v2490 = vand.u32 %v2489, 4294901760
        %2491 = vmatprep.subr.mxu0 %v2490
        %v2492 = vand.u32 %v1771, 4294901760
        %v2493 = vsub.f32 %v1771, %v2492
        %v2494 = vand.u32 %v2493, 4294901760
        %2495 = vmatpush1.msra.mxu0 %v2494
        %v2496 = vand.u32 %v1770, 4294901760
        %v2497 = vsub.f32 %v1770, %v2496
        %v2498 = vand.u32 %v2497, 4294901760
        %2499 = vmatprep.subr.mxu0 %v2498
        %v2500 = vand.u32 %v1769, 4294901760
        %v2501 = vsub.f32 %v1769, %v2500
        %v2502 = vand.u32 %v2501, 4294901760
        %2503 = vmatpush1.msra.mxu0 %v2502
        %v2504 = vand.u32 %v1768, 4294901760
        %v2505 = vsub.f32 %v1768, %v2504
        %v2506 = vand.u32 %v2505, 4294901760
        %2507 = vmatprep.subr.mxu0 %v2506
        %v2508 = vand.u32 %v1767, 4294901760
        %v2509 = vsub.f32 %v1767, %v2508
        %v2510 = vand.u32 %v2509, 4294901760
        %2511 = vmatpush1.msra.mxu0 %v2510
        %v2512 = vand.u32 %v1766, 4294901760
        %v2513 = vsub.f32 %v1766, %v2512
        %v2514 = vand.u32 %v2513, 4294901760
        %2515 = vmatprep.subr.mxu0 %v2514
        %v2516 = vand.u32 %v1765, 4294901760
        %v2517 = vsub.f32 %v1765, %v2516
        %v2518 = vand.u32 %v2517, 4294901760
        %2519 = vmatpush1.msra.mxu0 %v2518
        %2520 = vmatprep.subr.mxu0 0.0
        %2521 = vmatpush2.msra.mxu0 0.0
        %2522 = vmatprep.subr.mxu0 0.0
        %2523 = vmatpush2.msra.mxu0 0.0
        %2524 = vmatprep.subr.mxu0 0.0
        %2525 = vmatpush2.msra.mxu0 0.0
        %2526 = vmatprep.subr.mxu0 0.0
        %2527 = vmatpush2.msra.mxu0 0.0
        %2528 = vmatprep.subr.mxu0 0.0
        %2529 = vmatpush2.msra.mxu0 0.0
        %2530 = vmatprep.subr.mxu0 0.0
        %2531 = vmatpush2.msra.mxu0 0.0
        %2532 = vmatprep.subr.mxu0 0.0
        %2533 = vmatpush2.msra.mxu0 0.0
        %2534 = vmatprep.subr.mxu0 0.0
        %2535 = vmatpush2.msra.mxu0 0.0
        %2536 = vmatprep.subr.mxu0 0.0
        %2537 = vmatpush2.msra.mxu0 0.0
        %2538 = vmatprep.subr.mxu0 0.0
        %2539 = vmatpush2.msra.mxu0 0.0
        %2540 = vmatprep.subr.mxu0 0.0
        %2541 = vmatpush2.msra.mxu0 0.0
        %2542 = vmatprep.subr.mxu0 0.0
        %2543 = vmatpush2.msra.mxu0 0.0
        %2544 = vmatprep.subr.mxu0 0.0
        %2545 = vmatpush2.msra.mxu0 0.0
        %2546 = vmatprep.subr.mxu0 0.0
        %2547 = vmatpush2.msra.mxu0 0.0
        %2548 = vmatprep.subr.mxu0 0.0
        %2549 = vmatpush2.msra.mxu0 0.0
        %2550 = vmatprep.subr.mxu0 0.0
        %2551 = vmatpush2.msra.mxu0 0.0
        %2552 = vmatprep.mubr.f32.mxu0 0.0
        %v2553 = vand.u32 %v1764, 4294901760
        %2554 = vmatmul.mubr.f32.gmra.mxu0 %v2553
        %v2555 = vpop.f32.mrf.mxu0
        %v2556 = vadd.f32 %v2388, %v2555
        %v2557 = vpop.f32.mrf.mxu0
        %v2558 = vadd.f32 %v2390, %v2557
        %2559 = vdwg.mxu0
        %v2560 = vand.u32 %v1796, 4294901760
        %2561 = vmatprep.subr.mxu0 %v2560
        %v2562 = vand.u32 %v1795, 4294901760
        %2563 = vmatpush1.msra.mxu0 %v2562
        %v2564 = vand.u32 %v1794, 4294901760
        %2565 = vmatprep.subr.mxu0 %v2564
        %v2566 = vand.u32 %v1793, 4294901760
        %2567 = vmatpush1.msra.mxu0 %v2566
        %v2568 = vand.u32 %v1792, 4294901760
        %2569 = vmatprep.subr.mxu0 %v2568
        %v2570 = vand.u32 %v1791, 4294901760
        %2571 = vmatpush1.msra.mxu0 %v2570
        %v2572 = vand.u32 %v1790, 4294901760
        %2573 = vmatprep.subr.mxu0 %v2572
        %v2574 = vand.u32 %v1789, 4294901760
        %2575 = vmatpush1.msra.mxu0 %v2574
        %v2576 = vand.u32 %v1788, 4294901760
        %2577 = vmatprep.subr.mxu0 %v2576
        %v2578 = vand.u32 %v1787, 4294901760
        %2579 = vmatpush1.msra.mxu0 %v2578
        %v2580 = vand.u32 %v1786, 4294901760
        %2581 = vmatprep.subr.mxu0 %v2580
        %v2582 = vand.u32 %v1785, 4294901760
        %2583 = vmatpush1.msra.mxu0 %v2582
        %v2584 = vand.u32 %v1784, 4294901760
        %2585 = vmatprep.subr.mxu0 %v2584
        %v2586 = vand.u32 %v1783, 4294901760
        %2587 = vmatpush1.msra.mxu0 %v2586
        %v2588 = vand.u32 %v1782, 4294901760
        %2589 = vmatprep.subr.mxu0 %v2588
        %v2590 = vand.u32 %v1781, 4294901760
        %2591 = vmatpush1.msra.mxu0 %v2590
        %v2592 = vand.u32 %v1780, 4294901760
        %2593 = vmatprep.subr.mxu0 %v2592
        %v2594 = vand.u32 %v1779, 4294901760
        %2595 = vmatpush1.msra.mxu0 %v2594
        %v2596 = vand.u32 %v1778, 4294901760
        %2597 = vmatprep.subr.mxu0 %v2596
        %v2598 = vand.u32 %v1777, 4294901760
        %2599 = vmatpush1.msra.mxu0 %v2598
        %v2600 = vand.u32 %v1776, 4294901760
        %2601 = vmatprep.subr.mxu0 %v2600
        %v2602 = vand.u32 %v1775, 4294901760
        %2603 = vmatpush1.msra.mxu0 %v2602
        %v2604 = vand.u32 %v1774, 4294901760
        %2605 = vmatprep.subr.mxu0 %v2604
        %v2606 = vand.u32 %v1773, 4294901760
        %2607 = vmatpush1.msra.mxu0 %v2606
        %v2608 = vand.u32 %v1772, 4294901760
        %2609 = vmatprep.subr.mxu0 %v2608
        %v2610 = vand.u32 %v1771, 4294901760
        %2611 = vmatpush1.msra.mxu0 %v2610
        %v2612 = vand.u32 %v1770, 4294901760
        %2613 = vmatprep.subr.mxu0 %v2612
        %v2614 = vand.u32 %v1769, 4294901760
        %2615 = vmatpush1.msra.mxu0 %v2614
        %v2616 = vand.u32 %v1768, 4294901760
        %2617 = vmatprep.subr.mxu0 %v2616
        %v2618 = vand.u32 %v1767, 4294901760
        %2619 = vmatpush1.msra.mxu0 %v2618
        %v2620 = vand.u32 %v1766, 4294901760
        %2621 = vmatprep.subr.mxu0 %v2620
        %v2622 = vand.u32 %v1765, 4294901760
        %2623 = vmatpush1.msra.mxu0 %v2622
        %2624 = vmatprep.subr.mxu0 0.0
        %2625 = vmatpush2.msra.mxu0 0.0
        %2626 = vmatprep.subr.mxu0 0.0
        %2627 = vmatpush2.msra.mxu0 0.0
        %2628 = vmatprep.subr.mxu0 0.0
        %2629 = vmatpush2.msra.mxu0 0.0
        %2630 = vmatprep.subr.mxu0 0.0
        %2631 = vmatpush2.msra.mxu0 0.0
        %2632 = vmatprep.subr.mxu0 0.0
        %2633 = vmatpush2.msra.mxu0 0.0
        %2634 = vmatprep.subr.mxu0 0.0
        %2635 = vmatpush2.msra.mxu0 0.0
        %2636 = vmatprep.subr.mxu0 0.0
        %2637 = vmatpush2.msra.mxu0 0.0
        %2638 = vmatprep.subr.mxu0 0.0
        %2639 = vmatpush2.msra.mxu0 0.0
        %2640 = vmatprep.subr.mxu0 0.0
        %2641 = vmatpush2.msra.mxu0 0.0
        %2642 = vmatprep.subr.mxu0 0.0
        %2643 = vmatpush2.msra.mxu0 0.0
        %2644 = vmatprep.subr.mxu0 0.0
        %2645 = vmatpush2.msra.mxu0 0.0
        %2646 = vmatprep.subr.mxu0 0.0
        %2647 = vmatpush2.msra.mxu0 0.0
        %2648 = vmatprep.subr.mxu0 0.0
        %2649 = vmatpush2.msra.mxu0 0.0
        %2650 = vmatprep.subr.mxu0 0.0
        %2651 = vmatpush2.msra.mxu0 0.0
        %2652 = vmatprep.subr.mxu0 0.0
        %2653 = vmatpush2.msra.mxu0 0.0
        %2654 = vmatprep.subr.mxu0 0.0
        %2655 = vmatpush2.msra.mxu0 0.0
        %2656 = vmatprep.mubr.f32.mxu0 0.0
        %v2657 = vand.u32 %v1764, 4294901760
        %2658 = vmatmul.mubr.f32.gmra.mxu0 %v2657
        %v2659 = vpop.f32.mrf.mxu0
        %v2660 = vadd.f32 %v2556, %v2659
        %v2661 = vpop.f32.mrf.mxu0
        %v2662 = vadd.f32 %v2558, %v2661
        %2663 = vdwg.mxu0
        %v2664 = vadd.f32 %v2660, %v2662
        %2665 = vadd.xlane.f32.xlu0 %v2664
        %v2666 = vpop.xlane.xlu0 %2665
        %v2667 = vrcp.pop 256.0
        %v2668 = vmul.f32 %v2666, %v2667
        %v2669 = vsub.f32 %v2660, %v2668
        %v2670 = vsub.f32 %v2662, %v2668
        %v2671 = vmul.f32 %v2669, %v2669
        %v2672 = vmul.f32 %v2670, %v2670
        %v2673 = vadd.f32 %v2671, %v2672
        %2674 = vadd.xlane.f32.xlu0 %v2673
        %v2675 = vpop.xlane.xlu0 %2674
        %v2676 = vmul.f32 %v2675, %v2667
        %v2677 = vadd.f32 %v2676, 1e-05
        %v2678 = vrsqrt.pop %v2677
        %v2679 = vmul.f32 %v2669, %v2678
        %v2680 = vmul.f32 %v2670, %v2678
        %v2681 = vld [vmem:[%s7] sm:$0x3]
        %v2683 = vlaneseq
        %v2684 = vshrl.u32 %v2683, 7
        %v2685 = vsub.s32 0, %v2684
        %v2686 = vrot.slane %v2681, %v2685
        %v2687 = vlaneseq
        %v2688 = vshrl.u32 %v2687, 7
        %v2689 = vsub.s32 1, %v2688
        %v2690 = vrot.slane %v2681, %v2689
        %v2693 = vmul.f32 %v2679, %v2686
        %v2694 = vmul.f32 %v2680, %v2690
        %v2695 = vld [vmem:[%s8] sm:$0x3]
        %v2697 = vlaneseq
        %v2698 = vshrl.u32 %v2697, 7
        %v2699 = vsub.s32 0, %v2698
        %v2700 = vrot.slane %v2695, %v2699
        %v2701 = vlaneseq
        %v2702 = vshrl.u32 %v2701, 7
        %v2703 = vsub.s32 1, %v2702
        %v2704 = vrot.slane %v2695, %v2703
        %v2707 = vadd.f32 %v2693, %v2700
        %v2708 = vadd.f32 %v2694, %v2704
        %v2709 = vmul.f32 %v2707, 0.5
        %v2710 = vmul.f32 %v2708, 0.5
        %v2711 = vmul.f32 %v2707, 0.70710677
        %v2712 = vmul.f32 %v2708, 0.70710677
        %v2713 = verf.f32.pop %v2711
        %v2714 = verf.f32.pop %v2712
        %v2715 = vadd.f32 %v2713, 1.0
        %v2716 = vadd.f32 %v2714, 1.0
        %v2717 = vmul.f32 %v2709, %v2715
        %v2718 = vmul.f32 %v2710, %v2716
        %v2719 = vld [vmem:[#allocation5] sm:$0xff]
        %v2720 = vld [vmem:[#allocation5 + $0x8] sm:$0xff]
        %v2721 = vld [vmem:[#allocation5 + $0x10] sm:$0xff]
        %v2722 = vld [vmem:[#allocation5 + $0x18] sm:$0xff]
        %v2723 = vld [vmem:[#allocation5 + $0x20] sm:$0xff]
        %v2724 = vld [vmem:[#allocation5 + $0x28] sm:$0xff]
        %v2725 = vld [vmem:[#allocation5 + $0x30] sm:$0xff]
        %v2726 = vld [vmem:[#allocation5 + $0x38] sm:$0xff]
        %v2727 = vld [vmem:[#allocation5 + $0x40] sm:$0xff]
        %v2728 = vld [vmem:[#allocation5 + $0x48] sm:$0xff]
        %v2729 = vld [vmem:[#allocation5 + $0x50] sm:$0xff]
        %v2730 = vld [vmem:[#allocation5 + $0x58] sm:$0xff]
        %v2731 = vld [vmem:[#allocation5 + $0x60] sm:$0xff]
        %v2732 = vld [vmem:[#allocation5 + $0x68] sm:$0xff]
        %v2733 = vld [vmem:[#allocation5 + $0x70] sm:$0xff]
        %v2734 = vld [vmem:[#allocation5 + $0x78] sm:$0xff]
        %v2735 = vld [vmem:[#allocation5 + $0x80] sm:$0xff]
        %v2736 = vld [vmem:[#allocation5 + $0x88] sm:$0xff]
        %v2737 = vld [vmem:[#allocation5 + $0x90] sm:$0xff]
        %v2738 = vld [vmem:[#allocation5 + $0x98] sm:$0xff]
        %v2739 = vld [vmem:[#allocation5 + $0xa0] sm:$0xff]
        %v2740 = vld [vmem:[#allocation5 + $0xa8] sm:$0xff]
        %v2741 = vld [vmem:[#allocation5 + $0xb0] sm:$0xff]
        %v2742 = vld [vmem:[#allocation5 + $0xb8] sm:$0xff]
        %v2743 = vld [vmem:[#allocation5 + $0xc0] sm:$0xff]
        %v2744 = vld [vmem:[#allocation5 + $0xc8] sm:$0xff]
        %v2745 = vld [vmem:[#allocation5 + $0xd0] sm:$0xff]
        %v2746 = vld [vmem:[#allocation5 + $0xd8] sm:$0xff]
        %v2747 = vld [vmem:[#allocation5 + $0xe0] sm:$0xff]
        %v2748 = vld [vmem:[#allocation5 + $0xe8] sm:$0xff]
        %v2749 = vld [vmem:[#allocation5 + $0xf0] sm:$0xff]
        %v2750 = vld [vmem:[#allocation5 + $0xf8] sm:$0xff]
        %v2751 = vld [vmem:[#allocation5 + $0x100] sm:$0xff]
        %v2752 = vld [vmem:[#allocation5 + $0x108] sm:$0xff]
        %v2753 = vld [vmem:[#allocation5 + $0x110] sm:$0xff]
        %v2754 = vld [vmem:[#allocation5 + $0x118] sm:$0xff]
        %v2755 = vld [vmem:[#allocation5 + $0x120] sm:$0xff]
        %v2756 = vld [vmem:[#allocation5 + $0x128] sm:$0xff]
        %v2757 = vld [vmem:[#allocation5 + $0x130] sm:$0xff]
        %v2758 = vld [vmem:[#allocation5 + $0x138] sm:$0xff]
        %v2759 = vld [vmem:[#allocation5 + $0x140] sm:$0xff]
        %v2760 = vld [vmem:[#allocation5 + $0x148] sm:$0xff]
        %v2761 = vld [vmem:[#allocation5 + $0x150] sm:$0xff]
        %v2762 = vld [vmem:[#allocation5 + $0x158] sm:$0xff]
        %v2763 = vld [vmem:[#allocation5 + $0x160] sm:$0xff]
        %v2764 = vld [vmem:[#allocation5 + $0x168] sm:$0xff]
        %v2765 = vld [vmem:[#allocation5 + $0x170] sm:$0xff]
        %v2766 = vld [vmem:[#allocation5 + $0x178] sm:$0xff]
        %v2767 = vld [vmem:[#allocation5 + $0x180] sm:$0xff]
        %v2768 = vld [vmem:[#allocation5 + $0x188] sm:$0xff]
        %v2769 = vld [vmem:[#allocation5 + $0x190] sm:$0xff]
        %v2770 = vld [vmem:[#allocation5 + $0x198] sm:$0xff]
        %v2771 = vld [vmem:[#allocation5 + $0x1a0] sm:$0xff]
        %v2772 = vld [vmem:[#allocation5 + $0x1a8] sm:$0xff]
        %v2773 = vld [vmem:[#allocation5 + $0x1b0] sm:$0xff]
        %v2774 = vld [vmem:[#allocation5 + $0x1b8] sm:$0xff]
        %v2775 = vld [vmem:[#allocation5 + $0x1c0] sm:$0xff]
        %v2776 = vld [vmem:[#allocation5 + $0x1c8] sm:$0xff]
        %v2777 = vld [vmem:[#allocation5 + $0x1d0] sm:$0xff]
        %v2778 = vld [vmem:[#allocation5 + $0x1d8] sm:$0xff]
        %v2779 = vld [vmem:[#allocation5 + $0x1e0] sm:$0xff]
        %v2780 = vld [vmem:[#allocation5 + $0x1e8] sm:$0xff]
        %v2781 = vld [vmem:[#allocation5 + $0x1f0] sm:$0xff]
        %v2782 = vld [vmem:[#allocation5 + $0x1f8] sm:$0xff]
        %v2783 = vld [vmem:[%s10] sm:$0x3]
        %v2785 = vlaneseq
        %v2786 = vshrl.u32 %v2785, 7
        %v2787 = vsub.s32 0, %v2786
        %v2788 = vrot.slane %v2783, %v2787
        %v2789 = vlaneseq
        %v2790 = vshrl.u32 %v2789, 7
        %v2791 = vsub.s32 1, %v2790
        %v2792 = vrot.slane %v2783, %v2791
        %v2795 = vand.u32 %v2750, 4294901760
        %2796 = vmatprep.subr.mxu0 %v2795
        %v2797 = vand.u32 %v2749, 4294901760
        %2798 = vmatpush1.msra.mxu0 %v2797
        %v2799 = vand.u32 %v2748, 4294901760
        %2800 = vmatprep.subr.mxu0 %v2799
        %v2801 = vand.u32 %v2747, 4294901760
        %2802 = vmatpush1.msra.mxu0 %v2801
        %v2803 = vand.u32 %v2746, 4294901760
        %2804 = vmatprep.subr.mxu0 %v2803
        %v2805 = vand.u32 %v2745, 4294901760
        %2806 = vmatpush1.msra.mxu0 %v2805
        %v2807 = vand.u32 %v2744, 4294901760
        %2808 = vmatprep.subr.mxu0 %v2807
        %v2809 = vand.u32 %v2743, 4294901760
        %2810 = vmatpush1.msra.mxu0 %v2809
        %v2811 = vand.u32 %v2742, 4294901760
        %2812 = vmatprep.subr.mxu0 %v2811
        %v2813 = vand.u32 %v2741, 4294901760
        %2814 = vmatpush1.msra.mxu0 %v2813
        %v2815 = vand.u32 %v2740, 4294901760
        %2816 = vmatprep.subr.mxu0 %v2815
        %v2817 = vand.u32 %v2739, 4294901760
        %2818 = vmatpush1.msra.mxu0 %v2817
        %v2819 = vand.u32 %v2738, 4294901760
        %2820 = vmatprep.subr.mxu0 %v2819
        %v2821 = vand.u32 %v2737, 4294901760
        %2822 = vmatpush1.msra.mxu0 %v2821
        %v2823 = vand.u32 %v2736, 4294901760
        %2824 = vmatprep.subr.mxu0 %v2823
        %v2825 = vand.u32 %v2735, 4294901760
        %2826 = vmatpush1.msra.mxu0 %v2825
        %v2827 = vand.u32 %v2734, 4294901760
        %2828 = vmatprep.subr.mxu0 %v2827
        %v2829 = vand.u32 %v2733, 4294901760
        %2830 = vmatpush1.msra.mxu0 %v2829
        %v2831 = vand.u32 %v2732, 4294901760
        %2832 = vmatprep.subr.mxu0 %v2831
        %v2833 = vand.u32 %v2731, 4294901760
        %2834 = vmatpush1.msra.mxu0 %v2833
        %v2835 = vand.u32 %v2730, 4294901760
        %2836 = vmatprep.subr.mxu0 %v2835
        %v2837 = vand.u32 %v2729, 4294901760
        %2838 = vmatpush1.msra.mxu0 %v2837
        %v2839 = vand.u32 %v2728, 4294901760
        %2840 = vmatprep.subr.mxu0 %v2839
        %v2841 = vand.u32 %v2727, 4294901760
        %2842 = vmatpush1.msra.mxu0 %v2841
        %v2843 = vand.u32 %v2726, 4294901760
        %2844 = vmatprep.subr.mxu0 %v2843
        %v2845 = vand.u32 %v2725, 4294901760
        %2846 = vmatpush1.msra.mxu0 %v2845
        %v2847 = vand.u32 %v2724, 4294901760
        %2848 = vmatprep.subr.mxu0 %v2847
        %v2849 = vand.u32 %v2723, 4294901760
        %2850 = vmatpush1.msra.mxu0 %v2849
        %v2851 = vand.u32 %v2722, 4294901760
        %2852 = vmatprep.subr.mxu0 %v2851
        %v2853 = vand.u32 %v2721, 4294901760
        %2854 = vmatpush1.msra.mxu0 %v2853
        %v2855 = vand.u32 %v2720, 4294901760
        %2856 = vmatprep.subr.mxu0 %v2855
        %v2857 = vand.u32 %v2719, 4294901760
        %2858 = vmatpush1.msra.mxu0 %v2857
        %v2859 = vand.u32 %v2782, 4294901760
        %2860 = vmatprep.subr.mxu0 %v2859
        %v2861 = vand.u32 %v2781, 4294901760
        %2862 = vmatpush2.msra.mxu0 %v2861
        %v2863 = vand.u32 %v2780, 4294901760
        %2864 = vmatprep.subr.mxu0 %v2863
        %v2865 = vand.u32 %v2779, 4294901760
        %2866 = vmatpush2.msra.mxu0 %v2865
        %v2867 = vand.u32 %v2778, 4294901760
        %2868 = vmatprep.subr.mxu0 %v2867
        %v2869 = vand.u32 %v2777, 4294901760
        %2870 = vmatpush2.msra.mxu0 %v2869
        %v2871 = vand.u32 %v2776, 4294901760
        %2872 = vmatprep.subr.mxu0 %v2871
        %v2873 = vand.u32 %v2775, 4294901760
        %2874 = vmatpush2.msra.mxu0 %v2873
        %v2875 = vand.u32 %v2774, 4294901760
        %2876 = vmatprep.subr.mxu0 %v2875
        %v2877 = vand.u32 %v2773, 4294901760
        %2878 = vmatpush2.msra.mxu0 %v2877
        %v2879 = vand.u32 %v2772, 4294901760
        %2880 = vmatprep.subr.mxu0 %v2879
        %v2881 = vand.u32 %v2771, 4294901760
        %2882 = vmatpush2.msra.mxu0 %v2881
        %v2883 = vand.u32 %v2770, 4294901760
        %2884 = vmatprep.subr.mxu0 %v2883
        %v2885 = vand.u32 %v2769, 4294901760
        %2886 = vmatpush2.msra.mxu0 %v2885
        %v2887 = vand.u32 %v2768, 4294901760
        %2888 = vmatprep.subr.mxu0 %v2887
        %v2889 = vand.u32 %v2767, 4294901760
        %2890 = vmatpush2.msra.mxu0 %v2889
        %v2891 = vand.u32 %v2766, 4294901760
        %2892 = vmatprep.subr.mxu0 %v2891
        %v2893 = vand.u32 %v2765, 4294901760
        %2894 = vmatpush2.msra.mxu0 %v2893
        %v2895 = vand.u32 %v2764, 4294901760
        %2896 = vmatprep.subr.mxu0 %v2895
        %v2897 = vand.u32 %v2763, 4294901760
        %2898 = vmatpush2.msra.mxu0 %v2897
        %v2899 = vand.u32 %v2762, 4294901760
        %2900 = vmatprep.subr.mxu0 %v2899
        %v2901 = vand.u32 %v2761, 4294901760
        %2902 = vmatpush2.msra.mxu0 %v2901
        %v2903 = vand.u32 %v2760, 4294901760
        %2904 = vmatprep.subr.mxu0 %v2903
        %v2905 = vand.u32 %v2759, 4294901760
        %2906 = vmatpush2.msra.mxu0 %v2905
        %v2907 = vand.u32 %v2758, 4294901760
        %2908 = vmatprep.subr.mxu0 %v2907
        %v2909 = vand.u32 %v2757, 4294901760
        %2910 = vmatpush2.msra.mxu0 %v2909
        %v2911 = vand.u32 %v2756, 4294901760
        %2912 = vmatprep.subr.mxu0 %v2911
        %v2913 = vand.u32 %v2755, 4294901760
        %2914 = vmatpush2.msra.mxu0 %v2913
        %v2915 = vand.u32 %v2754, 4294901760
        %2916 = vmatprep.subr.mxu0 %v2915
        %v2917 = vand.u32 %v2753, 4294901760
        %2918 = vmatpush2.msra.mxu0 %v2917
        %v2919 = vand.u32 %v2752, 4294901760
        %2920 = vmatprep.subr.mxu0 %v2919
        %v2921 = vand.u32 %v2751, 4294901760
        %2922 = vmatpush2.msra.mxu0 %v2921
        %v2923 = vand.u32 %v2718, 4294901760
        %v2924 = vsub.f32 %v2718, %v2923
        %v2925 = vand.u32 %v2924, 4294901760
        %v2926 = vsub.f32 %v2924, %v2925
        %v2927 = vand.u32 %v2926, 4294901760
        %2928 = vmatprep.mubr.f32.mxu0 %v2927
        %v2929 = vand.u32 %v2717, 4294901760
        %v2930 = vsub.f32 %v2717, %v2929
        %v2931 = vand.u32 %v2930, 4294901760
        %v2932 = vsub.f32 %v2930, %v2931
        %v2933 = vand.u32 %v2932, 4294901760
        %2934 = vmatmul.mubr.f32.gmra.mxu0 %v2933
        %v2935 = vpop.f32.mrf.mxu0
        %v2936 = vadd.f32 %v2788, %v2935
        %v2937 = vpop.f32.mrf.mxu0
        %v2938 = vadd.f32 %v2792, %v2937
        %2939 = vdwg.mxu0
        %v2940 = vand.u32 %v2750, 4294901760
        %v2941 = vsub.f32 %v2750, %v2940
        %v2942 = vand.u32 %v2941, 4294901760
        %v2943 = vsub.f32 %v2941, %v2942
        %v2944 = vand.u32 %v2943, 4294901760
        %2945 = vmatprep.subr.mxu0 %v2944
        %v2946 = vand.u32 %v2749, 4294901760
        %v2947 = vsub.f32 %v2749, %v2946
        %v2948 = vand.u32 %v2947, 4294901760
        %v2949 = vsub.f32 %v2947, %v2948
        %v2950 = vand.u32 %v2949, 4294901760
        %2951 = vmatpush1.msra.mxu0 %v2950
        %v2952 = vand.u32 %v2748, 4294901760
        %v2953 = vsub.f32 %v2748, %v2952
        %v2954 = vand.u32 %v2953, 4294901760
        %v2955 = vsub.f32 %v2953, %v2954
        %v2956 = vand.u32 %v2955, 4294901760
        %2957 = vmatprep.subr.mxu0 %v2956
        %v2958 = vand.u32 %v2747, 4294901760
        %v2959 = vsub.f32 %v2747, %v2958
        %v2960 = vand.u32 %v2959, 4294901760
        %v2961 = vsub.f32 %v2959, %v2960
        %v2962 = vand.u32 %v2961, 4294901760
        %2963 = vmatpush1.msra.mxu0 %v2962
        %v2964 = vand.u32 %v2746, 4294901760
        %v2965 = vsub.f32 %v2746, %v2964
        %v2966 = vand.u32 %v2965, 4294901760
        %v2967 = vsub.f32 %v2965, %v2966
        %v2968 = vand.u32 %v2967, 4294901760
        %2969 = vmatprep.subr.mxu0 %v2968
        %v2970 = vand.u32 %v2745, 4294901760
        %v2971 = vsub.f32 %v2745, %v2970
        %v2972 = vand.u32 %v2971, 4294901760
        %v2973 = vsub.f32 %v2971, %v2972
        %v2974 = vand.u32 %v2973, 4294901760
        %2975 = vmatpush1.msra.mxu0 %v2974
        %v2976 = vand.u32 %v2744, 4294901760
        %v2977 = vsub.f32 %v2744, %v2976
        %v2978 = vand.u32 %v2977, 4294901760
        %v2979 = vsub.f32 %v2977, %v2978
        %v2980 = vand.u32 %v2979, 4294901760
        %2981 = vmatprep.subr.mxu0 %v2980
        %v2982 = vand.u32 %v2743, 4294901760
        %v2983 = vsub.f32 %v2743, %v2982
        %v2984 = vand.u32 %v2983, 4294901760
        %v2985 = vsub.f32 %v2983, %v2984
        %v2986 = vand.u32 %v2985, 4294901760
        %2987 = vmatpush1.msra.mxu0 %v2986
        %v2988 = vand.u32 %v2742, 4294901760
        %v2989 = vsub.f32 %v2742, %v2988
        %v2990 = vand.u32 %v2989, 4294901760
        %v2991 = vsub.f32 %v2989, %v2990
        %v2992 = vand.u32 %v2991, 4294901760
        %2993 = vmatprep.subr.mxu0 %v2992
        %v2994 = vand.u32 %v2741, 4294901760
        %v2995 = vsub.f32 %v2741, %v2994
        %v2996 = vand.u32 %v2995, 4294901760
        %v2997 = vsub.f32 %v2995, %v2996
        %v2998 = vand.u32 %v2997, 4294901760
        %2999 = vmatpush1.msra.mxu0 %v2998
        %v3000 = vand.u32 %v2740, 4294901760
        %v3001 = vsub.f32 %v2740, %v3000
        %v3002 = vand.u32 %v3001, 4294901760
        %v3003 = vsub.f32 %v3001, %v3002
        %v3004 = vand.u32 %v3003, 4294901760
        %3005 = vmatprep.subr.mxu0 %v3004
        %v3006 = vand.u32 %v2739, 4294901760
        %v3007 = vsub.f32 %v2739, %v3006
        %v3008 = vand.u32 %v3007, 4294901760
        %v3009 = vsub.f32 %v3007, %v3008
        %v3010 = vand.u32 %v3009, 4294901760
        %3011 = vmatpush1.msra.mxu0 %v3010
        %v3012 = vand.u32 %v2738, 4294901760
        %v3013 = vsub.f32 %v2738, %v3012
        %v3014 = vand.u32 %v3013, 4294901760
        %v3015 = vsub.f32 %v3013, %v3014
        %v3016 = vand.u32 %v3015, 4294901760
        %3017 = vmatprep.subr.mxu0 %v3016
        %v3018 = vand.u32 %v2737, 4294901760
        %v3019 = vsub.f32 %v2737, %v3018
        %v3020 = vand.u32 %v3019, 4294901760
        %v3021 = vsub.f32 %v3019, %v3020
        %v3022 = vand.u32 %v3021, 4294901760
        %3023 = vmatpush1.msra.mxu0 %v3022
        %v3024 = vand.u32 %v2736, 4294901760
        %v3025 = vsub.f32 %v2736, %v3024
        %v3026 = vand.u32 %v3025, 4294901760
        %v3027 = vsub.f32 %v3025, %v3026
        %v3028 = vand.u32 %v3027, 4294901760
        %3029 = vmatprep.subr.mxu0 %v3028
        %v3030 = vand.u32 %v2735, 4294901760
        %v3031 = vsub.f32 %v2735, %v3030
        %v3032 = vand.u32 %v3031, 4294901760
        %v3033 = vsub.f32 %v3031, %v3032
        %v3034 = vand.u32 %v3033, 4294901760
        %3035 = vmatpush1.msra.mxu0 %v3034
        %v3036 = vand.u32 %v2734, 4294901760
        %v3037 = vsub.f32 %v2734, %v3036
        %v3038 = vand.u32 %v3037, 4294901760
        %v3039 = vsub.f32 %v3037, %v3038
        %v3040 = vand.u32 %v3039, 4294901760
        %3041 = vmatprep.subr.mxu0 %v3040
        %v3042 = vand.u32 %v2733, 4294901760
        %v3043 = vsub.f32 %v2733, %v3042
        %v3044 = vand.u32 %v3043, 4294901760
        %v3045 = vsub.f32 %v3043, %v3044
        %v3046 = vand.u32 %v3045, 4294901760
        %3047 = vmatpush1.msra.mxu0 %v3046
        %v3048 = vand.u32 %v2732, 4294901760
        %v3049 = vsub.f32 %v2732, %v3048
        %v3050 = vand.u32 %v3049, 4294901760
        %v3051 = vsub.f32 %v3049, %v3050
        %v3052 = vand.u32 %v3051, 4294901760
        %3053 = vmatprep.subr.mxu0 %v3052
        %v3054 = vand.u32 %v2731, 4294901760
        %v3055 = vsub.f32 %v2731, %v3054
        %v3056 = vand.u32 %v3055, 4294901760
        %v3057 = vsub.f32 %v3055, %v3056
        %v3058 = vand.u32 %v3057, 4294901760
        %3059 = vmatpush1.msra.mxu0 %v3058
        %v3060 = vand.u32 %v2730, 4294901760
        %v3061 = vsub.f32 %v2730, %v3060
        %v3062 = vand.u32 %v3061, 4294901760
        %v3063 = vsub.f32 %v3061, %v3062
        %v3064 = vand.u32 %v3063, 4294901760
        %3065 = vmatprep.subr.mxu0 %v3064
        %v3066 = vand.u32 %v2729, 4294901760
        %v3067 = vsub.f32 %v2729, %v3066
        %v3068 = vand.u32 %v3067, 4294901760
        %v3069 = vsub.f32 %v3067, %v3068
        %v3070 = vand.u32 %v3069, 4294901760
        %3071 = vmatpush1.msra.mxu0 %v3070
        %v3072 = vand.u32 %v2728, 4294901760
        %v3073 = vsub.f32 %v2728, %v3072
        %v3074 = vand.u32 %v3073, 4294901760
        %v3075 = vsub.f32 %v3073, %v3074
        %v3076 = vand.u32 %v3075, 4294901760
        %3077 = vmatprep.subr.mxu0 %v3076
        %v3078 = vand.u32 %v2727, 4294901760
        %v3079 = vsub.f32 %v2727, %v3078
        %v3080 = vand.u32 %v3079, 4294901760
        %v3081 = vsub.f32 %v3079, %v3080
        %v3082 = vand.u32 %v3081, 4294901760
        %3083 = vmatpush1.msra.mxu0 %v3082
        %v3084 = vand.u32 %v2726, 4294901760
        %v3085 = vsub.f32 %v2726, %v3084
        %v3086 = vand.u32 %v3085, 4294901760
        %v3087 = vsub.f32 %v3085, %v3086
        %v3088 = vand.u32 %v3087, 4294901760
        %3089 = vmatprep.subr.mxu0 %v3088
        %v3090 = vand.u32 %v2725, 4294901760
        %v3091 = vsub.f32 %v2725, %v3090
        %v3092 = vand.u32 %v3091, 4294901760
        %v3093 = vsub.f32 %v3091, %v3092
        %v3094 = vand.u32 %v3093, 4294901760
        %3095 = vmatpush1.msra.mxu0 %v3094
        %v3096 = vand.u32 %v2724, 4294901760
        %v3097 = vsub.f32 %v2724, %v3096
        %v3098 = vand.u32 %v3097, 4294901760
        %v3099 = vsub.f32 %v3097, %v3098
        %v3100 = vand.u32 %v3099, 4294901760
        %3101 = vmatprep.subr.mxu0 %v3100
        %v3102 = vand.u32 %v2723, 4294901760
        %v3103 = vsub.f32 %v2723, %v3102
        %v3104 = vand.u32 %v3103, 4294901760
        %v3105 = vsub.f32 %v3103, %v3104
        %v3106 = vand.u32 %v3105, 4294901760
        %3107 = vmatpush1.msra.mxu0 %v3106
        %v3108 = vand.u32 %v2722, 4294901760
        %v3109 = vsub.f32 %v2722, %v3108
        %v3110 = vand.u32 %v3109, 4294901760
        %v3111 = vsub.f32 %v3109, %v3110
        %v3112 = vand.u32 %v3111, 4294901760
        %3113 = vmatprep.subr.mxu0 %v3112
        %v3114 = vand.u32 %v2721, 4294901760
        %v3115 = vsub.f32 %v2721, %v3114
        %v3116 = vand.u32 %v3115, 4294901760
        %v3117 = vsub.f32 %v3115, %v3116
        %v3118 = vand.u32 %v3117, 4294901760
        %3119 = vmatpush1.msra.mxu0 %v3118
        %v3120 = vand.u32 %v2720, 4294901760
        %v3121 = vsub.f32 %v2720, %v3120
        %v3122 = vand.u32 %v3121, 4294901760
        %v3123 = vsub.f32 %v3121, %v3122
        %v3124 = vand.u32 %v3123, 4294901760
        %3125 = vmatprep.subr.mxu0 %v3124
        %v3126 = vand.u32 %v2719, 4294901760
        %v3127 = vsub.f32 %v2719, %v3126
        %v3128 = vand.u32 %v3127, 4294901760
        %v3129 = vsub.f32 %v3127, %v3128
        %v3130 = vand.u32 %v3129, 4294901760
        %3131 = vmatpush1.msra.mxu0 %v3130
        %v3132 = vand.u32 %v2782, 4294901760
        %v3133 = vsub.f32 %v2782, %v3132
        %v3134 = vand.u32 %v3133, 4294901760
        %v3135 = vsub.f32 %v3133, %v3134
        %v3136 = vand.u32 %v3135, 4294901760
        %3137 = vmatprep.subr.mxu0 %v3136
        %v3138 = vand.u32 %v2781, 4294901760
        %v3139 = vsub.f32 %v2781, %v3138
        %v3140 = vand.u32 %v3139, 4294901760
        %v3141 = vsub.f32 %v3139, %v3140
        %v3142 = vand.u32 %v3141, 4294901760
        %3143 = vmatpush2.msra.mxu0 %v3142
        %v3144 = vand.u32 %v2780, 4294901760
        %v3145 = vsub.f32 %v2780, %v3144
        %v3146 = vand.u32 %v3145, 4294901760
        %v3147 = vsub.f32 %v3145, %v3146
        %v3148 = vand.u32 %v3147, 4294901760
        %3149 = vmatprep.subr.mxu0 %v3148
        %v3150 = vand.u32 %v2779, 4294901760
        %v3151 = vsub.f32 %v2779, %v3150
        %v3152 = vand.u32 %v3151, 4294901760
        %v3153 = vsub.f32 %v3151, %v3152
        %v3154 = vand.u32 %v3153, 4294901760
        %3155 = vmatpush2.msra.mxu0 %v3154
        %v3156 = vand.u32 %v2778, 4294901760
        %v3157 = vsub.f32 %v2778, %v3156
        %v3158 = vand.u32 %v3157, 4294901760
        %v3159 = vsub.f32 %v3157, %v3158
        %v3160 = vand.u32 %v3159, 4294901760
        %3161 = vmatprep.subr.mxu0 %v3160
        %v3162 = vand.u32 %v2777, 4294901760
        %v3163 = vsub.f32 %v2777, %v3162
        %v3164 = vand.u32 %v3163, 4294901760
        %v3165 = vsub.f32 %v3163, %v3164
        %v3166 = vand.u32 %v3165, 4294901760
        %3167 = vmatpush2.msra.mxu0 %v3166
        %v3168 = vand.u32 %v2776, 4294901760
        %v3169 = vsub.f32 %v2776, %v3168
        %v3170 = vand.u32 %v3169, 4294901760
        %v3171 = vsub.f32 %v3169, %v3170
        %v3172 = vand.u32 %v3171, 4294901760
        %3173 = vmatprep.subr.mxu0 %v3172
        %v3174 = vand.u32 %v2775, 4294901760
        %v3175 = vsub.f32 %v2775, %v3174
        %v3176 = vand.u32 %v3175, 4294901760
        %v3177 = vsub.f32 %v3175, %v3176
        %v3178 = vand.u32 %v3177, 4294901760
        %3179 = vmatpush2.msra.mxu0 %v3178
        %v3180 = vand.u32 %v2774, 4294901760
        %v3181 = vsub.f32 %v2774, %v3180
        %v3182 = vand.u32 %v3181, 4294901760
        %v3183 = vsub.f32 %v3181, %v3182
        %v3184 = vand.u32 %v3183, 4294901760
        %3185 = vmatprep.subr.mxu0 %v3184
        %v3186 = vand.u32 %v2773, 4294901760
        %v3187 = vsub.f32 %v2773, %v3186
        %v3188 = vand.u32 %v3187, 4294901760
        %v3189 = vsub.f32 %v3187, %v3188
        %v3190 = vand.u32 %v3189, 4294901760
        %3191 = vmatpush2.msra.mxu0 %v3190
        %v3192 = vand.u32 %v2772, 4294901760
        %v3193 = vsub.f32 %v2772, %v3192
        %v3194 = vand.u32 %v3193, 4294901760
        %v3195 = vsub.f32 %v3193, %v3194
        %v3196 = vand.u32 %v3195, 4294901760
        %3197 = vmatprep.subr.mxu0 %v3196
        %v3198 = vand.u32 %v2771, 4294901760
        %v3199 = vsub.f32 %v2771, %v3198
        %v3200 = vand.u32 %v3199, 4294901760
        %v3201 = vsub.f32 %v3199, %v3200
        %v3202 = vand.u32 %v3201, 4294901760
        %3203 = vmatpush2.msra.mxu0 %v3202
        %v3204 = vand.u32 %v2770, 4294901760
        %v3205 = vsub.f32 %v2770, %v3204
        %v3206 = vand.u32 %v3205, 4294901760
        %v3207 = vsub.f32 %v3205, %v3206
        %v3208 = vand.u32 %v3207, 4294901760
        %3209 = vmatprep.subr.mxu0 %v3208
        %v3210 = vand.u32 %v2769, 4294901760
        %v3211 = vsub.f32 %v2769, %v3210
        %v3212 = vand.u32 %v3211, 4294901760
        %v3213 = vsub.f32 %v3211, %v3212
        %v3214 = vand.u32 %v3213, 4294901760
        %3215 = vmatpush2.msra.mxu0 %v3214
        %v3216 = vand.u32 %v2768, 4294901760
        %v3217 = vsub.f32 %v2768, %v3216
        %v3218 = vand.u32 %v3217, 4294901760
        %v3219 = vsub.f32 %v3217, %v3218
        %v3220 = vand.u32 %v3219, 4294901760
        %3221 = vmatprep.subr.mxu0 %v3220
        %v3222 = vand.u32 %v2767, 4294901760
        %v3223 = vsub.f32 %v2767, %v3222
        %v3224 = vand.u32 %v3223, 4294901760
        %v3225 = vsub.f32 %v3223, %v3224
        %v3226 = vand.u32 %v3225, 4294901760
        %3227 = vmatpush2.msra.mxu0 %v3226
        %v3228 = vand.u32 %v2766, 4294901760
        %v3229 = vsub.f32 %v2766, %v3228
        %v3230 = vand.u32 %v3229, 4294901760
        %v3231 = vsub.f32 %v3229, %v3230
        %v3232 = vand.u32 %v3231, 4294901760
        %3233 = vmatprep.subr.mxu0 %v3232
        %v3234 = vand.u32 %v2765, 4294901760
        %v3235 = vsub.f32 %v2765, %v3234
        %v3236 = vand.u32 %v3235, 4294901760
        %v3237 = vsub.f32 %v3235, %v3236
        %v3238 = vand.u32 %v3237, 4294901760
        %3239 = vmatpush2.msra.mxu0 %v3238
        %v3240 = vand.u32 %v2764, 4294901760
        %v3241 = vsub.f32 %v2764, %v3240
        %v3242 = vand.u32 %v3241, 4294901760
        %v3243 = vsub.f32 %v3241, %v3242
        %v3244 = vand.u32 %v3243, 4294901760
        %3245 = vmatprep.subr.mxu0 %v3244
        %v3246 = vand.u32 %v2763, 4294901760
        %v3247 = vsub.f32 %v2763, %v3246
        %v3248 = vand.u32 %v3247, 4294901760
        %v3249 = vsub.f32 %v3247, %v3248
        %v3250 = vand.u32 %v3249, 4294901760
        %3251 = vmatpush2.msra.mxu0 %v3250
        %v3252 = vand.u32 %v2762, 4294901760
        %v3253 = vsub.f32 %v2762, %v3252
        %v3254 = vand.u32 %v3253, 4294901760
        %v3255 = vsub.f32 %v3253, %v3254
        %v3256 = vand.u32 %v3255, 4294901760
        %3257 = vmatprep.subr.mxu0 %v3256
        %v3258 = vand.u32 %v2761, 4294901760
        %v3259 = vsub.f32 %v2761, %v3258
        %v3260 = vand.u32 %v3259, 4294901760
        %v3261 = vsub.f32 %v3259, %v3260
        %v3262 = vand.u32 %v3261, 4294901760
        %3263 = vmatpush2.msra.mxu0 %v3262
        %v3264 = vand.u32 %v2760, 4294901760
        %v3265 = vsub.f32 %v2760, %v3264
        %v3266 = vand.u32 %v3265, 4294901760
        %v3267 = vsub.f32 %v3265, %v3266
        %v3268 = vand.u32 %v3267, 4294901760
        %3269 = vmatprep.subr.mxu0 %v3268
        %v3270 = vand.u32 %v2759, 4294901760
        %v3271 = vsub.f32 %v2759, %v3270
        %v3272 = vand.u32 %v3271, 4294901760
        %v3273 = vsub.f32 %v3271, %v3272
        %v3274 = vand.u32 %v3273, 4294901760
        %3275 = vmatpush2.msra.mxu0 %v3274
        %v3276 = vand.u32 %v2758, 4294901760
        %v3277 = vsub.f32 %v2758, %v3276
        %v3278 = vand.u32 %v3277, 4294901760
        %v3279 = vsub.f32 %v3277, %v3278
        %v3280 = vand.u32 %v3279, 4294901760
        %3281 = vmatprep.subr.mxu0 %v3280
        %v3282 = vand.u32 %v2757, 4294901760
        %v3283 = vsub.f32 %v2757, %v3282
        %v3284 = vand.u32 %v3283, 4294901760
        %v3285 = vsub.f32 %v3283, %v3284
        %v3286 = vand.u32 %v3285, 4294901760
        %3287 = vmatpush2.msra.mxu0 %v3286
        %v3288 = vand.u32 %v2756, 4294901760
        %v3289 = vsub.f32 %v2756, %v3288
        %v3290 = vand.u32 %v3289, 4294901760
        %v3291 = vsub.f32 %v3289, %v3290
        %v3292 = vand.u32 %v3291, 4294901760
        %3293 = vmatprep.subr.mxu0 %v3292
        %v3294 = vand.u32 %v2755, 4294901760
        %v3295 = vsub.f32 %v2755, %v3294
        %v3296 = vand.u32 %v3295, 4294901760
        %v3297 = vsub.f32 %v3295, %v3296
        %v3298 = vand.u32 %v3297, 4294901760
        %3299 = vmatpush2.msra.mxu0 %v3298
        %v3300 = vand.u32 %v2754, 4294901760
        %v3301 = vsub.f32 %v2754, %v3300
        %v3302 = vand.u32 %v3301, 4294901760
        %v3303 = vsub.f32 %v3301, %v3302
        %v3304 = vand.u32 %v3303, 4294901760
        %3305 = vmatprep.subr.mxu0 %v3304
        %v3306 = vand.u32 %v2753, 4294901760
        %v3307 = vsub.f32 %v2753, %v3306
        %v3308 = vand.u32 %v3307, 4294901760
        %v3309 = vsub.f32 %v3307, %v3308
        %v3310 = vand.u32 %v3309, 4294901760
        %3311 = vmatpush2.msra.mxu0 %v3310
        %v3312 = vand.u32 %v2752, 4294901760
        %v3313 = vsub.f32 %v2752, %v3312
        %v3314 = vand.u32 %v3313, 4294901760
        %v3315 = vsub.f32 %v3313, %v3314
        %v3316 = vand.u32 %v3315, 4294901760
        %3317 = vmatprep.subr.mxu0 %v3316
        %v3318 = vand.u32 %v2751, 4294901760
        %v3319 = vsub.f32 %v2751, %v3318
        %v3320 = vand.u32 %v3319, 4294901760
        %v3321 = vsub.f32 %v3319, %v3320
        %v3322 = vand.u32 %v3321, 4294901760
        %3323 = vmatpush2.msra.mxu0 %v3322
        %v3324 = vand.u32 %v2718, 4294901760
        %3325 = vmatprep.mubr.f32.mxu0 %v3324
        %v3326 = vand.u32 %v2717, 4294901760
        %3327 = vmatmul.mubr.f32.gmra.mxu0 %v3326
        %v3328 = vpop.f32.mrf.mxu0
        %v3329 = vadd.f32 %v2936, %v3328
        %v3330 = vpop.f32.mrf.mxu0
        %v3331 = vadd.f32 %v2938, %v3330
        %3332 = vdwg.mxu0
        %v3333 = vand.u32 %v2750, 4294901760
        %v3334 = vsub.f32 %v2750, %v3333
        %3335 = vmatprep.subr.mxu0 %v3334
        %v3336 = vand.u32 %v2749, 4294901760
        %v3337 = vsub.f32 %v2749, %v3336
        %3338 = vmatpush1.msra.mxu0 %v3337
        %v3339 = vand.u32 %v2748, 4294901760
        %v3340 = vsub.f32 %v2748, %v3339
        %3341 = vmatprep.subr.mxu0 %v3340
        %v3342 = vand.u32 %v2747, 4294901760
        %v3343 = vsub.f32 %v2747, %v3342
        %3344 = vmatpush1.msra.mxu0 %v3343
        %v3345 = vand.u32 %v2746, 4294901760
        %v3346 = vsub.f32 %v2746, %v3345
        %3347 = vmatprep.subr.mxu0 %v3346
        %v3348 = vand.u32 %v2745, 4294901760
        %v3349 = vsub.f32 %v2745, %v3348
        %3350 = vmatpush1.msra.mxu0 %v3349
        %v3351 = vand.u32 %v2744, 4294901760
        %v3352 = vsub.f32 %v2744, %v3351
        %3353 = vmatprep.subr.mxu0 %v3352
        %v3354 = vand.u32 %v2743, 4294901760
        %v3355 = vsub.f32 %v2743, %v3354
        %3356 = vmatpush1.msra.mxu0 %v3355
        %v3357 = vand.u32 %v2742, 4294901760
        %v3358 = vsub.f32 %v2742, %v3357
        %3359 = vmatprep.subr.mxu0 %v3358
        %v3360 = vand.u32 %v2741, 4294901760
        %v3361 = vsub.f32 %v2741, %v3360
        %3362 = vmatpush1.msra.mxu0 %v3361
        %v3363 = vand.u32 %v2740, 4294901760
        %v3364 = vsub.f32 %v2740, %v3363
        %3365 = vmatprep.subr.mxu0 %v3364
        %v3366 = vand.u32 %v2739, 4294901760
        %v3367 = vsub.f32 %v2739, %v3366
        %3368 = vmatpush1.msra.mxu0 %v3367
        %v3369 = vand.u32 %v2738, 4294901760
        %v3370 = vsub.f32 %v2738, %v3369
        %3371 = vmatprep.subr.mxu0 %v3370
        %v3372 = vand.u32 %v2737, 4294901760
        %v3373 = vsub.f32 %v2737, %v3372
        %3374 = vmatpush1.msra.mxu0 %v3373
        %v3375 = vand.u32 %v2736, 4294901760
        %v3376 = vsub.f32 %v2736, %v3375
        %3377 = vmatprep.subr.mxu0 %v3376
        %v3378 = vand.u32 %v2735, 4294901760
        %v3379 = vsub.f32 %v2735, %v3378
        %3380 = vmatpush1.msra.mxu0 %v3379
        %v3381 = vand.u32 %v2734, 4294901760
        %v3382 = vsub.f32 %v2734, %v3381
        %3383 = vmatprep.subr.mxu0 %v3382
        %v3384 = vand.u32 %v2733, 4294901760
        %v3385 = vsub.f32 %v2733, %v3384
        %3386 = vmatpush1.msra.mxu0 %v3385
        %v3387 = vand.u32 %v2732, 4294901760
        %v3388 = vsub.f32 %v2732, %v3387
        %3389 = vmatprep.subr.mxu0 %v3388
        %v3390 = vand.u32 %v2731, 4294901760
        %v3391 = vsub.f32 %v2731, %v3390
        %3392 = vmatpush1.msra.mxu0 %v3391
        %v3393 = vand.u32 %v2730, 4294901760
        %v3394 = vsub.f32 %v2730, %v3393
        %3395 = vmatprep.subr.mxu0 %v3394
        %v3396 = vand.u32 %v2729, 4294901760
        %v3397 = vsub.f32 %v2729, %v3396
        %3398 = vmatpush1.msra.mxu0 %v3397
        %v3399 = vand.u32 %v2728, 4294901760
        %v3400 = vsub.f32 %v2728, %v3399
        %3401 = vmatprep.subr.mxu0 %v3400
        %v3402 = vand.u32 %v2727, 4294901760
        %v3403 = vsub.f32 %v2727, %v3402
        %3404 = vmatpush1.msra.mxu0 %v3403
        %v3405 = vand.u32 %v2726, 4294901760
        %v3406 = vsub.f32 %v2726, %v3405
        %3407 = vmatprep.subr.mxu0 %v3406
        %v3408 = vand.u32 %v2725, 4294901760
        %v3409 = vsub.f32 %v2725, %v3408
        %3410 = vmatpush1.msra.mxu0 %v3409
        %v3411 = vand.u32 %v2724, 4294901760
        %v3412 = vsub.f32 %v2724, %v3411
        %3413 = vmatprep.subr.mxu0 %v3412
        %v3414 = vand.u32 %v2723, 4294901760
        %v3415 = vsub.f32 %v2723, %v3414
        %3416 = vmatpush1.msra.mxu0 %v3415
        %v3417 = vand.u32 %v2722, 4294901760
        %v3418 = vsub.f32 %v2722, %v3417
        %3419 = vmatprep.subr.mxu0 %v3418
        %v3420 = vand.u32 %v2721, 4294901760
        %v3421 = vsub.f32 %v2721, %v3420
        %3422 = vmatpush1.msra.mxu0 %v3421
        %v3423 = vand.u32 %v2720, 4294901760
        %v3424 = vsub.f32 %v2720, %v3423
        %3425 = vmatprep.subr.mxu0 %v3424
        %v3426 = vand.u32 %v2719, 4294901760
        %v3427 = vsub.f32 %v2719, %v3426
        %3428 = vmatpush1.msra.mxu0 %v3427
        %v3429 = vand.u32 %v2782, 4294901760
        %v3430 = vsub.f32 %v2782, %v3429
        %3431 = vmatprep.subr.mxu0 %v3430
        %v3432 = vand.u32 %v2781, 4294901760
        %v3433 = vsub.f32 %v2781, %v3432
        %3434 = vmatpush2.msra.mxu0 %v3433
        %v3435 = vand.u32 %v2780, 4294901760
        %v3436 = vsub.f32 %v2780, %v3435
        %3437 = vmatprep.subr.mxu0 %v3436
        %v3438 = vand.u32 %v2779, 4294901760
        %v3439 = vsub.f32 %v2779, %v3438
        %3440 = vmatpush2.msra.mxu0 %v3439
        %v3441 = vand.u32 %v2778, 4294901760
        %v3442 = vsub.f32 %v2778, %v3441
        %3443 = vmatprep.subr.mxu0 %v3442
        %v3444 = vand.u32 %v2777, 4294901760
        %v3445 = vsub.f32 %v2777, %v3444
        %3446 = vmatpush2.msra.mxu0 %v3445
        %v3447 = vand.u32 %v2776, 4294901760
        %v3448 = vsub.f32 %v2776, %v3447
        %3449 = vmatprep.subr.mxu0 %v3448
        %v3450 = vand.u32 %v2775, 4294901760
        %v3451 = vsub.f32 %v2775, %v3450
        %3452 = vmatpush2.msra.mxu0 %v3451
        %v3453 = vand.u32 %v2774, 4294901760
        %v3454 = vsub.f32 %v2774, %v3453
        %3455 = vmatprep.subr.mxu0 %v3454
        %v3456 = vand.u32 %v2773, 4294901760
        %v3457 = vsub.f32 %v2773, %v3456
        %3458 = vmatpush2.msra.mxu0 %v3457
        %v3459 = vand.u32 %v2772, 4294901760
        %v3460 = vsub.f32 %v2772, %v3459
        %3461 = vmatprep.subr.mxu0 %v3460
        %v3462 = vand.u32 %v2771, 4294901760
        %v3463 = vsub.f32 %v2771, %v3462
        %3464 = vmatpush2.msra.mxu0 %v3463
        %v3465 = vand.u32 %v2770, 4294901760
        %v3466 = vsub.f32 %v2770, %v3465
        %3467 = vmatprep.subr.mxu0 %v3466
        %v3468 = vand.u32 %v2769, 4294901760
        %v3469 = vsub.f32 %v2769, %v3468
        %3470 = vmatpush2.msra.mxu0 %v3469
        %v3471 = vand.u32 %v2768, 4294901760
        %v3472 = vsub.f32 %v2768, %v3471
        %3473 = vmatprep.subr.mxu0 %v3472
        %v3474 = vand.u32 %v2767, 4294901760
        %v3475 = vsub.f32 %v2767, %v3474
        %3476 = vmatpush2.msra.mxu0 %v3475
        %v3477 = vand.u32 %v2766, 4294901760
        %v3478 = vsub.f32 %v2766, %v3477
        %3479 = vmatprep.subr.mxu0 %v3478
        %v3480 = vand.u32 %v2765, 4294901760
        %v3481 = vsub.f32 %v2765, %v3480
        %3482 = vmatpush2.msra.mxu0 %v3481
        %v3483 = vand.u32 %v2764, 4294901760
        %v3484 = vsub.f32 %v2764, %v3483
        %3485 = vmatprep.subr.mxu0 %v3484
        %v3486 = vand.u32 %v2763, 4294901760
        %v3487 = vsub.f32 %v2763, %v3486
        %3488 = vmatpush2.msra.mxu0 %v3487
        %v3489 = vand.u32 %v2762, 4294901760
        %v3490 = vsub.f32 %v2762, %v3489
        %3491 = vmatprep.subr.mxu0 %v3490
        %v3492 = vand.u32 %v2761, 4294901760
        %v3493 = vsub.f32 %v2761, %v3492
        %3494 = vmatpush2.msra.mxu0 %v3493
        %v3495 = vand.u32 %v2760, 4294901760
        %v3496 = vsub.f32 %v2760, %v3495
        %3497 = vmatprep.subr.mxu0 %v3496
        %v3498 = vand.u32 %v2759, 4294901760
        %v3499 = vsub.f32 %v2759, %v3498
        %3500 = vmatpush2.msra.mxu0 %v3499
        %v3501 = vand.u32 %v2758, 4294901760
        %v3502 = vsub.f32 %v2758, %v3501
        %3503 = vmatprep.subr.mxu0 %v3502
        %v3504 = vand.u32 %v2757, 4294901760
        %v3505 = vsub.f32 %v2757, %v3504
        %3506 = vmatpush2.msra.mxu0 %v3505
        %v3507 = vand.u32 %v2756, 4294901760
        %v3508 = vsub.f32 %v2756, %v3507
        %3509 = vmatprep.subr.mxu0 %v3508
        %v3510 = vand.u32 %v2755, 4294901760
        %v3511 = vsub.f32 %v2755, %v3510
        %3512 = vmatpush2.msra.mxu0 %v3511
        %v3513 = vand.u32 %v2754, 4294901760
        %v3514 = vsub.f32 %v2754, %v3513
        %3515 = vmatprep.subr.mxu0 %v3514
        %v3516 = vand.u32 %v2753, 4294901760
        %v3517 = vsub.f32 %v2753, %v3516
        %3518 = vmatpush2.msra.mxu0 %v3517
        %v3519 = vand.u32 %v2752, 4294901760
        %v3520 = vsub.f32 %v2752, %v3519
        %3521 = vmatprep.subr.mxu0 %v3520
        %v3522 = vand.u32 %v2751, 4294901760
        %v3523 = vsub.f32 %v2751, %v3522
        %3524 = vmatpush2.msra.mxu0 %v3523
        %v3525 = vand.u32 %v2718, 4294901760
        %v3526 = vsub.f32 %v2718, %v3525
        %3527 = vmatprep.mubr.f32.mxu0 %v3526
        %v3528 = vand.u32 %v2717, 4294901760
        %v3529 = vsub.f32 %v2717, %v3528
        %3530 = vmatmul.mubr.f32.gmra.mxu0 %v3529
        %v3531 = vpop.f32.mrf.mxu0
        %v3532 = vadd.f32 %v3329, %v3531
        %v3533 = vpop.f32.mrf.mxu0
        %v3534 = vadd.f32 %v3331, %v3533
        %3535 = vdwg.mxu0
        %v3536 = vand.u32 %v2750, 4294901760
        %3537 = vmatprep.subr.mxu0 %v3536
        %v3538 = vand.u32 %v2749, 4294901760
        %3539 = vmatpush1.msra.mxu0 %v3538
        %v3540 = vand.u32 %v2748, 4294901760
        %3541 = vmatprep.subr.mxu0 %v3540
        %v3542 = vand.u32 %v2747, 4294901760
        %3543 = vmatpush1.msra.mxu0 %v3542
        %v3544 = vand.u32 %v2746, 4294901760
        %3545 = vmatprep.subr.mxu0 %v3544
        %v3546 = vand.u32 %v2745, 4294901760
        %3547 = vmatpush1.msra.mxu0 %v3546
        %v3548 = vand.u32 %v2744, 4294901760
        %3549 = vmatprep.subr.mxu0 %v3548
        %v3550 = vand.u32 %v2743, 4294901760
        %3551 = vmatpush1.msra.mxu0 %v3550
        %v3552 = vand.u32 %v2742, 4294901760
        %3553 = vmatprep.subr.mxu0 %v3552
        %v3554 = vand.u32 %v2741, 4294901760
        %3555 = vmatpush1.msra.mxu0 %v3554
        %v3556 = vand.u32 %v2740, 4294901760
        %3557 = vmatprep.subr.mxu0 %v3556
        %v3558 = vand.u32 %v2739, 4294901760
        %3559 = vmatpush1.msra.mxu0 %v3558
        %v3560 = vand.u32 %v2738, 4294901760
        %3561 = vmatprep.subr.mxu0 %v3560
        %v3562 = vand.u32 %v2737, 4294901760
        %3563 = vmatpush1.msra.mxu0 %v3562
        %v3564 = vand.u32 %v2736, 4294901760
        %3565 = vmatprep.subr.mxu0 %v3564
        %v3566 = vand.u32 %v2735, 4294901760
        %3567 = vmatpush1.msra.mxu0 %v3566
        %v3568 = vand.u32 %v2734, 4294901760
        %3569 = vmatprep.subr.mxu0 %v3568
        %v3570 = vand.u32 %v2733, 4294901760
        %3571 = vmatpush1.msra.mxu0 %v3570
        %v3572 = vand.u32 %v2732, 4294901760
        %3573 = vmatprep.subr.mxu0 %v3572
        %v3574 = vand.u32 %v2731, 4294901760
        %3575 = vmatpush1.msra.mxu0 %v3574
        %v3576 = vand.u32 %v2730, 4294901760
        %3577 = vmatprep.subr.mxu0 %v3576
        %v3578 = vand.u32 %v2729, 4294901760
        %3579 = vmatpush1.msra.mxu0 %v3578
        %v3580 = vand.u32 %v2728, 4294901760
        %3581 = vmatprep.subr.mxu0 %v3580
        %v3582 = vand.u32 %v2727, 4294901760
        %3583 = vmatpush1.msra.mxu0 %v3582
        %v3584 = vand.u32 %v2726, 4294901760
        %3585 = vmatprep.subr.mxu0 %v3584
        %v3586 = vand.u32 %v2725, 4294901760
        %3587 = vmatpush1.msra.mxu0 %v3586
        %v3588 = vand.u32 %v2724, 4294901760
        %3589 = vmatprep.subr.mxu0 %v3588
        %v3590 = vand.u32 %v2723, 4294901760
        %3591 = vmatpush1.msra.mxu0 %v3590
        %v3592 = vand.u32 %v2722, 4294901760
        %3593 = vmatprep.subr.mxu0 %v3592
        %v3594 = vand.u32 %v2721, 4294901760
        %3595 = vmatpush1.msra.mxu0 %v3594
        %v3596 = vand.u32 %v2720, 4294901760
        %3597 = vmatprep.subr.mxu0 %v3596
        %v3598 = vand.u32 %v2719, 4294901760
        %3599 = vmatpush1.msra.mxu0 %v3598
        %v3600 = vand.u32 %v2782, 4294901760
        %3601 = vmatprep.subr.mxu0 %v3600
        %v3602 = vand.u32 %v2781, 4294901760
        %3603 = vmatpush2.msra.mxu0 %v3602
        %v3604 = vand.u32 %v2780, 4294901760
        %3605 = vmatprep.subr.mxu0 %v3604
        %v3606 = vand.u32 %v2779, 4294901760
        %3607 = vmatpush2.msra.mxu0 %v3606
        %v3608 = vand.u32 %v2778, 4294901760
        %3609 = vmatprep.subr.mxu0 %v3608
        %v3610 = vand.u32 %v2777, 4294901760
        %3611 = vmatpush2.msra.mxu0 %v3610
        %v3612 = vand.u32 %v2776, 4294901760
        %3613 = vmatprep.subr.mxu0 %v3612
        %v3614 = vand.u32 %v2775, 4294901760
        %3615 = vmatpush2.msra.mxu0 %v3614
        %v3616 = vand.u32 %v2774, 4294901760
        %3617 = vmatprep.subr.mxu0 %v3616
        %v3618 = vand.u32 %v2773, 4294901760
        %3619 = vmatpush2.msra.mxu0 %v3618
        %v3620 = vand.u32 %v2772, 4294901760
        %3621 = vmatprep.subr.mxu0 %v3620
        %v3622 = vand.u32 %v2771, 4294901760
        %3623 = vmatpush2.msra.mxu0 %v3622
        %v3624 = vand.u32 %v2770, 4294901760
        %3625 = vmatprep.subr.mxu0 %v3624
        %v3626 = vand.u32 %v2769, 4294901760
        %3627 = vmatpush2.msra.mxu0 %v3626
        %v3628 = vand.u32 %v2768, 4294901760
        %3629 = vmatprep.subr.mxu0 %v3628
        %v3630 = vand.u32 %v2767, 4294901760
        %3631 = vmatpush2.msra.mxu0 %v3630
        %v3632 = vand.u32 %v2766, 4294901760
        %3633 = vmatprep.subr.mxu0 %v3632
        %v3634 = vand.u32 %v2765, 4294901760
        %3635 = vmatpush2.msra.mxu0 %v3634
        %v3636 = vand.u32 %v2764, 4294901760
        %3637 = vmatprep.subr.mxu0 %v3636
        %v3638 = vand.u32 %v2763, 4294901760
        %3639 = vmatpush2.msra.mxu0 %v3638
        %v3640 = vand.u32 %v2762, 4294901760
        %3641 = vmatprep.subr.mxu0 %v3640
        %v3642 = vand.u32 %v2761, 4294901760
        %3643 = vmatpush2.msra.mxu0 %v3642
        %v3644 = vand.u32 %v2760, 4294901760
        %3645 = vmatprep.subr.mxu0 %v3644
        %v3646 = vand.u32 %v2759, 4294901760
        %3647 = vmatpush2.msra.mxu0 %v3646
        %v3648 = vand.u32 %v2758, 4294901760
        %3649 = vmatprep.subr.mxu0 %v3648
        %v3650 = vand.u32 %v2757, 4294901760
        %3651 = vmatpush2.msra.mxu0 %v3650
        %v3652 = vand.u32 %v2756, 4294901760
        %3653 = vmatprep.subr.mxu0 %v3652
        %v3654 = vand.u32 %v2755, 4294901760
        %3655 = vmatpush2.msra.mxu0 %v3654
        %v3656 = vand.u32 %v2754, 4294901760
        %3657 = vmatprep.subr.mxu0 %v3656
        %v3658 = vand.u32 %v2753, 4294901760
        %3659 = vmatpush2.msra.mxu0 %v3658
        %v3660 = vand.u32 %v2752, 4294901760
        %3661 = vmatprep.subr.mxu0 %v3660
        %v3662 = vand.u32 %v2751, 4294901760
        %3663 = vmatpush2.msra.mxu0 %v3662
        %v3664 = vand.u32 %v2718, 4294901760
        %v3665 = vsub.f32 %v2718, %v3664
        %v3666 = vand.u32 %v3665, 4294901760
        %3667 = vmatprep.mubr.f32.mxu0 %v3666
        %v3668 = vand.u32 %v2717, 4294901760
        %v3669 = vsub.f32 %v2717, %v3668
        %v3670 = vand.u32 %v3669, 4294901760
        %3671 = vmatmul.mubr.f32.gmra.mxu0 %v3670
        %v3672 = vpop.f32.mrf.mxu0
        %v3673 = vadd.f32 %v3532, %v3672
        %v3674 = vpop.f32.mrf.mxu0
        %v3675 = vadd.f32 %v3534, %v3674
        %3676 = vdwg.mxu0
        %v3677 = vand.u32 %v2750, 4294901760
        %v3678 = vsub.f32 %v2750, %v3677
        %v3679 = vand.u32 %v3678, 4294901760
        %3680 = vmatprep.subr.mxu0 %v3679
        %v3681 = vand.u32 %v2749, 4294901760
        %v3682 = vsub.f32 %v2749, %v3681
        %v3683 = vand.u32 %v3682, 4294901760
        %3684 = vmatpush1.msra.mxu0 %v3683
        %v3685 = vand.u32 %v2748, 4294901760
        %v3686 = vsub.f32 %v2748, %v3685
        %v3687 = vand.u32 %v3686, 4294901760
        %3688 = vmatprep.subr.mxu0 %v3687
        %v3689 = vand.u32 %v2747, 4294901760
        %v3690 = vsub.f32 %v2747, %v3689
        %v3691 = vand.u32 %v3690, 4294901760
        %3692 = vmatpush1.msra.mxu0 %v3691
        %v3693 = vand.u32 %v2746, 4294901760
        %v3694 = vsub.f32 %v2746, %v3693
        %v3695 = vand.u32 %v3694, 4294901760
        %3696 = vmatprep.subr.mxu0 %v3695
        %v3697 = vand.u32 %v2745, 4294901760
        %v3698 = vsub.f32 %v2745, %v3697
        %v3699 = vand.u32 %v3698, 4294901760
        %3700 = vmatpush1.msra.mxu0 %v3699
        %v3701 = vand.u32 %v2744, 4294901760
        %v3702 = vsub.f32 %v2744, %v3701
        %v3703 = vand.u32 %v3702, 4294901760
        %3704 = vmatprep.subr.mxu0 %v3703
        %v3705 = vand.u32 %v2743, 4294901760
        %v3706 = vsub.f32 %v2743, %v3705
        %v3707 = vand.u32 %v3706, 4294901760
        %3708 = vmatpush1.msra.mxu0 %v3707
        %v3709 = vand.u32 %v2742, 4294901760
        %v3710 = vsub.f32 %v2742, %v3709
        %v3711 = vand.u32 %v3710, 4294901760
        %3712 = vmatprep.subr.mxu0 %v3711
        %v3713 = vand.u32 %v2741, 4294901760
        %v3714 = vsub.f32 %v2741, %v3713
        %v3715 = vand.u32 %v3714, 4294901760
        %3716 = vmatpush1.msra.mxu0 %v3715
        %v3717 = vand.u32 %v2740, 4294901760
        %v3718 = vsub.f32 %v2740, %v3717
        %v3719 = vand.u32 %v3718, 4294901760
        %3720 = vmatprep.subr.mxu0 %v3719
        %v3721 = vand.u32 %v2739, 4294901760
        %v3722 = vsub.f32 %v2739, %v3721
        %v3723 = vand.u32 %v3722, 4294901760
        %3724 = vmatpush1.msra.mxu0 %v3723
        %v3725 = vand.u32 %v2738, 4294901760
        %v3726 = vsub.f32 %v2738, %v3725
        %v3727 = vand.u32 %v3726, 4294901760
        %3728 = vmatprep.subr.mxu0 %v3727
        %v3729 = vand.u32 %v2737, 4294901760
        %v3730 = vsub.f32 %v2737, %v3729
        %v3731 = vand.u32 %v3730, 4294901760
        %3732 = vmatpush1.msra.mxu0 %v3731
        %v3733 = vand.u32 %v2736, 4294901760
        %v3734 = vsub.f32 %v2736, %v3733
        %v3735 = vand.u32 %v3734, 4294901760
        %3736 = vmatprep.subr.mxu0 %v3735
        %v3737 = vand.u32 %v2735, 4294901760
        %v3738 = vsub.f32 %v2735, %v3737
        %v3739 = vand.u32 %v3738, 4294901760
        %3740 = vmatpush1.msra.mxu0 %v3739
        %v3741 = vand.u32 %v2734, 4294901760
        %v3742 = vsub.f32 %v2734, %v3741
        %v3743 = vand.u32 %v3742, 4294901760
        %3744 = vmatprep.subr.mxu0 %v3743
        %v3745 = vand.u32 %v2733, 4294901760
        %v3746 = vsub.f32 %v2733, %v3745
        %v3747 = vand.u32 %v3746, 4294901760
        %3748 = vmatpush1.msra.mxu0 %v3747
        %v3749 = vand.u32 %v2732, 4294901760
        %v3750 = vsub.f32 %v2732, %v3749
        %v3751 = vand.u32 %v3750, 4294901760
        %3752 = vmatprep.subr.mxu0 %v3751
        %v3753 = vand.u32 %v2731, 4294901760
        %v3754 = vsub.f32 %v2731, %v3753
        %v3755 = vand.u32 %v3754, 4294901760
        %3756 = vmatpush1.msra.mxu0 %v3755
        %v3757 = vand.u32 %v2730, 4294901760
        %v3758 = vsub.f32 %v2730, %v3757
        %v3759 = vand.u32 %v3758, 4294901760
        %3760 = vmatprep.subr.mxu0 %v3759
        %v3761 = vand.u32 %v2729, 4294901760
        %v3762 = vsub.f32 %v2729, %v3761
        %v3763 = vand.u32 %v3762, 4294901760
        %3764 = vmatpush1.msra.mxu0 %v3763
        %v3765 = vand.u32 %v2728, 4294901760
        %v3766 = vsub.f32 %v2728, %v3765
        %v3767 = vand.u32 %v3766, 4294901760
        %3768 = vmatprep.subr.mxu0 %v3767
        %v3769 = vand.u32 %v2727, 4294901760
        %v3770 = vsub.f32 %v2727, %v3769
        %v3771 = vand.u32 %v3770, 4294901760
        %3772 = vmatpush1.msra.mxu0 %v3771
        %v3773 = vand.u32 %v2726, 4294901760
        %v3774 = vsub.f32 %v2726, %v3773
        %v3775 = vand.u32 %v3774, 4294901760
        %3776 = vmatprep.subr.mxu0 %v3775
        %v3777 = vand.u32 %v2725, 4294901760
        %v3778 = vsub.f32 %v2725, %v3777
        %v3779 = vand.u32 %v3778, 4294901760
        %3780 = vmatpush1.msra.mxu0 %v3779
        %v3781 = vand.u32 %v2724, 4294901760
        %v3782 = vsub.f32 %v2724, %v3781
        %v3783 = vand.u32 %v3782, 4294901760
        %3784 = vmatprep.subr.mxu0 %v3783
        %v3785 = vand.u32 %v2723, 4294901760
        %v3786 = vsub.f32 %v2723, %v3785
        %v3787 = vand.u32 %v3786, 4294901760
        %3788 = vmatpush1.msra.mxu0 %v3787
        %v3789 = vand.u32 %v2722, 4294901760
        %v3790 = vsub.f32 %v2722, %v3789
        %v3791 = vand.u32 %v3790, 4294901760
        %3792 = vmatprep.subr.mxu0 %v3791
        %v3793 = vand.u32 %v2721, 4294901760
        %v3794 = vsub.f32 %v2721, %v3793
        %v3795 = vand.u32 %v3794, 4294901760
        %3796 = vmatpush1.msra.mxu0 %v3795
        %v3797 = vand.u32 %v2720, 4294901760
        %v3798 = vsub.f32 %v2720, %v3797
        %v3799 = vand.u32 %v3798, 4294901760
        %3800 = vmatprep.subr.mxu0 %v3799
        %v3801 = vand.u32 %v2719, 4294901760
        %v3802 = vsub.f32 %v2719, %v3801
        %v3803 = vand.u32 %v3802, 4294901760
        %3804 = vmatpush1.msra.mxu0 %v3803
        %v3805 = vand.u32 %v2782, 4294901760
        %v3806 = vsub.f32 %v2782, %v3805
        %v3807 = vand.u32 %v3806, 4294901760
        %3808 = vmatprep.subr.mxu0 %v3807
        %v3809 = vand.u32 %v2781, 4294901760
        %v3810 = vsub.f32 %v2781, %v3809
        %v3811 = vand.u32 %v3810, 4294901760
        %3812 = vmatpush2.msra.mxu0 %v3811
        %v3813 = vand.u32 %v2780, 4294901760
        %v3814 = vsub.f32 %v2780, %v3813
        %v3815 = vand.u32 %v3814, 4294901760
        %3816 = vmatprep.subr.mxu0 %v3815
        %v3817 = vand.u32 %v2779, 4294901760
        %v3818 = vsub.f32 %v2779, %v3817
        %v3819 = vand.u32 %v3818, 4294901760
        %3820 = vmatpush2.msra.mxu0 %v3819
        %v3821 = vand.u32 %v2778, 4294901760
        %v3822 = vsub.f32 %v2778, %v3821
        %v3823 = vand.u32 %v3822, 4294901760
        %3824 = vmatprep.subr.mxu0 %v3823
        %v3825 = vand.u32 %v2777, 4294901760
        %v3826 = vsub.f32 %v2777, %v3825
        %v3827 = vand.u32 %v3826, 4294901760
        %3828 = vmatpush2.msra.mxu0 %v3827
        %v3829 = vand.u32 %v2776, 4294901760
        %v3830 = vsub.f32 %v2776, %v3829
        %v3831 = vand.u32 %v3830, 4294901760
        %3832 = vmatprep.subr.mxu0 %v3831
        %v3833 = vand.u32 %v2775, 4294901760
        %v3834 = vsub.f32 %v2775, %v3833
        %v3835 = vand.u32 %v3834, 4294901760
        %3836 = vmatpush2.msra.mxu0 %v3835
        %v3837 = vand.u32 %v2774, 4294901760
        %v3838 = vsub.f32 %v2774, %v3837
        %v3839 = vand.u32 %v3838, 4294901760
        %3840 = vmatprep.subr.mxu0 %v3839
        %v3841 = vand.u32 %v2773, 4294901760
        %v3842 = vsub.f32 %v2773, %v3841
        %v3843 = vand.u32 %v3842, 4294901760
        %3844 = vmatpush2.msra.mxu0 %v3843
        %v3845 = vand.u32 %v2772, 4294901760
        %v3846 = vsub.f32 %v2772, %v3845
        %v3847 = vand.u32 %v3846, 4294901760
        %3848 = vmatprep.subr.mxu0 %v3847
        %v3849 = vand.u32 %v2771, 4294901760
        %v3850 = vsub.f32 %v2771, %v3849
        %v3851 = vand.u32 %v3850, 4294901760
        %3852 = vmatpush2.msra.mxu0 %v3851
        %v3853 = vand.u32 %v2770, 4294901760
        %v3854 = vsub.f32 %v2770, %v3853
        %v3855 = vand.u32 %v3854, 4294901760
        %3856 = vmatprep.subr.mxu0 %v3855
        %v3857 = vand.u32 %v2769, 4294901760
        %v3858 = vsub.f32 %v2769, %v3857
        %v3859 = vand.u32 %v3858, 4294901760
        %3860 = vmatpush2.msra.mxu0 %v3859
        %v3861 = vand.u32 %v2768, 4294901760
        %v3862 = vsub.f32 %v2768, %v3861
        %v3863 = vand.u32 %v3862, 4294901760
        %3864 = vmatprep.subr.mxu0 %v3863
        %v3865 = vand.u32 %v2767, 4294901760
        %v3866 = vsub.f32 %v2767, %v3865
        %v3867 = vand.u32 %v3866, 4294901760
        %3868 = vmatpush2.msra.mxu0 %v3867
        %v3869 = vand.u32 %v2766, 4294901760
        %v3870 = vsub.f32 %v2766, %v3869
        %v3871 = vand.u32 %v3870, 4294901760
        %3872 = vmatprep.subr.mxu0 %v3871
        %v3873 = vand.u32 %v2765, 4294901760
        %v3874 = vsub.f32 %v2765, %v3873
        %v3875 = vand.u32 %v3874, 4294901760
        %3876 = vmatpush2.msra.mxu0 %v3875
        %v3877 = vand.u32 %v2764, 4294901760
        %v3878 = vsub.f32 %v2764, %v3877
        %v3879 = vand.u32 %v3878, 4294901760
        %3880 = vmatprep.subr.mxu0 %v3879
        %v3881 = vand.u32 %v2763, 4294901760
        %v3882 = vsub.f32 %v2763, %v3881
        %v3883 = vand.u32 %v3882, 4294901760
        %3884 = vmatpush2.msra.mxu0 %v3883
        %v3885 = vand.u32 %v2762, 4294901760
        %v3886 = vsub.f32 %v2762, %v3885
        %v3887 = vand.u32 %v3886, 4294901760
        %3888 = vmatprep.subr.mxu0 %v3887
        %v3889 = vand.u32 %v2761, 4294901760
        %v3890 = vsub.f32 %v2761, %v3889
        %v3891 = vand.u32 %v3890, 4294901760
        %3892 = vmatpush2.msra.mxu0 %v3891
        %v3893 = vand.u32 %v2760, 4294901760
        %v3894 = vsub.f32 %v2760, %v3893
        %v3895 = vand.u32 %v3894, 4294901760
        %3896 = vmatprep.subr.mxu0 %v3895
        %v3897 = vand.u32 %v2759, 4294901760
        %v3898 = vsub.f32 %v2759, %v3897
        %v3899 = vand.u32 %v3898, 4294901760
        %3900 = vmatpush2.msra.mxu0 %v3899
        %v3901 = vand.u32 %v2758, 4294901760
        %v3902 = vsub.f32 %v2758, %v3901
        %v3903 = vand.u32 %v3902, 4294901760
        %3904 = vmatprep.subr.mxu0 %v3903
        %v3905 = vand.u32 %v2757, 4294901760
        %v3906 = vsub.f32 %v2757, %v3905
        %v3907 = vand.u32 %v3906, 4294901760
        %3908 = vmatpush2.msra.mxu0 %v3907
        %v3909 = vand.u32 %v2756, 4294901760
        %v3910 = vsub.f32 %v2756, %v3909
        %v3911 = vand.u32 %v3910, 4294901760
        %3912 = vmatprep.subr.mxu0 %v3911
        %v3913 = vand.u32 %v2755, 4294901760
        %v3914 = vsub.f32 %v2755, %v3913
        %v3915 = vand.u32 %v3914, 4294901760
        %3916 = vmatpush2.msra.mxu0 %v3915
        %v3917 = vand.u32 %v2754, 4294901760
        %v3918 = vsub.f32 %v2754, %v3917
        %v3919 = vand.u32 %v3918, 4294901760
        %3920 = vmatprep.subr.mxu0 %v3919
        %v3921 = vand.u32 %v2753, 4294901760
        %v3922 = vsub.f32 %v2753, %v3921
        %v3923 = vand.u32 %v3922, 4294901760
        %3924 = vmatpush2.msra.mxu0 %v3923
        %v3925 = vand.u32 %v2752, 4294901760
        %v3926 = vsub.f32 %v2752, %v3925
        %v3927 = vand.u32 %v3926, 4294901760
        %3928 = vmatprep.subr.mxu0 %v3927
        %v3929 = vand.u32 %v2751, 4294901760
        %v3930 = vsub.f32 %v2751, %v3929
        %v3931 = vand.u32 %v3930, 4294901760
        %3932 = vmatpush2.msra.mxu0 %v3931
        %v3933 = vand.u32 %v2718, 4294901760
        %3934 = vmatprep.mubr.f32.mxu0 %v3933
        %v3935 = vand.u32 %v2717, 4294901760
        %3936 = vmatmul.mubr.f32.gmra.mxu0 %v3935
        %v3937 = vpop.f32.mrf.mxu0
        %v3938 = vadd.f32 %v3673, %v3937
        %v3939 = vpop.f32.mrf.mxu0
        %v3940 = vadd.f32 %v3675, %v3939
        %3941 = vdwg.mxu0
        %v3942 = vand.u32 %v2750, 4294901760
        %3943 = vmatprep.subr.mxu0 %v3942
        %v3944 = vand.u32 %v2749, 4294901760
        %3945 = vmatpush1.msra.mxu0 %v3944
        %v3946 = vand.u32 %v2748, 4294901760
        %3947 = vmatprep.subr.mxu0 %v3946
        %v3948 = vand.u32 %v2747, 4294901760
        %3949 = vmatpush1.msra.mxu0 %v3948
        %v3950 = vand.u32 %v2746, 4294901760
        %3951 = vmatprep.subr.mxu0 %v3950
        %v3952 = vand.u32 %v2745, 4294901760
        %3953 = vmatpush1.msra.mxu0 %v3952
        %v3954 = vand.u32 %v2744, 4294901760
        %3955 = vmatprep.subr.mxu0 %v3954
        %v3956 = vand.u32 %v2743, 4294901760
        %3957 = vmatpush1.msra.mxu0 %v3956
        %v3958 = vand.u32 %v2742, 4294901760
        %3959 = vmatprep.subr.mxu0 %v3958
        %v3960 = vand.u32 %v2741, 4294901760
        %3961 = vmatpush1.msra.mxu0 %v3960
        %v3962 = vand.u32 %v2740, 4294901760
        %3963 = vmatprep.subr.mxu0 %v3962
        %v3964 = vand.u32 %v2739, 4294901760
        %3965 = vmatpush1.msra.mxu0 %v3964
        %v3966 = vand.u32 %v2738, 4294901760
        %3967 = vmatprep.subr.mxu0 %v3966
        %v3968 = vand.u32 %v2737, 4294901760
        %3969 = vmatpush1.msra.mxu0 %v3968
        %v3970 = vand.u32 %v2736, 4294901760
        %3971 = vmatprep.subr.mxu0 %v3970
        %v3972 = vand.u32 %v2735, 4294901760
        %3973 = vmatpush1.msra.mxu0 %v3972
        %v3974 = vand.u32 %v2734, 4294901760
        %3975 = vmatprep.subr.mxu0 %v3974
        %v3976 = vand.u32 %v2733, 4294901760
        %3977 = vmatpush1.msra.mxu0 %v3976
        %v3978 = vand.u32 %v2732, 4294901760
        %3979 = vmatprep.subr.mxu0 %v3978
        %v3980 = vand.u32 %v2731, 4294901760
        %3981 = vmatpush1.msra.mxu0 %v3980
        %v3982 = vand.u32 %v2730, 4294901760
        %3983 = vmatprep.subr.mxu0 %v3982
        %v3984 = vand.u32 %v2729, 4294901760
        %3985 = vmatpush1.msra.mxu0 %v3984
        %v3986 = vand.u32 %v2728, 4294901760
        %3987 = vmatprep.subr.mxu0 %v3986
        %v3988 = vand.u32 %v2727, 4294901760
        %3989 = vmatpush1.msra.mxu0 %v3988
        %v3990 = vand.u32 %v2726, 4294901760
        %3991 = vmatprep.subr.mxu0 %v3990
        %v3992 = vand.u32 %v2725, 4294901760
        %3993 = vmatpush1.msra.mxu0 %v3992
        %v3994 = vand.u32 %v2724, 4294901760
        %3995 = vmatprep.subr.mxu0 %v3994
        %v3996 = vand.u32 %v2723, 4294901760
        %3997 = vmatpush1.msra.mxu0 %v3996
        %v3998 = vand.u32 %v2722, 4294901760
        %3999 = vmatprep.subr.mxu0 %v3998
        %v4000 = vand.u32 %v2721, 4294901760
        %4001 = vmatpush1.msra.mxu0 %v4000
        %v4002 = vand.u32 %v2720, 4294901760
        %4003 = vmatprep.subr.mxu0 %v4002
        %v4004 = vand.u32 %v2719, 4294901760
        %4005 = vmatpush1.msra.mxu0 %v4004
        %v4006 = vand.u32 %v2782, 4294901760
        %4007 = vmatprep.subr.mxu0 %v4006
        %v4008 = vand.u32 %v2781, 4294901760
        %4009 = vmatpush2.msra.mxu0 %v4008
        %v4010 = vand.u32 %v2780, 4294901760
        %4011 = vmatprep.subr.mxu0 %v4010
        %v4012 = vand.u32 %v2779, 4294901760
        %4013 = vmatpush2.msra.mxu0 %v4012
        %v4014 = vand.u32 %v2778, 4294901760
        %4015 = vmatprep.subr.mxu0 %v4014
        %v4016 = vand.u32 %v2777, 4294901760
        %4017 = vmatpush2.msra.mxu0 %v4016
        %v4018 = vand.u32 %v2776, 4294901760
        %4019 = vmatprep.subr.mxu0 %v4018
        %v4020 = vand.u32 %v2775, 4294901760
        %4021 = vmatpush2.msra.mxu0 %v4020
        %v4022 = vand.u32 %v2774, 4294901760
        %4023 = vmatprep.subr.mxu0 %v4022
        %v4024 = vand.u32 %v2773, 4294901760
        %4025 = vmatpush2.msra.mxu0 %v4024
        %v4026 = vand.u32 %v2772, 4294901760
        %4027 = vmatprep.subr.mxu0 %v4026
        %v4028 = vand.u32 %v2771, 4294901760
        %4029 = vmatpush2.msra.mxu0 %v4028
        %v4030 = vand.u32 %v2770, 4294901760
        %4031 = vmatprep.subr.mxu0 %v4030
        %v4032 = vand.u32 %v2769, 4294901760
        %4033 = vmatpush2.msra.mxu0 %v4032
        %v4034 = vand.u32 %v2768, 4294901760
        %4035 = vmatprep.subr.mxu0 %v4034
        %v4036 = vand.u32 %v2767, 4294901760
        %4037 = vmatpush2.msra.mxu0 %v4036
        %v4038 = vand.u32 %v2766, 4294901760
        %4039 = vmatprep.subr.mxu0 %v4038
        %v4040 = vand.u32 %v2765, 4294901760
        %4041 = vmatpush2.msra.mxu0 %v4040
        %v4042 = vand.u32 %v2764, 4294901760
        %4043 = vmatprep.subr.mxu0 %v4042
        %v4044 = vand.u32 %v2763, 4294901760
        %4045 = vmatpush2.msra.mxu0 %v4044
        %v4046 = vand.u32 %v2762, 4294901760
        %4047 = vmatprep.subr.mxu0 %v4046
        %v4048 = vand.u32 %v2761, 4294901760
        %4049 = vmatpush2.msra.mxu0 %v4048
        %v4050 = vand.u32 %v2760, 4294901760
        %4051 = vmatprep.subr.mxu0 %v4050
        %v4052 = vand.u32 %v2759, 4294901760
        %4053 = vmatpush2.msra.mxu0 %v4052
        %v4054 = vand.u32 %v2758, 4294901760
        %4055 = vmatprep.subr.mxu0 %v4054
        %v4056 = vand.u32 %v2757, 4294901760
        %4057 = vmatpush2.msra.mxu0 %v4056
        %v4058 = vand.u32 %v2756, 4294901760
        %4059 = vmatprep.subr.mxu0 %v4058
        %v4060 = vand.u32 %v2755, 4294901760
        %4061 = vmatpush2.msra.mxu0 %v4060
        %v4062 = vand.u32 %v2754, 4294901760
        %4063 = vmatprep.subr.mxu0 %v4062
        %v4064 = vand.u32 %v2753, 4294901760
        %4065 = vmatpush2.msra.mxu0 %v4064
        %v4066 = vand.u32 %v2752, 4294901760
        %4067 = vmatprep.subr.mxu0 %v4066
        %v4068 = vand.u32 %v2751, 4294901760
        %4069 = vmatpush2.msra.mxu0 %v4068
        %v4070 = vand.u32 %v2718, 4294901760
        %4071 = vmatprep.mubr.f32.mxu0 %v4070
        %v4072 = vand.u32 %v2717, 4294901760
        %4073 = vmatmul.mubr.f32.gmra.mxu0 %v4072
        %v4074 = vpop.f32.mrf.mxu0
        %v4075 = vadd.f32 %v3938, %v4074
        %v4076 = vpop.f32.mrf.mxu0
        %v4077 = vadd.f32 %v3940, %v4076
        %4078 = vdwg.mxu0
        %v4079 = vadd.f32 %v4075, %v4077
        %4080 = vadd.xlane.f32.xlu0 %v4079
        %v4081 = vpop.xlane.xlu0 %4080
        %v4082 = vmul.f32 %v4081, %v2667
        %v4083 = vsub.f32 %v4075, %v4082
        %v4084 = vsub.f32 %v4077, %v4082
        %v4085 = vmul.f32 %v4083, %v4083
        %v4086 = vmul.f32 %v4084, %v4084
        %v4087 = vadd.f32 %v4085, %v4086
        %4088 = vadd.xlane.f32.xlu0 %v4087
        %v4089 = vpop.xlane.xlu0 %4088
        %v4090 = vmul.f32 %v4089, %v2667
        %v4091 = vadd.f32 %v4090, 1e-05
        %v4092 = vrsqrt.pop %v4091
        %v4093 = vmul.f32 %v4083, %v4092
        %v4094 = vmul.f32 %v4084, %v4092
        %v4095 = vld [vmem:[%s11] sm:$0x3]
        %v4097 = vlaneseq
        %v4098 = vshrl.u32 %v4097, 7
        %v4099 = vsub.s32 0, %v4098
        %v4100 = vrot.slane %v4095, %v4099
        %v4101 = vlaneseq
        %v4102 = vshrl.u32 %v4101, 7
        %v4103 = vsub.s32 1, %v4102
        %v4104 = vrot.slane %v4095, %v4103
        %v4107 = vmul.f32 %v4093, %v4100
        %v4108 = vmul.f32 %v4094, %v4104
        %v4109 = vld [vmem:[%s12] sm:$0x3]
        %v4111 = vlaneseq
        %v4112 = vshrl.u32 %v4111, 7
        %v4113 = vsub.s32 0, %v4112
        %v4114 = vrot.slane %v4109, %v4113
        %v4115 = vlaneseq
        %v4116 = vshrl.u32 %v4115, 7
        %v4117 = vsub.s32 1, %v4116
        %v4118 = vrot.slane %v4109, %v4117
        %v4121 = vadd.f32 %v4107, %v4114
        %v4122 = vadd.f32 %v4108, %v4118
        %v4123 = vld [vmem:[#allocation7] sm:$0xff]
        %v4124 = vld [vmem:[#allocation7 + $0x8] sm:$0xff]
        %v4125 = vld [vmem:[#allocation7 + $0x10] sm:$0xff]
        %v4126 = vld [vmem:[#allocation7 + $0x18] sm:$0xff]
        %v4127 = vld [vmem:[#allocation7 + $0x20] sm:$0xff]
        %v4128 = vld [vmem:[#allocation7 + $0x28] sm:$0xff]
        %v4129 = vld [vmem:[#allocation7 + $0x30] sm:$0xff]
        %v4130 = vld [vmem:[#allocation7 + $0x38] sm:$0xff]
        %v4131 = vld [vmem:[#allocation7 + $0x40] sm:$0xff]
        %v4132 = vld [vmem:[#allocation7 + $0x48] sm:$0xff]
        %v4133 = vld [vmem:[#allocation7 + $0x50] sm:$0xff]
        %v4134 = vld [vmem:[#allocation7 + $0x58] sm:$0xff]
        %v4135 = vld [vmem:[#allocation7 + $0x60] sm:$0xff]
        %v4136 = vld [vmem:[#allocation7 + $0x68] sm:$0xff]
        %v4137 = vld [vmem:[#allocation7 + $0x70] sm:$0xff]
        %v4138 = vld [vmem:[#allocation7 + $0x78] sm:$0xff]
        %v4139 = vld [vmem:[#allocation7 + $0x80] sm:$0xff]
        %v4140 = vld [vmem:[#allocation7 + $0x88] sm:$0xff]
        %v4141 = vld [vmem:[#allocation7 + $0x90] sm:$0xff]
        %v4142 = vld [vmem:[#allocation7 + $0x98] sm:$0xff]
        %v4143 = vld [vmem:[#allocation7 + $0xa0] sm:$0xff]
        %v4144 = vld [vmem:[#allocation7 + $0xa8] sm:$0xff]
        %v4145 = vld [vmem:[#allocation7 + $0xb0] sm:$0xff]
        %v4146 = vld [vmem:[#allocation7 + $0xb8] sm:$0xff]
        %v4147 = vld [vmem:[#allocation7 + $0xc0] sm:$0xff]
        %v4148 = vld [vmem:[#allocation7 + $0xc8] sm:$0xff]
        %v4149 = vld [vmem:[#allocation7 + $0xd0] sm:$0xff]
        %v4150 = vld [vmem:[#allocation7 + $0xd8] sm:$0xff]
        %v4151 = vld [vmem:[#allocation7 + $0xe0] sm:$0xff]
        %v4152 = vld [vmem:[#allocation7 + $0xe8] sm:$0xff]
        %v4153 = vld [vmem:[#allocation7 + $0xf0] sm:$0xff]
        %v4154 = vld [vmem:[#allocation7 + $0xf8] sm:$0xff]
        %v4155 = vld [vmem:[%s14] sm:$0x3]
        %v4157 = vlaneseq
        %v4158 = vshrl.u32 %v4157, 7
        %v4159 = vsub.s32 0, %v4158
        %v4160 = vrot.slane %v4155, %v4159
        %v4161 = vlaneseq
        %v4162 = vshrl.u32 %v4161, 7
        %v4163 = vsub.s32 1, %v4162
        %v4164 = vrot.slane %v4155, %v4163
        %v4167 = vand.u32 %v4154, 4294901760
        %4168 = vmatprep.subr.mxu0 %v4167
        %v4169 = vand.u32 %v4153, 4294901760
        %4170 = vmatpush1.msra.mxu0 %v4169
        %v4171 = vand.u32 %v4152, 4294901760
        %4172 = vmatprep.subr.mxu0 %v4171
        %v4173 = vand.u32 %v4151, 4294901760
        %4174 = vmatpush1.msra.mxu0 %v4173
        %v4175 = vand.u32 %v4150, 4294901760
        %4176 = vmatprep.subr.mxu0 %v4175
        %v4177 = vand.u32 %v4149, 4294901760
        %4178 = vmatpush1.msra.mxu0 %v4177
        %v4179 = vand.u32 %v4148, 4294901760
        %4180 = vmatprep.subr.mxu0 %v4179
        %v4181 = vand.u32 %v4147, 4294901760
        %4182 = vmatpush1.msra.mxu0 %v4181
        %v4183 = vand.u32 %v4146, 4294901760
        %4184 = vmatprep.subr.mxu0 %v4183
        %v4185 = vand.u32 %v4145, 4294901760
        %4186 = vmatpush1.msra.mxu0 %v4185
        %v4187 = vand.u32 %v4144, 4294901760
        %4188 = vmatprep.subr.mxu0 %v4187
        %v4189 = vand.u32 %v4143, 4294901760
        %4190 = vmatpush1.msra.mxu0 %v4189
        %v4191 = vand.u32 %v4142, 4294901760
        %4192 = vmatprep.subr.mxu0 %v4191
        %v4193 = vand.u32 %v4141, 4294901760
        %4194 = vmatpush1.msra.mxu0 %v4193
        %v4195 = vand.u32 %v4140, 4294901760
        %4196 = vmatprep.subr.mxu0 %v4195
        %v4197 = vand.u32 %v4139, 4294901760
        %4198 = vmatpush1.msra.mxu0 %v4197
        %v4199 = vand.u32 %v4138, 4294901760
        %4200 = vmatprep.subr.mxu0 %v4199
        %v4201 = vand.u32 %v4137, 4294901760
        %4202 = vmatpush1.msra.mxu0 %v4201
        %v4203 = vand.u32 %v4136, 4294901760
        %4204 = vmatprep.subr.mxu0 %v4203
        %v4205 = vand.u32 %v4135, 4294901760
        %4206 = vmatpush1.msra.mxu0 %v4205
        %v4207 = vand.u32 %v4134, 4294901760
        %4208 = vmatprep.subr.mxu0 %v4207
        %v4209 = vand.u32 %v4133, 4294901760
        %4210 = vmatpush1.msra.mxu0 %v4209
        %v4211 = vand.u32 %v4132, 4294901760
        %4212 = vmatprep.subr.mxu0 %v4211
        %v4213 = vand.u32 %v4131, 4294901760
        %4214 = vmatpush1.msra.mxu0 %v4213
        %v4215 = vand.u32 %v4130, 4294901760
        %4216 = vmatprep.subr.mxu0 %v4215
        %v4217 = vand.u32 %v4129, 4294901760
        %4218 = vmatpush1.msra.mxu0 %v4217
        %v4219 = vand.u32 %v4128, 4294901760
        %4220 = vmatprep.subr.mxu0 %v4219
        %v4221 = vand.u32 %v4127, 4294901760
        %4222 = vmatpush1.msra.mxu0 %v4221
        %v4223 = vand.u32 %v4126, 4294901760
        %4224 = vmatprep.subr.mxu0 %v4223
        %v4225 = vand.u32 %v4125, 4294901760
        %4226 = vmatpush1.msra.mxu0 %v4225
        %v4227 = vand.u32 %v4124, 4294901760
        %4228 = vmatprep.subr.mxu0 %v4227
        %v4229 = vand.u32 %v4123, 4294901760
        %4230 = vmatpush1.msra.mxu0 %v4229
        %4231 = vmatprep.subr.mxu0 0.0
        %4232 = vmatpush2.msra.mxu0 0.0
        %4233 = vmatprep.subr.mxu0 0.0
        %4234 = vmatpush2.msra.mxu0 0.0
        %4235 = vmatprep.subr.mxu0 0.0
        %4236 = vmatpush2.msra.mxu0 0.0
        %4237 = vmatprep.subr.mxu0 0.0
        %4238 = vmatpush2.msra.mxu0 0.0
        %4239 = vmatprep.subr.mxu0 0.0
        %4240 = vmatpush2.msra.mxu0 0.0
        %4241 = vmatprep.subr.mxu0 0.0
        %4242 = vmatpush2.msra.mxu0 0.0
        %4243 = vmatprep.subr.mxu0 0.0
        %4244 = vmatpush2.msra.mxu0 0.0
        %4245 = vmatprep.subr.mxu0 0.0
        %4246 = vmatpush2.msra.mxu0 0.0
        %4247 = vmatprep.subr.mxu0 0.0
        %4248 = vmatpush2.msra.mxu0 0.0
        %4249 = vmatprep.subr.mxu0 0.0
        %4250 = vmatpush2.msra.mxu0 0.0
        %4251 = vmatprep.subr.mxu0 0.0
        %4252 = vmatpush2.msra.mxu0 0.0
        %4253 = vmatprep.subr.mxu0 0.0
        %4254 = vmatpush2.msra.mxu0 0.0
        %4255 = vmatprep.subr.mxu0 0.0
        %4256 = vmatpush2.msra.mxu0 0.0
        %4257 = vmatprep.subr.mxu0 0.0
        %4258 = vmatpush2.msra.mxu0 0.0
        %4259 = vmatprep.subr.mxu0 0.0
        %4260 = vmatpush2.msra.mxu0 0.0
        %4261 = vmatprep.subr.mxu0 0.0
        %4262 = vmatpush2.msra.mxu0 0.0
        %4263 = vmatprep.mubr.f32.mxu0 0.0
        %v4264 = vand.u32 %v534, 4294901760
        %v4265 = vsub.f32 %v534, %v4264
        %v4266 = vand.u32 %v4265, 4294901760
        %v4267 = vsub.f32 %v4265, %v4266
        %v4268 = vand.u32 %v4267, 4294901760
        %4269 = vmatmul.mubr.f32.gmra.mxu0 %v4268
        %v4270 = vpop.f32.mrf.mxu0
        %v4271 = vadd.f32 %v4160, %v4270
        %v4272 = vpop.f32.mrf.mxu0
        %v4273 = vadd.f32 %v4164, %v4272
        %4274 = vdwg.mxu0
        %v4275 = vand.u32 %v4154, 4294901760
        %v4276 = vsub.f32 %v4154, %v4275
        %v4277 = vand.u32 %v4276, 4294901760
        %v4278 = vsub.f32 %v4276, %v4277
        %v4279 = vand.u32 %v4278, 4294901760
        %4280 = vmatprep.subr.mxu0 %v4279
        %v4281 = vand.u32 %v4153, 4294901760
        %v4282 = vsub.f32 %v4153, %v4281
        %v4283 = vand.u32 %v4282, 4294901760
        %v4284 = vsub.f32 %v4282, %v4283
        %v4285 = vand.u32 %v4284, 4294901760
        %4286 = vmatpush1.msra.mxu0 %v4285
        %v4287 = vand.u32 %v4152, 4294901760
        %v4288 = vsub.f32 %v4152, %v4287
        %v4289 = vand.u32 %v4288, 4294901760
        %v4290 = vsub.f32 %v4288, %v4289
        %v4291 = vand.u32 %v4290, 4294901760
        %4292 = vmatprep.subr.mxu0 %v4291
        %v4293 = vand.u32 %v4151, 4294901760
        %v4294 = vsub.f32 %v4151, %v4293
        %v4295 = vand.u32 %v4294, 4294901760
        %v4296 = vsub.f32 %v4294, %v4295
        %v4297 = vand.u32 %v4296, 4294901760
        %4298 = vmatpush1.msra.mxu0 %v4297
        %v4299 = vand.u32 %v4150, 4294901760
        %v4300 = vsub.f32 %v4150, %v4299
        %v4301 = vand.u32 %v4300, 4294901760
        %v4302 = vsub.f32 %v4300, %v4301
        %v4303 = vand.u32 %v4302, 4294901760
        %4304 = vmatprep.subr.mxu0 %v4303
        %v4305 = vand.u32 %v4149, 4294901760
        %v4306 = vsub.f32 %v4149, %v4305
        %v4307 = vand.u32 %v4306, 4294901760
        %v4308 = vsub.f32 %v4306, %v4307
        %v4309 = vand.u32 %v4308, 4294901760
        %4310 = vmatpush1.msra.mxu0 %v4309
        %v4311 = vand.u32 %v4148, 4294901760
        %v4312 = vsub.f32 %v4148, %v4311
        %v4313 = vand.u32 %v4312, 4294901760
        %v4314 = vsub.f32 %v4312, %v4313
        %v4315 = vand.u32 %v4314, 4294901760
        %4316 = vmatprep.subr.mxu0 %v4315
        %v4317 = vand.u32 %v4147, 4294901760
        %v4318 = vsub.f32 %v4147, %v4317
        %v4319 = vand.u32 %v4318, 4294901760
        %v4320 = vsub.f32 %v4318, %v4319
        %v4321 = vand.u32 %v4320, 4294901760
        %4322 = vmatpush1.msra.mxu0 %v4321
        %v4323 = vand.u32 %v4146, 4294901760
        %v4324 = vsub.f32 %v4146, %v4323
        %v4325 = vand.u32 %v4324, 4294901760
        %v4326 = vsub.f32 %v4324, %v4325
        %v4327 = vand.u32 %v4326, 4294901760
        %4328 = vmatprep.subr.mxu0 %v4327
        %v4329 = vand.u32 %v4145, 4294901760
        %v4330 = vsub.f32 %v4145, %v4329
        %v4331 = vand.u32 %v4330, 4294901760
        %v4332 = vsub.f32 %v4330, %v4331
        %v4333 = vand.u32 %v4332, 4294901760
        %4334 = vmatpush1.msra.mxu0 %v4333
        %v4335 = vand.u32 %v4144, 4294901760
        %v4336 = vsub.f32 %v4144, %v4335
        %v4337 = vand.u32 %v4336, 4294901760
        %v4338 = vsub.f32 %v4336, %v4337
        %v4339 = vand.u32 %v4338, 4294901760
        %4340 = vmatprep.subr.mxu0 %v4339
        %v4341 = vand.u32 %v4143, 4294901760
        %v4342 = vsub.f32 %v4143, %v4341
        %v4343 = vand.u32 %v4342, 4294901760
        %v4344 = vsub.f32 %v4342, %v4343
        %v4345 = vand.u32 %v4344, 4294901760
        %4346 = vmatpush1.msra.mxu0 %v4345
        %v4347 = vand.u32 %v4142, 4294901760
        %v4348 = vsub.f32 %v4142, %v4347
        %v4349 = vand.u32 %v4348, 4294901760
        %v4350 = vsub.f32 %v4348, %v4349
        %v4351 = vand.u32 %v4350, 4294901760
        %4352 = vmatprep.subr.mxu0 %v4351
        %v4353 = vand.u32 %v4141, 4294901760
        %v4354 = vsub.f32 %v4141, %v4353
        %v4355 = vand.u32 %v4354, 4294901760
        %v4356 = vsub.f32 %v4354, %v4355
        %v4357 = vand.u32 %v4356, 4294901760
        %4358 = vmatpush1.msra.mxu0 %v4357
        %v4359 = vand.u32 %v4140, 4294901760
        %v4360 = vsub.f32 %v4140, %v4359
        %v4361 = vand.u32 %v4360, 4294901760
        %v4362 = vsub.f32 %v4360, %v4361
        %v4363 = vand.u32 %v4362, 4294901760
        %4364 = vmatprep.subr.mxu0 %v4363
        %v4365 = vand.u32 %v4139, 4294901760
        %v4366 = vsub.f32 %v4139, %v4365
        %v4367 = vand.u32 %v4366, 4294901760
        %v4368 = vsub.f32 %v4366, %v4367
        %v4369 = vand.u32 %v4368, 4294901760
        %4370 = vmatpush1.msra.mxu0 %v4369
        %v4371 = vand.u32 %v4138, 4294901760
        %v4372 = vsub.f32 %v4138, %v4371
        %v4373 = vand.u32 %v4372, 4294901760
        %v4374 = vsub.f32 %v4372, %v4373
        %v4375 = vand.u32 %v4374, 4294901760
        %4376 = vmatprep.subr.mxu0 %v4375
        %v4377 = vand.u32 %v4137, 4294901760
        %v4378 = vsub.f32 %v4137, %v4377
        %v4379 = vand.u32 %v4378, 4294901760
        %v4380 = vsub.f32 %v4378, %v4379
        %v4381 = vand.u32 %v4380, 4294901760
        %4382 = vmatpush1.msra.mxu0 %v4381
        %v4383 = vand.u32 %v4136, 4294901760
        %v4384 = vsub.f32 %v4136, %v4383
        %v4385 = vand.u32 %v4384, 4294901760
        %v4386 = vsub.f32 %v4384, %v4385
        %v4387 = vand.u32 %v4386, 4294901760
        %4388 = vmatprep.subr.mxu0 %v4387
        %v4389 = vand.u32 %v4135, 4294901760
        %v4390 = vsub.f32 %v4135, %v4389
        %v4391 = vand.u32 %v4390, 4294901760
        %v4392 = vsub.f32 %v4390, %v4391
        %v4393 = vand.u32 %v4392, 4294901760
        %4394 = vmatpush1.msra.mxu0 %v4393
        %v4395 = vand.u32 %v4134, 4294901760
        %v4396 = vsub.f32 %v4134, %v4395
        %v4397 = vand.u32 %v4396, 4294901760
        %v4398 = vsub.f32 %v4396, %v4397
        %v4399 = vand.u32 %v4398, 4294901760
        %4400 = vmatprep.subr.mxu0 %v4399
        %v4401 = vand.u32 %v4133, 4294901760
        %v4402 = vsub.f32 %v4133, %v4401
        %v4403 = vand.u32 %v4402, 4294901760
        %v4404 = vsub.f32 %v4402, %v4403
        %v4405 = vand.u32 %v4404, 4294901760
        %4406 = vmatpush1.msra.mxu0 %v4405
        %v4407 = vand.u32 %v4132, 4294901760
        %v4408 = vsub.f32 %v4132, %v4407
        %v4409 = vand.u32 %v4408, 4294901760
        %v4410 = vsub.f32 %v4408, %v4409
        %v4411 = vand.u32 %v4410, 4294901760
        %4412 = vmatprep.subr.mxu0 %v4411
        %v4413 = vand.u32 %v4131, 4294901760
        %v4414 = vsub.f32 %v4131, %v4413
        %v4415 = vand.u32 %v4414, 4294901760
        %v4416 = vsub.f32 %v4414, %v4415
        %v4417 = vand.u32 %v4416, 4294901760
        %4418 = vmatpush1.msra.mxu0 %v4417
        %v4419 = vand.u32 %v4130, 4294901760
        %v4420 = vsub.f32 %v4130, %v4419
        %v4421 = vand.u32 %v4420, 4294901760
        %v4422 = vsub.f32 %v4420, %v4421
        %v4423 = vand.u32 %v4422, 4294901760
        %4424 = vmatprep.subr.mxu0 %v4423
        %v4425 = vand.u32 %v4129, 4294901760
        %v4426 = vsub.f32 %v4129, %v4425
        %v4427 = vand.u32 %v4426, 4294901760
        %v4428 = vsub.f32 %v4426, %v4427
        %v4429 = vand.u32 %v4428, 4294901760
        %4430 = vmatpush1.msra.mxu0 %v4429
        %v4431 = vand.u32 %v4128, 4294901760
        %v4432 = vsub.f32 %v4128, %v4431
        %v4433 = vand.u32 %v4432, 4294901760
        %v4434 = vsub.f32 %v4432, %v4433
        %v4435 = vand.u32 %v4434, 4294901760
        %4436 = vmatprep.subr.mxu0 %v4435
        %v4437 = vand.u32 %v4127, 4294901760
        %v4438 = vsub.f32 %v4127, %v4437
        %v4439 = vand.u32 %v4438, 4294901760
        %v4440 = vsub.f32 %v4438, %v4439
        %v4441 = vand.u32 %v4440, 4294901760
        %4442 = vmatpush1.msra.mxu0 %v4441
        %v4443 = vand.u32 %v4126, 4294901760
        %v4444 = vsub.f32 %v4126, %v4443
        %v4445 = vand.u32 %v4444, 4294901760
        %v4446 = vsub.f32 %v4444, %v4445
        %v4447 = vand.u32 %v4446, 4294901760
        %4448 = vmatprep.subr.mxu0 %v4447
        %v4449 = vand.u32 %v4125, 4294901760
        %v4450 = vsub.f32 %v4125, %v4449
        %v4451 = vand.u32 %v4450, 4294901760
        %v4452 = vsub.f32 %v4450, %v4451
        %v4453 = vand.u32 %v4452, 4294901760
        %4454 = vmatpush1.msra.mxu0 %v4453
        %v4455 = vand.u32 %v4124, 4294901760
        %v4456 = vsub.f32 %v4124, %v4455
        %v4457 = vand.u32 %v4456, 4294901760
        %v4458 = vsub.f32 %v4456, %v4457
        %v4459 = vand.u32 %v4458, 4294901760
        %4460 = vmatprep.subr.mxu0 %v4459
        %v4461 = vand.u32 %v4123, 4294901760
        %v4462 = vsub.f32 %v4123, %v4461
        %v4463 = vand.u32 %v4462, 4294901760
        %v4464 = vsub.f32 %v4462, %v4463
        %v4465 = vand.u32 %v4464, 4294901760
        %4466 = vmatpush1.msra.mxu0 %v4465
        %4467 = vmatprep.subr.mxu0 0.0
        %4468 = vmatpush2.msra.mxu0 0.0
        %4469 = vmatprep.subr.mxu0 0.0
        %4470 = vmatpush2.msra.mxu0 0.0
        %4471 = vmatprep.subr.mxu0 0.0
        %4472 = vmatpush2.msra.mxu0 0.0
        %4473 = vmatprep.subr.mxu0 0.0
        %4474 = vmatpush2.msra.mxu0 0.0
        %4475 = vmatprep.subr.mxu0 0.0
        %4476 = vmatpush2.msra.mxu0 0.0
        %4477 = vmatprep.subr.mxu0 0.0
        %4478 = vmatpush2.msra.mxu0 0.0
        %4479 = vmatprep.subr.mxu0 0.0
        %4480 = vmatpush2.msra.mxu0 0.0
        %4481 = vmatprep.subr.mxu0 0.0
        %4482 = vmatpush2.msra.mxu0 0.0
        %4483 = vmatprep.subr.mxu0 0.0
        %4484 = vmatpush2.msra.mxu0 0.0
        %4485 = vmatprep.subr.mxu0 0.0
        %4486 = vmatpush2.msra.mxu0 0.0
        %4487 = vmatprep.subr.mxu0 0.0
        %4488 = vmatpush2.msra.mxu0 0.0
        %4489 = vmatprep.subr.mxu0 0.0
        %4490 = vmatpush2.msra.mxu0 0.0
        %4491 = vmatprep.subr.mxu0 0.0
        %4492 = vmatpush2.msra.mxu0 0.0
        %4493 = vmatprep.subr.mxu0 0.0
        %4494 = vmatpush2.msra.mxu0 0.0
        %4495 = vmatprep.subr.mxu0 0.0
        %4496 = vmatpush2.msra.mxu0 0.0
        %4497 = vmatprep.subr.mxu0 0.0
        %4498 = vmatpush2.msra.mxu0 0.0
        %4499 = vmatprep.mubr.f32.mxu0 0.0
        %v4500 = vand.u32 %v534, 4294901760
        %4501 = vmatmul.mubr.f32.gmra.mxu0 %v4500
        %v4502 = vpop.f32.mrf.mxu0
        %v4503 = vadd.f32 %v4271, %v4502
        %v4504 = vpop.f32.mrf.mxu0
        %v4505 = vadd.f32 %v4273, %v4504
        %4506 = vdwg.mxu0
        %v4507 = vand.u32 %v4154, 4294901760
        %v4508 = vsub.f32 %v4154, %v4507
        %4509 = vmatprep.subr.mxu0 %v4508
        %v4510 = vand.u32 %v4153, 4294901760
        %v4511 = vsub.f32 %v4153, %v4510
        %4512 = vmatpush1.msra.mxu0 %v4511
        %v4513 = vand.u32 %v4152, 4294901760
        %v4514 = vsub.f32 %v4152, %v4513
        %4515 = vmatprep.subr.mxu0 %v4514
        %v4516 = vand.u32 %v4151, 4294901760
        %v4517 = vsub.f32 %v4151, %v4516
        %4518 = vmatpush1.msra.mxu0 %v4517
        %v4519 = vand.u32 %v4150, 4294901760
        %v4520 = vsub.f32 %v4150, %v4519
        %4521 = vmatprep.subr.mxu0 %v4520
        %v4522 = vand.u32 %v4149, 4294901760
        %v4523 = vsub.f32 %v4149, %v4522
        %4524 = vmatpush1.msra.mxu0 %v4523
        %v4525 = vand.u32 %v4148, 4294901760
        %v4526 = vsub.f32 %v4148, %v4525
        %4527 = vmatprep.subr.mxu0 %v4526
        %v4528 = vand.u32 %v4147, 4294901760
        %v4529 = vsub.f32 %v4147, %v4528
        %4530 = vmatpush1.msra.mxu0 %v4529
        %v4531 = vand.u32 %v4146, 4294901760
        %v4532 = vsub.f32 %v4146, %v4531
        %4533 = vmatprep.subr.mxu0 %v4532
        %v4534 = vand.u32 %v4145, 4294901760
        %v4535 = vsub.f32 %v4145, %v4534
        %4536 = vmatpush1.msra.mxu0 %v4535
        %v4537 = vand.u32 %v4144, 4294901760
        %v4538 = vsub.f32 %v4144, %v4537
        %4539 = vmatprep.subr.mxu0 %v4538
        %v4540 = vand.u32 %v4143, 4294901760
        %v4541 = vsub.f32 %v4143, %v4540
        %4542 = vmatpush1.msra.mxu0 %v4541
        %v4543 = vand.u32 %v4142, 4294901760
        %v4544 = vsub.f32 %v4142, %v4543
        %4545 = vmatprep.subr.mxu0 %v4544
        %v4546 = vand.u32 %v4141, 4294901760
        %v4547 = vsub.f32 %v4141, %v4546
        %4548 = vmatpush1.msra.mxu0 %v4547
        %v4549 = vand.u32 %v4140, 4294901760
        %v4550 = vsub.f32 %v4140, %v4549
        %4551 = vmatprep.subr.mxu0 %v4550
        %v4552 = vand.u32 %v4139, 4294901760
        %v4553 = vsub.f32 %v4139, %v4552
        %4554 = vmatpush1.msra.mxu0 %v4553
        %v4555 = vand.u32 %v4138, 4294901760
        %v4556 = vsub.f32 %v4138, %v4555
        %4557 = vmatprep.subr.mxu0 %v4556
        %v4558 = vand.u32 %v4137, 4294901760
        %v4559 = vsub.f32 %v4137, %v4558
        %4560 = vmatpush1.msra.mxu0 %v4559
        %v4561 = vand.u32 %v4136, 4294901760
        %v4562 = vsub.f32 %v4136, %v4561
        %4563 = vmatprep.subr.mxu0 %v4562
        %v4564 = vand.u32 %v4135, 4294901760
        %v4565 = vsub.f32 %v4135, %v4564
        %4566 = vmatpush1.msra.mxu0 %v4565
        %v4567 = vand.u32 %v4134, 4294901760
        %v4568 = vsub.f32 %v4134, %v4567
        %4569 = vmatprep.subr.mxu0 %v4568
        %v4570 = vand.u32 %v4133, 4294901760
        %v4571 = vsub.f32 %v4133, %v4570
        %4572 = vmatpush1.msra.mxu0 %v4571
        %v4573 = vand.u32 %v4132, 4294901760
        %v4574 = vsub.f32 %v4132, %v4573
        %4575 = vmatprep.subr.mxu0 %v4574
        %v4576 = vand.u32 %v4131, 4294901760
        %v4577 = vsub.f32 %v4131, %v4576
        %4578 = vmatpush1.msra.mxu0 %v4577
        %v4579 = vand.u32 %v4130, 4294901760
        %v4580 = vsub.f32 %v4130, %v4579
        %4581 = vmatprep.subr.mxu0 %v4580
        %v4582 = vand.u32 %v4129, 4294901760
        %v4583 = vsub.f32 %v4129, %v4582
        %4584 = vmatpush1.msra.mxu0 %v4583
        %v4585 = vand.u32 %v4128, 4294901760
        %v4586 = vsub.f32 %v4128, %v4585
        %4587 = vmatprep.subr.mxu0 %v4586
        %v4588 = vand.u32 %v4127, 4294901760
        %v4589 = vsub.f32 %v4127, %v4588
        %4590 = vmatpush1.msra.mxu0 %v4589
        %v4591 = vand.u32 %v4126, 4294901760
        %v4592 = vsub.f32 %v4126, %v4591
        %4593 = vmatprep.subr.mxu0 %v4592
        %v4594 = vand.u32 %v4125, 4294901760
        %v4595 = vsub.f32 %v4125, %v4594
        %4596 = vmatpush1.msra.mxu0 %v4595
        %v4597 = vand.u32 %v4124, 4294901760
        %v4598 = vsub.f32 %v4124, %v4597
        %4599 = vmatprep.subr.mxu0 %v4598
        %v4600 = vand.u32 %v4123, 4294901760
        %v4601 = vsub.f32 %v4123, %v4600
        %4602 = vmatpush1.msra.mxu0 %v4601
        %4603 = vmatprep.subr.mxu0 0.0
        %4604 = vmatpush2.msra.mxu0 0.0
        %4605 = vmatprep.subr.mxu0 0.0
        %4606 = vmatpush2.msra.mxu0 0.0
        %4607 = vmatprep.subr.mxu0 0.0
        %4608 = vmatpush2.msra.mxu0 0.0
        %4609 = vmatprep.subr.mxu0 0.0
        %4610 = vmatpush2.msra.mxu0 0.0
        %4611 = vmatprep.subr.mxu0 0.0
        %4612 = vmatpush2.msra.mxu0 0.0
        %4613 = vmatprep.subr.mxu0 0.0
        %4614 = vmatpush2.msra.mxu0 0.0
        %4615 = vmatprep.subr.mxu0 0.0
        %4616 = vmatpush2.msra.mxu0 0.0
        %4617 = vmatprep.subr.mxu0 0.0
        %4618 = vmatpush2.msra.mxu0 0.0
        %4619 = vmatprep.subr.mxu0 0.0
        %4620 = vmatpush2.msra.mxu0 0.0
        %4621 = vmatprep.subr.mxu0 0.0
        %4622 = vmatpush2.msra.mxu0 0.0
        %4623 = vmatprep.subr.mxu0 0.0
        %4624 = vmatpush2.msra.mxu0 0.0
        %4625 = vmatprep.subr.mxu0 0.0
        %4626 = vmatpush2.msra.mxu0 0.0
        %4627 = vmatprep.subr.mxu0 0.0
        %4628 = vmatpush2.msra.mxu0 0.0
        %4629 = vmatprep.subr.mxu0 0.0
        %4630 = vmatpush2.msra.mxu0 0.0
        %4631 = vmatprep.subr.mxu0 0.0
        %4632 = vmatpush2.msra.mxu0 0.0
        %4633 = vmatprep.subr.mxu0 0.0
        %4634 = vmatpush2.msra.mxu0 0.0
        %4635 = vmatprep.mubr.f32.mxu0 0.0
        %v4636 = vand.u32 %v534, 4294901760
        %v4637 = vsub.f32 %v534, %v4636
        %4638 = vmatmul.mubr.f32.gmra.mxu0 %v4637
        %v4639 = vpop.f32.mrf.mxu0
        %v4640 = vadd.f32 %v4503, %v4639
        %v4641 = vpop.f32.mrf.mxu0
        %v4642 = vadd.f32 %v4505, %v4641
        %4643 = vdwg.mxu0
        %v4644 = vand.u32 %v4154, 4294901760
        %4645 = vmatprep.subr.mxu0 %v4644
        %v4646 = vand.u32 %v4153, 4294901760
        %4647 = vmatpush1.msra.mxu0 %v4646
        %v4648 = vand.u32 %v4152, 4294901760
        %4649 = vmatprep.subr.mxu0 %v4648
        %v4650 = vand.u32 %v4151, 4294901760
        %4651 = vmatpush1.msra.mxu0 %v4650
        %v4652 = vand.u32 %v4150, 4294901760
        %4653 = vmatprep.subr.mxu0 %v4652
        %v4654 = vand.u32 %v4149, 4294901760
        %4655 = vmatpush1.msra.mxu0 %v4654
        %v4656 = vand.u32 %v4148, 4294901760
        %4657 = vmatprep.subr.mxu0 %v4656
        %v4658 = vand.u32 %v4147, 4294901760
        %4659 = vmatpush1.msra.mxu0 %v4658
        %v4660 = vand.u32 %v4146, 4294901760
        %4661 = vmatprep.subr.mxu0 %v4660
        %v4662 = vand.u32 %v4145, 4294901760
        %4663 = vmatpush1.msra.mxu0 %v4662
        %v4664 = vand.u32 %v4144, 4294901760
        %4665 = vmatprep.subr.mxu0 %v4664
        %v4666 = vand.u32 %v4143, 4294901760
        %4667 = vmatpush1.msra.mxu0 %v4666
        %v4668 = vand.u32 %v4142, 4294901760
        %4669 = vmatprep.subr.mxu0 %v4668
        %v4670 = vand.u32 %v4141, 4294901760
        %4671 = vmatpush1.msra.mxu0 %v4670
        %v4672 = vand.u32 %v4140, 4294901760
        %4673 = vmatprep.subr.mxu0 %v4672
        %v4674 = vand.u32 %v4139, 4294901760
        %4675 = vmatpush1.msra.mxu0 %v4674
        %v4676 = vand.u32 %v4138, 4294901760
        %4677 = vmatprep.subr.mxu0 %v4676
        %v4678 = vand.u32 %v4137, 4294901760
        %4679 = vmatpush1.msra.mxu0 %v4678
        %v4680 = vand.u32 %v4136, 4294901760
        %4681 = vmatprep.subr.mxu0 %v4680
        %v4682 = vand.u32 %v4135, 4294901760
        %4683 = vmatpush1.msra.mxu0 %v4682
        %v4684 = vand.u32 %v4134, 4294901760
        %4685 = vmatprep.subr.mxu0 %v4684
        %v4686 = vand.u32 %v4133, 4294901760
        %4687 = vmatpush1.msra.mxu0 %v4686
        %v4688 = vand.u32 %v4132, 4294901760
        %4689 = vmatprep.subr.mxu0 %v4688
        %v4690 = vand.u32 %v4131, 4294901760
        %4691 = vmatpush1.msra.mxu0 %v4690
        %v4692 = vand.u32 %v4130, 4294901760
        %4693 = vmatprep.subr.mxu0 %v4692
        %v4694 = vand.u32 %v4129, 4294901760
        %4695 = vmatpush1.msra.mxu0 %v4694
        %v4696 = vand.u32 %v4128, 4294901760
        %4697 = vmatprep.subr.mxu0 %v4696
        %v4698 = vand.u32 %v4127, 4294901760
        %4699 = vmatpush1.msra.mxu0 %v4698
        %v4700 = vand.u32 %v4126, 4294901760
        %4701 = vmatprep.subr.mxu0 %v4700
        %v4702 = vand.u32 %v4125, 4294901760
        %4703 = vmatpush1.msra.mxu0 %v4702
        %v4704 = vand.u32 %v4124, 4294901760
        %4705 = vmatprep.subr.mxu0 %v4704
        %v4706 = vand.u32 %v4123, 4294901760
        %4707 = vmatpush1.msra.mxu0 %v4706
        %4708 = vmatprep.subr.mxu0 0.0
        %4709 = vmatpush2.msra.mxu0 0.0
        %4710 = vmatprep.subr.mxu0 0.0
        %4711 = vmatpush2.msra.mxu0 0.0
        %4712 = vmatprep.subr.mxu0 0.0
        %4713 = vmatpush2.msra.mxu0 0.0
        %4714 = vmatprep.subr.mxu0 0.0
        %4715 = vmatpush2.msra.mxu0 0.0
        %4716 = vmatprep.subr.mxu0 0.0
        %4717 = vmatpush2.msra.mxu0 0.0
        %4718 = vmatprep.subr.mxu0 0.0
        %4719 = vmatpush2.msra.mxu0 0.0
        %4720 = vmatprep.subr.mxu0 0.0
        %4721 = vmatpush2.msra.mxu0 0.0
        %4722 = vmatprep.subr.mxu0 0.0
        %4723 = vmatpush2.msra.mxu0 0.0
        %4724 = vmatprep.subr.mxu0 0.0
        %4725 = vmatpush2.msra.mxu0 0.0
        %4726 = vmatprep.subr.mxu0 0.0
        %4727 = vmatpush2.msra.mxu0 0.0
        %4728 = vmatprep.subr.mxu0 0.0
        %4729 = vmatpush2.msra.mxu0 0.0
        %4730 = vmatprep.subr.mxu0 0.0
        %4731 = vmatpush2.msra.mxu0 0.0
        %4732 = vmatprep.subr.mxu0 0.0
        %4733 = vmatpush2.msra.mxu0 0.0
        %4734 = vmatprep.subr.mxu0 0.0
        %4735 = vmatpush2.msra.mxu0 0.0
        %4736 = vmatprep.subr.mxu0 0.0
        %4737 = vmatpush2.msra.mxu0 0.0
        %4738 = vmatprep.subr.mxu0 0.0
        %4739 = vmatpush2.msra.mxu0 0.0
        %4740 = vmatprep.mubr.f32.mxu0 0.0
        %v4741 = vand.u32 %v534, 4294901760
        %v4742 = vsub.f32 %v534, %v4741
        %v4743 = vand.u32 %v4742, 4294901760
        %4744 = vmatmul.mubr.f32.gmra.mxu0 %v4743
        %v4745 = vpop.f32.mrf.mxu0
        %v4746 = vadd.f32 %v4640, %v4745
        %v4747 = vpop.f32.mrf.mxu0
        %v4748 = vadd.f32 %v4642, %v4747
        %4749 = vdwg.mxu0
        %v4750 = vand.u32 %v4154, 4294901760
        %v4751 = vsub.f32 %v4154, %v4750
        %v4752 = vand.u32 %v4751, 4294901760
        %4753 = vmatprep.subr.mxu0 %v4752
        %v4754 = vand.u32 %v4153, 4294901760
        %v4755 = vsub.f32 %v4153, %v4754
        %v4756 = vand.u32 %v4755, 4294901760
        %4757 = vmatpush1.msra.mxu0 %v4756
        %v4758 = vand.u32 %v4152, 4294901760
        %v4759 = vsub.f32 %v4152, %v4758
        %v4760 = vand.u32 %v4759, 4294901760
        %4761 = vmatprep.subr.mxu0 %v4760
        %v4762 = vand.u32 %v4151, 4294901760
        %v4763 = vsub.f32 %v4151, %v4762
        %v4764 = vand.u32 %v4763, 4294901760
        %4765 = vmatpush1.msra.mxu0 %v4764
        %v4766 = vand.u32 %v4150, 4294901760
        %v4767 = vsub.f32 %v4150, %v4766
        %v4768 = vand.u32 %v4767, 4294901760
        %4769 = vmatprep.subr.mxu0 %v4768
        %v4770 = vand.u32 %v4149, 4294901760
        %v4771 = vsub.f32 %v4149, %v4770
        %v4772 = vand.u32 %v4771, 4294901760
        %4773 = vmatpush1.msra.mxu0 %v4772
        %v4774 = vand.u32 %v4148, 4294901760
        %v4775 = vsub.f32 %v4148, %v4774
        %v4776 = vand.u32 %v4775, 4294901760
        %4777 = vmatprep.subr.mxu0 %v4776
        %v4778 = vand.u32 %v4147, 4294901760
        %v4779 = vsub.f32 %v4147, %v4778
        %v4780 = vand.u32 %v4779, 4294901760
        %4781 = vmatpush1.msra.mxu0 %v4780
        %v4782 = vand.u32 %v4146, 4294901760
        %v4783 = vsub.f32 %v4146, %v4782
        %v4784 = vand.u32 %v4783, 4294901760
        %4785 = vmatprep.subr.mxu0 %v4784
        %v4786 = vand.u32 %v4145, 4294901760
        %v4787 = vsub.f32 %v4145, %v4786
        %v4788 = vand.u32 %v4787, 4294901760
        %4789 = vmatpush1.msra.mxu0 %v4788
        %v4790 = vand.u32 %v4144, 4294901760
        %v4791 = vsub.f32 %v4144, %v4790
        %v4792 = vand.u32 %v4791, 4294901760
        %4793 = vmatprep.subr.mxu0 %v4792
        %v4794 = vand.u32 %v4143, 4294901760
        %v4795 = vsub.f32 %v4143, %v4794
        %v4796 = vand.u32 %v4795, 4294901760
        %4797 = vmatpush1.msra.mxu0 %v4796
        %v4798 = vand.u32 %v4142, 4294901760
        %v4799 = vsub.f32 %v4142, %v4798
        %v4800 = vand.u32 %v4799, 4294901760
        %4801 = vmatprep.subr.mxu0 %v4800
        %v4802 = vand.u32 %v4141, 4294901760
        %v4803 = vsub.f32 %v4141, %v4802
        %v4804 = vand.u32 %v4803, 4294901760
        %4805 = vmatpush1.msra.mxu0 %v4804
        %v4806 = vand.u32 %v4140, 4294901760
        %v4807 = vsub.f32 %v4140, %v4806
        %v4808 = vand.u32 %v4807, 4294901760
        %4809 = vmatprep.subr.mxu0 %v4808
        %v4810 = vand.u32 %v4139, 4294901760
        %v4811 = vsub.f32 %v4139, %v4810
        %v4812 = vand.u32 %v4811, 4294901760
        %4813 = vmatpush1.msra.mxu0 %v4812
        %v4814 = vand.u32 %v4138, 4294901760
        %v4815 = vsub.f32 %v4138, %v4814
        %v4816 = vand.u32 %v4815, 4294901760
        %4817 = vmatprep.subr.mxu0 %v4816
        %v4818 = vand.u32 %v4137, 4294901760
        %v4819 = vsub.f32 %v4137, %v4818
        %v4820 = vand.u32 %v4819, 4294901760
        %4821 = vmatpush1.msra.mxu0 %v4820
        %v4822 = vand.u32 %v4136, 4294901760
        %v4823 = vsub.f32 %v4136, %v4822
        %v4824 = vand.u32 %v4823, 4294901760
        %4825 = vmatprep.subr.mxu0 %v4824
        %v4826 = vand.u32 %v4135, 4294901760
        %v4827 = vsub.f32 %v4135, %v4826
        %v4828 = vand.u32 %v4827, 4294901760
        %4829 = vmatpush1.msra.mxu0 %v4828
        %v4830 = vand.u32 %v4134, 4294901760
        %v4831 = vsub.f32 %v4134, %v4830
        %v4832 = vand.u32 %v4831, 4294901760
        %4833 = vmatprep.subr.mxu0 %v4832
        %v4834 = vand.u32 %v4133, 4294901760
        %v4835 = vsub.f32 %v4133, %v4834
        %v4836 = vand.u32 %v4835, 4294901760
        %4837 = vmatpush1.msra.mxu0 %v4836
        %v4838 = vand.u32 %v4132, 4294901760
        %v4839 = vsub.f32 %v4132, %v4838
        %v4840 = vand.u32 %v4839, 4294901760
        %4841 = vmatprep.subr.mxu0 %v4840
        %v4842 = vand.u32 %v4131, 4294901760
        %v4843 = vsub.f32 %v4131, %v4842
        %v4844 = vand.u32 %v4843, 4294901760
        %4845 = vmatpush1.msra.mxu0 %v4844
        %v4846 = vand.u32 %v4130, 4294901760
        %v4847 = vsub.f32 %v4130, %v4846
        %v4848 = vand.u32 %v4847, 4294901760
        %4849 = vmatprep.subr.mxu0 %v4848
        %v4850 = vand.u32 %v4129, 4294901760
        %v4851 = vsub.f32 %v4129, %v4850
        %v4852 = vand.u32 %v4851, 4294901760
        %4853 = vmatpush1.msra.mxu0 %v4852
        %v4854 = vand.u32 %v4128, 4294901760
        %v4855 = vsub.f32 %v4128, %v4854
        %v4856 = vand.u32 %v4855, 4294901760
        %4857 = vmatprep.subr.mxu0 %v4856
        %v4858 = vand.u32 %v4127, 4294901760
        %v4859 = vsub.f32 %v4127, %v4858
        %v4860 = vand.u32 %v4859, 4294901760
        %4861 = vmatpush1.msra.mxu0 %v4860
        %v4862 = vand.u32 %v4126, 4294901760
        %v4863 = vsub.f32 %v4126, %v4862
        %v4864 = vand.u32 %v4863, 4294901760
        %4865 = vmatprep.subr.mxu0 %v4864
        %v4866 = vand.u32 %v4125, 4294901760
        %v4867 = vsub.f32 %v4125, %v4866
        %v4868 = vand.u32 %v4867, 4294901760
        %4869 = vmatpush1.msra.mxu0 %v4868
        %v4870 = vand.u32 %v4124, 4294901760
        %v4871 = vsub.f32 %v4124, %v4870
        %v4872 = vand.u32 %v4871, 4294901760
        %4873 = vmatprep.subr.mxu0 %v4872
        %v4874 = vand.u32 %v4123, 4294901760
        %v4875 = vsub.f32 %v4123, %v4874
        %v4876 = vand.u32 %v4875, 4294901760
        %4877 = vmatpush1.msra.mxu0 %v4876
        %4878 = vmatprep.subr.mxu0 0.0
        %4879 = vmatpush2.msra.mxu0 0.0
        %4880 = vmatprep.subr.mxu0 0.0
        %4881 = vmatpush2.msra.mxu0 0.0
        %4882 = vmatprep.subr.mxu0 0.0
        %4883 = vmatpush2.msra.mxu0 0.0
        %4884 = vmatprep.subr.mxu0 0.0
        %4885 = vmatpush2.msra.mxu0 0.0
        %4886 = vmatprep.subr.mxu0 0.0
        %4887 = vmatpush2.msra.mxu0 0.0
        %4888 = vmatprep.subr.mxu0 0.0
        %4889 = vmatpush2.msra.mxu0 0.0
        %4890 = vmatprep.subr.mxu0 0.0
        %4891 = vmatpush2.msra.mxu0 0.0
        %4892 = vmatprep.subr.mxu0 0.0
        %4893 = vmatpush2.msra.mxu0 0.0
        %4894 = vmatprep.subr.mxu0 0.0
        %4895 = vmatpush2.msra.mxu0 0.0
        %4896 = vmatprep.subr.mxu0 0.0
        %4897 = vmatpush2.msra.mxu0 0.0
        %4898 = vmatprep.subr.mxu0 0.0
        %4899 = vmatpush2.msra.mxu0 0.0
        %4900 = vmatprep.subr.mxu0 0.0
        %4901 = vmatpush2.msra.mxu0 0.0
        %4902 = vmatprep.subr.mxu0 0.0
        %4903 = vmatpush2.msra.mxu0 0.0
        %4904 = vmatprep.subr.mxu0 0.0
        %4905 = vmatpush2.msra.mxu0 0.0
        %4906 = vmatprep.subr.mxu0 0.0
        %4907 = vmatpush2.msra.mxu0 0.0
        %4908 = vmatprep.subr.mxu0 0.0
        %4909 = vmatpush2.msra.mxu0 0.0
        %4910 = vmatprep.mubr.f32.mxu0 0.0
        %v4911 = vand.u32 %v534, 4294901760
        %4912 = vmatmul.mubr.f32.gmra.mxu0 %v4911
        %v4913 = vpop.f32.mrf.mxu0
        %v4914 = vadd.f32 %v4746, %v4913
        %v4915 = vpop.f32.mrf.mxu0
        %v4916 = vadd.f32 %v4748, %v4915
        %4917 = vdwg.mxu0
        %v4918 = vand.u32 %v4154, 4294901760
        %4919 = vmatprep.subr.mxu0 %v4918
        %v4920 = vand.u32 %v4153, 4294901760
        %4921 = vmatpush1.msra.mxu0 %v4920
        %v4922 = vand.u32 %v4152, 4294901760
        %4923 = vmatprep.subr.mxu0 %v4922
        %v4924 = vand.u32 %v4151, 4294901760
        %4925 = vmatpush1.msra.mxu0 %v4924
        %v4926 = vand.u32 %v4150, 4294901760
        %4927 = vmatprep.subr.mxu0 %v4926
        %v4928 = vand.u32 %v4149, 4294901760
        %4929 = vmatpush1.msra.mxu0 %v4928
        %v4930 = vand.u32 %v4148, 4294901760
        %4931 = vmatprep.subr.mxu0 %v4930
        %v4932 = vand.u32 %v4147, 4294901760
        %4933 = vmatpush1.msra.mxu0 %v4932
        %v4934 = vand.u32 %v4146, 4294901760
        %4935 = vmatprep.subr.mxu0 %v4934
        %v4936 = vand.u32 %v4145, 4294901760
        %4937 = vmatpush1.msra.mxu0 %v4936
        %v4938 = vand.u32 %v4144, 4294901760
        %4939 = vmatprep.subr.mxu0 %v4938
        %v4940 = vand.u32 %v4143, 4294901760
        %4941 = vmatpush1.msra.mxu0 %v4940
        %v4942 = vand.u32 %v4142, 4294901760
        %4943 = vmatprep.subr.mxu0 %v4942
        %v4944 = vand.u32 %v4141, 4294901760
        %4945 = vmatpush1.msra.mxu0 %v4944
        %v4946 = vand.u32 %v4140, 4294901760
        %4947 = vmatprep.subr.mxu0 %v4946
        %v4948 = vand.u32 %v4139, 4294901760
        %4949 = vmatpush1.msra.mxu0 %v4948
        %v4950 = vand.u32 %v4138, 4294901760
        %4951 = vmatprep.subr.mxu0 %v4950
        %v4952 = vand.u32 %v4137, 4294901760
        %4953 = vmatpush1.msra.mxu0 %v4952
        %v4954 = vand.u32 %v4136, 4294901760
        %4955 = vmatprep.subr.mxu0 %v4954
        %v4956 = vand.u32 %v4135, 4294901760
        %4957 = vmatpush1.msra.mxu0 %v4956
        %v4958 = vand.u32 %v4134, 4294901760
        %4959 = vmatprep.subr.mxu0 %v4958
        %v4960 = vand.u32 %v4133, 4294901760
        %4961 = vmatpush1.msra.mxu0 %v4960
        %v4962 = vand.u32 %v4132, 4294901760
        %4963 = vmatprep.subr.mxu0 %v4962
        %v4964 = vand.u32 %v4131, 4294901760
        %4965 = vmatpush1.msra.mxu0 %v4964
        %v4966 = vand.u32 %v4130, 4294901760
        %4967 = vmatprep.subr.mxu0 %v4966
        %v4968 = vand.u32 %v4129, 4294901760
        %4969 = vmatpush1.msra.mxu0 %v4968
        %v4970 = vand.u32 %v4128, 4294901760
        %4971 = vmatprep.subr.mxu0 %v4970
        %v4972 = vand.u32 %v4127, 4294901760
        %4973 = vmatpush1.msra.mxu0 %v4972
        %v4974 = vand.u32 %v4126, 4294901760
        %4975 = vmatprep.subr.mxu0 %v4974
        %v4976 = vand.u32 %v4125, 4294901760
        %4977 = vmatpush1.msra.mxu0 %v4976
        %v4978 = vand.u32 %v4124, 4294901760
        %4979 = vmatprep.subr.mxu0 %v4978
        %v4980 = vand.u32 %v4123, 4294901760
        %4981 = vmatpush1.msra.mxu0 %v4980
        %4982 = vmatprep.subr.mxu0 0.0
        %4983 = vmatpush2.msra.mxu0 0.0
        %4984 = vmatprep.subr.mxu0 0.0
        %4985 = vmatpush2.msra.mxu0 0.0
        %4986 = vmatprep.subr.mxu0 0.0
        %4987 = vmatpush2.msra.mxu0 0.0
        %4988 = vmatprep.subr.mxu0 0.0
        %4989 = vmatpush2.msra.mxu0 0.0
        %4990 = vmatprep.subr.mxu0 0.0
        %4991 = vmatpush2.msra.mxu0 0.0
        %4992 = vmatprep.subr.mxu0 0.0
        %4993 = vmatpush2.msra.mxu0 0.0
        %4994 = vmatprep.subr.mxu0 0.0
        %4995 = vmatpush2.msra.mxu0 0.0
        %4996 = vmatprep.subr.mxu0 0.0
        %4997 = vmatpush2.msra.mxu0 0.0
        %4998 = vmatprep.subr.mxu0 0.0
        %4999 = vmatpush2.msra.mxu0 0.0
        %5000 = vmatprep.subr.mxu0 0.0
        %5001 = vmatpush2.msra.mxu0 0.0
        %5002 = vmatprep.subr.mxu0 0.0
        %5003 = vmatpush2.msra.mxu0 0.0
        %5004 = vmatprep.subr.mxu0 0.0
        %5005 = vmatpush2.msra.mxu0 0.0
        %5006 = vmatprep.subr.mxu0 0.0
        %5007 = vmatpush2.msra.mxu0 0.0
        %5008 = vmatprep.subr.mxu0 0.0
        %5009 = vmatpush2.msra.mxu0 0.0
        %5010 = vmatprep.subr.mxu0 0.0
        %5011 = vmatpush2.msra.mxu0 0.0
        %5012 = vmatprep.subr.mxu0 0.0
        %5013 = vmatpush2.msra.mxu0 0.0
        %5014 = vmatprep.mubr.f32.mxu0 0.0
        %v5015 = vand.u32 %v534, 4294901760
        %5016 = vmatmul.mubr.f32.gmra.mxu0 %v5015
        %v5017 = vpop.f32.mrf.mxu0
        %v5018 = vadd.f32 %v4914, %v5017
        %v5019 = vpop.f32.mrf.mxu0
        %v5020 = vadd.f32 %v4916, %v5019
        %5021 = vdwg.mxu0
        %v5022 = vadd.f32 %v4121, %v5018
        %v5023 = vadd.f32 %v4122, %v5020
        %v5024 = vmul.f32 %v5022, 0.5
        %v5025 = vmul.f32 %v5023, 0.5
        %v5026 = vmul.f32 %v5022, 0.70710677
        %v5027 = vmul.f32 %v5023, 0.70710677
        %v5028 = verf.f32.pop %v5026
        %v5029 = verf.f32.pop %v5027
        %v5030 = vadd.f32 %v5028, 1.0
        %v5031 = vadd.f32 %v5029, 1.0
        %v5032 = vmul.f32 %v5024, %v5030
        %v5033 = vmul.f32 %v5025, %v5031
        %5034 = vst [vmem:[%s529] sm:$0xff] %v5032
        %5035 = vst [vmem:[%s529 + $0x8] sm:$0xff] %v5033
        %s5036 = sand.u32 %s359, 1
        %s5037 = scalar_lea.sflag [#allocation4], %s5036
        %s5038 = sand.u32 %s359, 1
        %s5039 = smul.addr %s5038, 16
        %s5040 = scalar_lea.vmem [#allocation8], %s5039
        // Predicated region
        $region93: #{tpu_custom_call.1} parent=79 // pred_check
          %p5041 = pneg %p369
        $region94: #{tpu_custom_call.1} parent=79 // pred_check_branch
          %5043 = sbr.rel (%p5041) target = $region96
        $region95: #{tpu_custom_call.1} parent=79 // pred_region
          %s5045 = ssub.s32 256, 256
          %5046 = vsyncadd %s5037, %s5045
          %s5047 = smul.addr %s31, 2
          %s5048 = smul.addr %s5047, 128
          %s5049 = scalar_lea.hbm %s15, %s5048
          %s5051 = sshll.u32 %s5040, 4
          %s5052 = int_to_ptr.vmem [resolvable:$true] %s5051
          %5054 = dma.vmem_to_hbm [thread:$0]  %s5052, 256, %s5049, %s5037
        $region96: #{tpu_custom_call.1} parent=79 // pred_fallthru
          _
      $region80: #{tpu_custom_call.1} parent=5 // pred_fallthru
        _
      %p5055 = scmp.le.s32.totalorder 2, %s26
      // Predicated region
      $region97: #{tpu_custom_call.1} parent=5 // pred_check
        %p5056 = pneg %p5055
      $region98: #{tpu_custom_call.1} parent=5 // pred_check_branch
        %5058 = sbr.rel (%p5056) target = $region100
      $region99: #{tpu_custom_call.1} parent=5 // pred_region
        %s5059 = ssub.s32 %s26, 2
        // Predicated region
        $region101: #{tpu_custom_call.1} parent=99 // pred_check
          %p5060 = pneg %p375
        $region102: #{tpu_custom_call.1} parent=99 // pred_check_branch
          %5062 = sbr.rel (%p5060) target = $region104
        $region103: #{tpu_custom_call.1} parent=99 // pred_region
          %s5063 = sand.u32 %s360, 1
          %s5064 = scalar_lea.sflag [#allocation4], %s5063
          %s5065 = sand.u32 %s360, 1
          %s5066 = smul.addr %s5065, 16
          %s5067 = scalar_lea.vmem [#allocation8], %s5066
          %5068 = dma.done %s5064, 256
        $region104: #{tpu_custom_call.1} parent=99 // pred_fallthru
          _
      $region100: #{tpu_custom_call.1} parent=5 // pred_fallthru
        _
    $region6: #{tpu_custom_call.1} parent=1 // loop_footer
      %s30 = sadd.s32 1, %s26
    $region7: #{tpu_custom_call.1} parent=1 // loop_footer_branch
      %25 = sbr.rel target = $region3
    $region8: #{tpu_custom_call.1} parent=1 // loop_exit
      _
    %5069 = vsyncpa [#allocation3], 1
    %s5070 = scalar_lea.sflag [#allocation3], 1
    %5071 = vsyncpa %s5070, 1
    %5072 = vsyncpa [#allocation6], 1
    %5073 = vsyncpa [#allocation4], 1
    %s5074 = scalar_lea.sflag [#allocation4], 1
    %5075 = vsyncpa %s5074, 1

</llo_original>
